<compile_context>
chip_gen: v7x
topology: tpu7x:2x2x1
jax: 0.10.0
libtpu: 0.0.40
codegen_flags: <defaults>
</compile_context>

<pallas_src>
import functools

import jax
import jax.numpy as jnp
import numpy as np
from jax.experimental import pallas as pl
from jax.experimental.pallas import tpu as pltpu

D_MODEL = 32
NHEAD = 4
DIM_FF = 64
NUM_LAYERS = 2
EPS = 1e-5
NEG_INF = -1e30


# ---------------------------------------------------------------------------
# In-kernel helpers
# ---------------------------------------------------------------------------
def _batch_bias(n_rows, n_cols, batch):
    """Additive mask forbidding attention across batch elements.

    Rows/cols are L-major with batch fastest (index % batch == batch id). The
    same formula holds for sublane-stacked per-head rows because the per-head
    row count (Nq) is a multiple of `batch`.
    """
    qi = jax.lax.broadcasted_iota(jnp.int32, (n_rows, n_cols), 0)
    ki = jax.lax.broadcasted_iota(jnp.int32, (n_rows, n_cols), 1)
    same = (qi % batch) == (ki % batch)
    return jnp.where(same, 0.0, NEG_INF).astype(jnp.float32)


def _ln_fused(x, w, b):
    """LayerNorm with ONE lane-axis reduce: sum over [x ; x*x] sublane-stacked."""
    n, d = x.shape
    s = jnp.sum(jnp.concatenate([x, x * x], axis=0), axis=-1, keepdims=True)
    inv_d = 1.0 / d
    mu = s[:n] * inv_d
    var = s[n:] * inv_d - mu * mu
    return (x - mu) * jax.lax.rsqrt(var + EPS) * w + b


def _attn_core(a, kin, v_all, bias, bo, nhead, nq, d):
    """Multi-head attention with host-folded weights.

    a     : (nq, nhead*d)  = q_in @ [scale*Wq_h Wk_h^T]_h + folded q-bias
    kin   : (nk, d)        raw key-side input (no K projection needed)
    v_all : (nk, nhead*d)  = v_in @ [Wv_h Wo_h]_h + folded v-bias
    bias  : (nhead*nq, nk) additive batch-separation mask
    bo    : (1, d)         output-projection bias
    """
    # Per-head scores, stacked along the sublane axis -> single softmax pass.
    s = jnp.concatenate(
        [jax.lax.dot_general(a[:, h * d:(h + 1) * d], kin,
                             (((1,), (1,)), ((), ())),
                             preferred_element_type=jnp.float32)
         for h in range(nhead)], axis=0)                      # (nhead*nq, nk)
    s = s + bias
    s = s - jnp.max(s, axis=-1, keepdims=True)
    p = jnp.exp(s)
    p = p * pl.reciprocal(jnp.sum(p, axis=-1, keepdims=True), approx=True)
    # Per-head value matmuls with explicit f32 accumulation
    # (no lane-dim head concat, no separate W_o matmul).
    o = jnp.dot(p[0:nq, :], v_all[:, 0:d], preferred_element_type=jnp.float32)
    for h in range(1, nhead):
        o = o + jnp.dot(p[h * nq:(h + 1) * nq, :],
                        v_all[:, h * d:(h + 1) * d],
                        preferred_element_type=jnp.float32)
    return o + bo


# ---------------------------------------------------------------------------
# Fused decoder kernel (all layers + final LayerNorm, one gridless pallas_call)
# ---------------------------------------------------------------------------
def decoder_kernel(tgt_ref, mem_ref, qpos_ref, pos_ref,
                   sa_mu_ref, ca_m_ref, ca_u_ref, ca_w_ref,
                   w1_ref, w2_ref, vec4d_ref, vecd_ref, bff_ref, norm_ref,
                   out_ref, *, nhead, num_layers, batch):
    nq, d = tgt_ref.shape
    nk = mem_ref.shape[0]
    hd = nhead * d

    x = tgt_ref[...]
    mem = mem_ref[...]
    qp = qpos_ref[...]
    memk = mem + pos_ref[...]          # cross-attention key input (all layers)

    self_bias = _batch_bias(nhead * nq, nq, batch)
    cross_bias = _batch_bias(nhead * nq, nk, batch)

    # Hoisted, layer-batched cross-attention value transform (loop-invariant):
    #   v_cross = memory @ [Wv_h Wo_h]_{h,layers} + folded biases
    v_cross = jnp.dot(mem, ca_u_ref[...],
                      preferred_element_type=jnp.float32) + ca_w_ref[...]

    for l in range(num_layers):        # static unroll: fully fused stack
        vd = vecd_ref[l]               # (9, d)       D-wide biases / LN params
        v4 = vec4d_ref[l]              # (3, nhead*d) folded attn bias rows
        b1 = bff_ref[l]                # (1, dim_ff)

        # --- self attention: q = k = x + query_pos, v = x
        qk_in = x + qp
        a_sa = jnp.dot(qk_in, sa_mu_ref[l, 0],
                       preferred_element_type=jnp.float32) + v4[0:1]
        v_sa = jnp.dot(x, sa_mu_ref[l, 1],
                       preferred_element_type=jnp.float32) + v4[1:2]
        sa = _attn_core(a_sa, qk_in, v_sa, self_bias, vd[0:1], nhead, nq, d)
        x = _ln_fused(x + sa, vd[3:4], vd[4:5])

        # --- cross attention: q = x + query_pos, k = memory + pos, v = memory
        a_ca = jnp.dot(x + qp, ca_m_ref[l],
                       preferred_element_type=jnp.float32) + v4[2:3]
        ca = _attn_core(a_ca, memk, v_cross[:, l * hd:(l + 1) * hd],
                        cross_bias, vd[1:2], nhead, nq, d)
        x = _ln_fused(x + ca, vd[5:6], vd[6:7])

        # --- feed-forward (ReLU)
        h1 = jnp.maximum(
            jnp.dot(x, w1_ref[l], preferred_element_type=jnp.float32) + b1, 0.0)
        ff = jnp.dot(h1, w2_ref[l], preferred_element_type=jnp.float32) + vd[2:3]
        x = _ln_fused(x + ff, vd[7:8], vd[8:9])

    # final decoder LayerNorm
    out_ref[...] = _ln_fused(x, norm_ref[0:1], norm_ref[1:2])


# ---------------------------------------------------------------------------
# Host-side parameter folding / packing
# ---------------------------------------------------------------------------
def _fold_attention(p, prefix, nhead):
    """Fold one MHA block into lane-dense score/value slabs.

    Returns M (d, nhead*d), C (1, nhead*d), U (d, nhead*d), W (1, nhead*d), bo.
    Softmax-invariant (row-constant) key-bias terms are dropped.
    """
    wq, bq = p[prefix + "_wq"], p[prefix + "_bq"]
    wk = p[prefix + "_wk"]
    wv, bv = p[prefix + "_wv"], p[prefix + "_bv"]
    wo, bo = p[prefix + "_wo"], p[prefix + "_bo"]
    d = wq.shape[0]
    dh = d // nhead
    scale = 1.0 / float(np.sqrt(dh))
    m_l, c_l, u_l, w_l = [], [], [], []
    for h in range(nhead):
        sl = slice(h * dh, (h + 1) * dh)
        m_l.append(scale * (wq[:, sl] @ wk[:, sl].T))   # (d, d)
        c_l.append(scale * (bq[:, sl] @ wk[:, sl].T))   # (1, d)
        u_l.append(wv[:, sl] @ wo[sl, :])               # (d, d)
        w_l.append(bv[:, sl] @ wo[sl, :])               # (1, d)
    return (jnp.concatenate(m_l, axis=1), jnp.concatenate(c_l, axis=1),
            jnp.concatenate(u_l, axis=1), jnp.concatenate(w_l, axis=1), bo)


def pack_params(layer_params, norm_w, norm_b, nhead):
    sa_mu, ca_m, ca_u, ca_w, vec4d, vecd, bff = [], [], [], [], [], [], []
    for p in layer_params:
        sM, sC, sU, sW, s_bo = _fold_attention(p, "sa", nhead)
        cM, cC, cU, cW, c_bo = _fold_attention(p, "ca", nhead)
        sa_mu.append(jnp.stack([sM, sU]))                      # (2, d, nhead*d)
        ca_m.append(cM)
        ca_u.append(cU)
        ca_w.append(cW)
        vec4d.append(jnp.stack([sC[0], sW[0], cC[0]]))         # (3, nhead*d)
        vecd.append(jnp.concatenate(
            [s_bo, c_bo, p["b2"],
             p["n1w"], p["n1b"], p["n2w"], p["n2b"], p["n3w"], p["n3b"]],
            axis=0))                                           # (9, d)
        bff.append(p["b1"])                                    # (1, dim_ff)
    return dict(
        sa_mu=jnp.stack(sa_mu),                 # (L, 2, d, nhead*d)
        ca_m=jnp.stack(ca_m),                   # (L, d, nhead*d)
        ca_u=jnp.concatenate(ca_u, axis=1),     # (d, L*nhead*d)
        ca_w=jnp.concatenate(ca_w, axis=1),     # (1, L*nhead*d)
        w1=jnp.stack([p["w1"] for p in layer_params]),   # (L, d, dim_ff)
        w2=jnp.stack([p["w2"] for p in layer_params]),   # (L, dim_ff, d)
        vec4d=jnp.stack(vec4d),                 # (L, 3, nhead*d)
        vecd=jnp.stack(vecd),                   # (L, 9, d)
        bff=jnp.stack(bff),                     # (L, 1, dim_ff)
        normv=jnp.concatenate([norm_w, norm_b], axis=0),  # (2, d)
    )


# ---------------------------------------------------------------------------
# Wrapper: 2-D slabs + single fused pallas_call
# ---------------------------------------------------------------------------
@functools.partial(jax.jit, static_argnames=("nhead", "num_layers"))
def transformer_decoder_forward(tgt, memory, pos, query_pos, packed,
                                nhead, num_layers):
    # PyTorch (L, B, D) convention outside; free contiguous reshapes to 2-D.
    lq, batch, d = tgt.shape
    lk = memory.shape[0]
    tgt2 = tgt.reshape(lq * batch, d)
    mem2 = memory.reshape(lk * batch, d)
    qp2 = query_pos.reshape(lq * batch, d)
    kp2 = pos.reshape(lk * batch, d)

    kernel = functools.partial(decoder_kernel, nhead=nhead,
                               num_layers=num_layers, batch=batch)
    vmem = pl.BlockSpec(memory_space=pltpu.MemorySpace.VMEM)
    out2 = pl.pallas_call(
        kernel,
        out_shape=jax.ShapeDtypeStruct((lq * batch, d), jnp.float32),
        in_specs=[vmem] * 14,
        out_specs=vmem,
        # No grid: one invocation, whole working set VMEM-resident.
    )(tgt2, mem2, qp2, kp2,
      packed["sa_mu"], packed["ca_m"], packed["ca_u"], packed["ca_w"],
      packed["w1"], packed["w2"], packed["vec4d"], packed["vecd"],
      packed["bff"], packed["normv"])
    return out2.reshape(lq, batch, d)


# ---------------------------------------------------------------------------
# Pure-JAX reference (independent code path: per-batch vmap, standard MHA)
# ---------------------------------------------------------------------------
def _ln(x, w, b):
    mu = jnp.mean(x, axis=-1, keepdims=True)
    var = jnp.mean(jnp.square(x - mu), axis=-1, keepdims=True)
    return (x - mu) * jax.lax.rsqrt(var + EPS) * w + b


def _mha_ref(q_in, k_in, v_in, wq, bq, wk, bk, wv, bv, wo, bo, nhead):
    q = jnp.dot(q_in, wq, preferred_element_type=jnp.float32) + bq
    k = jnp.dot(k_in, wk, preferred_element_type=jnp.float32) + bk
    v = jnp.dot(v_in, wv, preferred_element_type=jnp.float32) + bv
    d_model = wq.shape[1]
    dh = d_model // nhead
    scale = 1.0 / float(np.sqrt(dh))
    heads = []
    for h in range(nhead):
        qh = q[:, h * dh:(h + 1) * dh] * scale
        kh = k[:, h * dh:(h + 1) * dh]
        vh = v[:, h * dh:(h + 1) * dh]
        s = jax.lax.dot_general(qh, kh, (((1,), (1,)), ((), ())),
                                preferred_element_type=jnp.float32)
        s = s - jnp.max(s, axis=-1, keepdims=True)
        p = jnp.exp(s)
        p = p / jnp.sum(p, axis=-1, keepdims=True)
        heads.append(jnp.dot(p, vh, preferred_element_type=jnp.float32))
    o = jnp.concatenate(heads, axis=-1)
    return jnp.dot(o, wo, preferred_element_type=jnp.float32) + bo


def _decoder_layer_math(x, mem, qp, kp, p, nhead):
    qk = x + qp
    sa = _mha_ref(qk, qk, x,
                  p["sa_wq"], p["sa_bq"], p["sa_wk"], p["sa_bk"],
                  p["sa_wv"], p["sa_bv"], p["sa_wo"], p["sa_bo"], nhead)
    x = _ln(x + sa, p["n1w"], p["n1b"])
    ca = _mha_ref(x + qp, mem + kp, mem,
                  p["ca_wq"], p["ca_bq"], p["ca_wk"], p["ca_bk"],
                  p["ca_wv"], p["ca_bv"], p["ca_wo"], p["ca_bo"], nhead)
    x = _ln(x + ca, p["n2w"], p["n2b"])
    h1 = jnp.maximum(
        jnp.dot(x, p["w1"], preferred_element_type=jnp.float32) + p["b1"], 0.0)
    ff = jnp.dot(h1, p["w2"], preferred_element_type=jnp.float32) + p["b2"]
    x = _ln(x + ff, p["n3w"], p["n3b"])
    return x


def transformer_decoder_ref(tgt, memory, pos, query_pos,
                            layer_params, norm_w, norm_b, nhead):
    x = jnp.transpose(tgt, (1, 0, 2))
    mem = jnp.transpose(memory, (1, 0, 2))
    kp = jnp.transpose(pos, (1, 0, 2))
    qp = jnp.transpose(query_pos, (1, 0, 2))
    for p in layer_params:
        fn = lambda xb, mb, qpb, kpb, p=p: _decoder_layer_math(
            xb, mb, qpb, kpb, p, nhead)
        x = jax.vmap(fn)(x, mem, qp, kp)
    x = _ln(x, norm_w, norm_b)
    return jnp.transpose(x, (1, 0, 2))


# ---------------------------------------------------------------------------
# Deterministic parameter initialization (PyTorch shapes, then converted)
# ---------------------------------------------------------------------------
def init_layer_params(key, d_model, dim_ff):
    ks = jax.random.split(key, 18)

    def w(k, shape, s=0.1):
        return jax.random.normal(k, shape, jnp.float32) * s

    sa_in_w = w(ks[0], (3 * d_model, d_model))   # nn.MultiheadAttention in_proj
    sa_in_b = w(ks[1], (3 * d_model,), 0.05)
    sa_out_w = w(ks[2], (d_model, d_model))      # out_proj.weight (out, in)
    sa_out_b = w(ks[3], (d_model,), 0.05)
    ca_in_w = w(ks[4], (3 * d_model, d_model))
    ca_in_b = w(ks[5], (3 * d_model,), 0.05)
    ca_out_w = w(ks[6], (d_model, d_model))
    ca_out_b = w(ks[7], (d_model,), 0.05)
    lin1_w = w(ks[8], (dim_ff, d_model))         # nn.Linear(d_model, dim_ff)
    lin1_b = w(ks[9], (dim_ff,), 0.05)
    lin2_w = w(ks[10], (d_model, dim_ff))
    lin2_b = w(ks[11], (d_model,), 0.05)
    n1w = 1.0 + w(ks[12], (d_model,), 0.05)
    n1b = w(ks[13], (d_model,), 0.05)
    n2w = 1.0 + w(ks[14], (d_model,), 0.05)
    n2b = w(ks[15], (d_model,), 0.05)
    n3w = 1.0 + w(ks[16], (d_model,), 0.05)
    n3b = w(ks[17], (d_model,), 0.05)

    d = d_model
    return dict(
        sa_wq=sa_in_w[:d].T, sa_wk=sa_in_w[d:2 * d].T, sa_wv=sa_in_w[2 * d:].T,
        sa_bq=sa_in_b[:d].reshape(1, d), sa_bk=sa_in_b[d:2 * d].reshape(1, d),
        sa_bv=sa_in_b[2 * d:].reshape(1, d),
        sa_wo=sa_out_w.T, sa_bo=sa_out_b.reshape(1, d),
        ca_wq=ca_in_w[:d].T, ca_wk=ca_in_w[d:2 * d].T, ca_wv=ca_in_w[2 * d:].T,
        ca_bq=ca_in_b[:d].reshape(1, d), ca_bk=ca_in_b[d:2 * d].reshape(1, d),
        ca_bv=ca_in_b[2 * d:].reshape(1, d),
        ca_wo=ca_out_w.T, ca_bo=ca_out_b.reshape(1, d),
        w1=lin1_w.T, b1=lin1_b.reshape(1, dim_ff),
        w2=lin2_w.T, b2=lin2_b.reshape(1, d),
        n1w=n1w.reshape(1, d), n1b=n1b.reshape(1, d),
        n2w=n2w.reshape(1, d), n2b=n2b.reshape(1, d),
        n3w=n3w.reshape(1, d), n3b=n3b.reshape(1, d),
    )


if __name__ == "__main__":
    B, LQ, LK = 2, 8, 16   # batch, num queries (tgt len), memory len

    key = jax.random.PRNGKey(0)
    k_tgt, k_mem, k_pos, k_qpos, k_par, k_norm = jax.random.split(key, 6)

    tgt = jax.random.normal(k_tgt, (LQ, B, D_MODEL), jnp.float32)
    memory = jax.random.normal(k_mem, (LK, B, D_MODEL), jnp.float32)
    pos = 0.5 * jax.random.normal(k_pos, (LK, B, D_MODEL), jnp.float32)
    query_pos = 0.5 * jax.random.normal(k_qpos, (LQ, B, D_MODEL), jnp.float32)

    layer_keys = jax.random.split(k_par, NUM_LAYERS)
    layer_params = [init_layer_params(k, D_MODEL, DIM_FF) for k in layer_keys]

    nk1, nk2 = jax.random.split(k_norm)
    norm_w = (1.0 + 0.05 * jax.random.normal(nk1, (D_MODEL,), jnp.float32)
              ).reshape(1, D_MODEL)
    norm_b = (0.05 * jax.random.normal(nk2, (D_MODEL,), jnp.float32)
              ).reshape(1, D_MODEL)

    packed = pack_params(layer_params, norm_w, norm_b, NHEAD)

    out = transformer_decoder_forward(
        tgt, memory, pos, query_pos, packed,
        nhead=NHEAD, num_layers=NUM_LAYERS)
    out = jax.block_until_ready(out)

    ref = transformer_decoder_ref(
        tgt, memory, pos, query_pos, layer_params, norm_w, norm_b, NHEAD)
    ref = jax.block_until_ready(ref)

    assert out.shape == (LQ, B, D_MODEL)
    np.testing.assert_allclose(np.asarray(out), np.asarray(ref),
                               atol=5e-3, rtol=5e-3)
    print("KERNEL_OK")
</pallas_src>

<mosaic_0001>
module attributes {stable_mosaic.version = 11 : i64} {
  func.func @decoder_kernel(%arg0: memref<16x32xf32, #tpu.memory_space<vmem>>, %arg1: memref<32x32xf32, #tpu.memory_space<vmem>>, %arg2: memref<16x32xf32, #tpu.memory_space<vmem>>, %arg3: memref<32x32xf32, #tpu.memory_space<vmem>>, %arg4: memref<2x2x32x128xf32, #tpu.memory_space<vmem>>, %arg5: memref<2x32x128xf32, #tpu.memory_space<vmem>>, %arg6: memref<32x256xf32, #tpu.memory_space<vmem>>, %arg7: memref<1x256xf32, #tpu.memory_space<vmem>>, %arg8: memref<2x32x64xf32, #tpu.memory_space<vmem>>, %arg9: memref<2x64x32xf32, #tpu.memory_space<vmem>>, %arg10: memref<2x3x128xf32, #tpu.memory_space<vmem>>, %arg11: memref<2x9x32xf32, #tpu.memory_space<vmem>>, %arg12: memref<2x1x64xf32, #tpu.memory_space<vmem>>, %arg13: memref<2x32xf32, #tpu.memory_space<vmem>>, %arg14: memref<16x32xf32, #tpu.memory_space<vmem>>) attributes {dimension_semantics = [], scalar_prefetch = 0 : i64, scratch_operands = 0 : i64, tpu.core_type = #tpu.core_type<tc>} {
    %c0 = arith.constant 0 : index
    %c0_0 = arith.constant 0 : index
    %0 = vector.load %arg0[%c0, %c0_0] : memref<16x32xf32, #tpu.memory_space<vmem>>, vector<16x32xf32>
    %c0_1 = arith.constant 0 : index
    %c0_2 = arith.constant 0 : index
    %1 = vector.load %arg1[%c0_1, %c0_2] : memref<32x32xf32, #tpu.memory_space<vmem>>, vector<32x32xf32>
    %c0_3 = arith.constant 0 : index
    %c0_4 = arith.constant 0 : index
    %2 = vector.load %arg2[%c0_3, %c0_4] : memref<16x32xf32, #tpu.memory_space<vmem>>, vector<16x32xf32>
    %c0_5 = arith.constant 0 : index
    %c0_6 = arith.constant 0 : index
    %3 = vector.load %arg3[%c0_5, %c0_6] : memref<32x32xf32, #tpu.memory_space<vmem>>, vector<32x32xf32>
    %4 = arith.addf %1, %3 : vector<32x32xf32>
    %5 = tpu.iota {dimensions = array<i32: 0>} : vector<64x16xi32>
    %6 = tpu.iota {dimensions = array<i32: 1>} : vector<64x16xi32>
    %c2_i32 = arith.constant 2 : i32
    %c0_i32 = arith.constant 0 : i32
    %7 = arith.cmpi eq, %c2_i32, %c0_i32 : i32
    %c1_i32 = arith.constant 1 : i32
    %8 = arith.select %7, %c1_i32, %c2_i32 : i32
    %9 = vector.broadcast %8 : i32 to vector<64x16xi32>
    %10 = arith.remsi %5, %9 : vector<64x16xi32>
    %c0_i32_7 = arith.constant 0 : i32
    %11 = vector.broadcast %c0_i32_7 : i32 to vector<64x16xi32>
    %12 = arith.cmpi ne, %10, %11 : vector<64x16xi32>
    %c0_i32_8 = arith.constant 0 : i32
    %13 = vector.broadcast %c0_i32_8 : i32 to vector<64x16xi32>
    %14 = arith.cmpi slt, %10, %13 : vector<64x16xi32>
    %c0_i32_9 = arith.constant 0 : i32
    %15 = arith.cmpi slt, %8, %c0_i32_9 : i32
    %16 = vector.broadcast %15 : i1 to vector<64x16xi1>
    %17 = vector.broadcast %16 : vector<64x16xi1> to vector<64x16xi1>
    %18 = arith.xori %14, %17 : vector<64x16xi1>
    %19 = arith.andi %18, %12 : vector<64x16xi1>
    %20 = vector.broadcast %8 : i32 to vector<64x16xi32>
    %21 = arith.addi %10, %20 : vector<64x16xi32>
    %22 = arith.select %19, %21, %10 : vector<64x16xi1>, vector<64x16xi32>
    %c2_i32_10 = arith.constant 2 : i32
    %c0_i32_11 = arith.constant 0 : i32
    %23 = arith.cmpi eq, %c2_i32_10, %c0_i32_11 : i32
    %c1_i32_12 = arith.constant 1 : i32
    %24 = arith.select %23, %c1_i32_12, %c2_i32_10 : i32
    %25 = vector.broadcast %24 : i32 to vector<64x16xi32>
    %26 = arith.remsi %6, %25 : vector<64x16xi32>
    %c0_i32_13 = arith.constant 0 : i32
    %27 = vector.broadcast %c0_i32_13 : i32 to vector<64x16xi32>
    %28 = arith.cmpi ne, %26, %27 : vector<64x16xi32>
    %c0_i32_14 = arith.constant 0 : i32
    %29 = vector.broadcast %c0_i32_14 : i32 to vector<64x16xi32>
    %30 = arith.cmpi slt, %26, %29 : vector<64x16xi32>
    %c0_i32_15 = arith.constant 0 : i32
    %31 = arith.cmpi slt, %24, %c0_i32_15 : i32
    %32 = vector.broadcast %31 : i1 to vector<64x16xi1>
    %33 = vector.broadcast %32 : vector<64x16xi1> to vector<64x16xi1>
    %34 = arith.xori %30, %33 : vector<64x16xi1>
    %35 = arith.andi %34, %28 : vector<64x16xi1>
    %36 = vector.broadcast %24 : i32 to vector<64x16xi32>
    %37 = arith.addi %26, %36 : vector<64x16xi32>
    %38 = arith.select %35, %37, %26 : vector<64x16xi1>, vector<64x16xi32>
    %39 = arith.cmpi eq, %22, %38 : vector<64x16xi32>
    %cst = arith.constant 0.000000e+00 : f32
    %cst_16 = arith.constant -1.000000e+30 : f32
    %40 = vector.broadcast %cst : f32 to vector<64x16xf32>
    %41 = vector.broadcast %cst_16 : f32 to vector<64x16xf32>
    %42 = arith.select %39, %40, %41 : vector<64x16xi1>, vector<64x16xf32>
    %43 = tpu.iota {dimensions = array<i32: 0>} : vector<64x32xi32>
    %44 = tpu.iota {dimensions = array<i32: 1>} : vector<64x32xi32>
    %c2_i32_17 = arith.constant 2 : i32
    %c0_i32_18 = arith.constant 0 : i32
    %45 = arith.cmpi eq, %c2_i32_17, %c0_i32_18 : i32
    %c1_i32_19 = arith.constant 1 : i32
    %46 = arith.select %45, %c1_i32_19, %c2_i32_17 : i32
    %47 = vector.broadcast %46 : i32 to vector<64x32xi32>
    %48 = arith.remsi %43, %47 : vector<64x32xi32>
    %c0_i32_20 = arith.constant 0 : i32
    %49 = vector.broadcast %c0_i32_20 : i32 to vector<64x32xi32>
    %50 = arith.cmpi ne, %48, %49 : vector<64x32xi32>
    %c0_i32_21 = arith.constant 0 : i32
    %51 = vector.broadcast %c0_i32_21 : i32 to vector<64x32xi32>
    %52 = arith.cmpi slt, %48, %51 : vector<64x32xi32>
    %c0_i32_22 = arith.constant 0 : i32
    %53 = arith.cmpi slt, %46, %c0_i32_22 : i32
    %54 = vector.broadcast %53 : i1 to vector<64x32xi1>
    %55 = vector.broadcast %54 : vector<64x32xi1> to vector<64x32xi1>
    %56 = arith.xori %52, %55 : vector<64x32xi1>
    %57 = arith.andi %56, %50 : vector<64x32xi1>
    %58 = vector.broadcast %46 : i32 to vector<64x32xi32>
    %59 = arith.addi %48, %58 : vector<64x32xi32>
    %60 = arith.select %57, %59, %48 : vector<64x32xi1>, vector<64x32xi32>
    %c2_i32_23 = arith.constant 2 : i32
    %c0_i32_24 = arith.constant 0 : i32
    %61 = arith.cmpi eq, %c2_i32_23, %c0_i32_24 : i32
    %c1_i32_25 = arith.constant 1 : i32
    %62 = arith.select %61, %c1_i32_25, %c2_i32_23 : i32
    %63 = vector.broadcast %62 : i32 to vector<64x32xi32>
    %64 = arith.remsi %44, %63 : vector<64x32xi32>
    %c0_i32_26 = arith.constant 0 : i32
    %65 = vector.broadcast %c0_i32_26 : i32 to vector<64x32xi32>
    %66 = arith.cmpi ne, %64, %65 : vector<64x32xi32>
    %c0_i32_27 = arith.constant 0 : i32
    %67 = vector.broadcast %c0_i32_27 : i32 to vector<64x32xi32>
    %68 = arith.cmpi slt, %64, %67 : vector<64x32xi32>
    %c0_i32_28 = arith.constant 0 : i32
    %69 = arith.cmpi slt, %62, %c0_i32_28 : i32
    %70 = vector.broadcast %69 : i1 to vector<64x32xi1>
    %71 = vector.broadcast %70 : vector<64x32xi1> to vector<64x32xi1>
    %72 = arith.xori %68, %71 : vector<64x32xi1>
    %73 = arith.andi %72, %66 : vector<64x32xi1>
    %74 = vector.broadcast %62 : i32 to vector<64x32xi32>
    %75 = arith.addi %64, %74 : vector<64x32xi32>
    %76 = arith.select %73, %75, %64 : vector<64x32xi1>, vector<64x32xi32>
    %77 = arith.cmpi eq, %60, %76 : vector<64x32xi32>
    %cst_29 = arith.constant 0.000000e+00 : f32
    %cst_30 = arith.constant -1.000000e+30 : f32
    %78 = vector.broadcast %cst_29 : f32 to vector<64x32xf32>
    %79 = vector.broadcast %cst_30 : f32 to vector<64x32xf32>
    %80 = arith.select %77, %78, %79 : vector<64x32xi1>, vector<64x32xf32>
    %c0_31 = arith.constant 0 : index
    %c0_32 = arith.constant 0 : index
    %81 = vector.load %arg6[%c0_31, %c0_32] : memref<32x256xf32, #tpu.memory_space<vmem>>, vector<32x256xf32>
    %cst_33 = arith.constant dense<0.000000e+00> : vector<32x256xf32>
    %82 = tpu.matmul %1, %81, %cst_33 {dimension_numbers = #tpu.dot_dimension_numbers<[1], [0], [0], [1], [0, 0, 1, 1], [], []>} : vector<32x32xf32>, vector<32x256xf32>, vector<32x256xf32> -> vector<32x256xf32>
    %c0_34 = arith.constant 0 : index
    %c0_35 = arith.constant 0 : index
    %83 = vector.load %arg7[%c0_34, %c0_35] : memref<1x256xf32, #tpu.memory_space<vmem>>, vector<1x256xf32>
    %84 = vector.broadcast %83 : vector<1x256xf32> to vector<32x256xf32>
    %85 = arith.addf %82, %84 : vector<32x256xf32>
    %c0_36 = arith.constant 0 : index
    %c0_37 = arith.constant 0 : index
    %c0_38 = arith.constant 0 : index
    %86 = vector.load %arg11[%c0_36, %c0_37, %c0_38] : memref<2x9x32xf32, #tpu.memory_space<vmem>>, vector<1x9x32xf32>
    %87 = vector.shape_cast %86 : vector<1x9x32xf32> to vector<9x32xf32>
    %c0_39 = arith.constant 0 : index
    %c0_40 = arith.constant 0 : index
    %c0_41 = arith.constant 0 : index
    %88 = vector.load %arg10[%c0_39, %c0_40, %c0_41] : memref<2x3x128xf32, #tpu.memory_space<vmem>>, vector<1x3x128xf32>
    %89 = vector.shape_cast %88 : vector<1x3x128xf32> to vector<3x128xf32>
    %c0_42 = arith.constant 0 : index
    %c0_43 = arith.constant 0 : index
    %c0_44 = arith.constant 0 : index
    %90 = vector.load %arg12[%c0_42, %c0_43, %c0_44] : memref<2x1x64xf32, #tpu.memory_space<vmem>>, vector<1x1x64xf32>
    %91 = vector.shape_cast %90 : vector<1x1x64xf32> to vector<1x64xf32>
    %92 = arith.addf %0, %2 : vector<16x32xf32>
    %c0_45 = arith.constant 0 : index
    %c0_46 = arith.constant 0 : index
    %c0_47 = arith.constant 0 : index
    %c0_48 = arith.constant 0 : index
    %93 = vector.load %arg4[%c0_45, %c0_46, %c0_47, %c0_48] : memref<2x2x32x128xf32, #tpu.memory_space<vmem>>, vector<1x1x32x128xf32>
    %94 = vector.shape_cast %93 : vector<1x1x32x128xf32> to vector<32x128xf32>
    %cst_49 = arith.constant dense<0.000000e+00> : vector<16x128xf32>
    %95 = tpu.matmul %92, %94, %cst_49 {dimension_numbers = #tpu.dot_dimension_numbers<[1], [0], [0], [1], [0, 0, 1, 1], [], []>} : vector<16x32xf32>, vector<32x128xf32>, vector<16x128xf32> -> vector<16x128xf32>
    %96 = vector.extract_strided_slice %89 {offsets = [0, 0], sizes = [1, 128], strides = [1, 1]} : vector<3x128xf32> to vector<1x128xf32>
    %97 = vector.broadcast %96 : vector<1x128xf32> to vector<16x128xf32>
    %98 = arith.addf %95, %97 : vector<16x128xf32>
    %c0_50 = arith.constant 0 : index
    %c1 = arith.constant 1 : index
    %c0_51 = arith.constant 0 : index
    %c0_52 = arith.constant 0 : index
    %99 = vector.load %arg4[%c0_50, %c1, %c0_51, %c0_52] : memref<2x2x32x128xf32, #tpu.memory_space<vmem>>, vector<1x1x32x128xf32>
    %100 = vector.shape_cast %99 : vector<1x1x32x128xf32> to vector<32x128xf32>
    %cst_53 = arith.constant dense<0.000000e+00> : vector<16x128xf32>
    %101 = tpu.matmul %0, %100, %cst_53 {dimension_numbers = #tpu.dot_dimension_numbers<[1], [0], [0], [1], [0, 0, 1, 1], [], []>} : vector<16x32xf32>, vector<32x128xf32>, vector<16x128xf32> -> vector<16x128xf32>
    %102 = vector.extract_strided_slice %89 {offsets = [1, 0], sizes = [1, 128], strides = [1, 1]} : vector<3x128xf32> to vector<1x128xf32>
    %103 = vector.broadcast %102 : vector<1x128xf32> to vector<16x128xf32>
    %104 = arith.addf %101, %103 : vector<16x128xf32>
    %105 = vector.extract_strided_slice %87 {offsets = [0, 0], sizes = [1, 32], strides = [1, 1]} : vector<9x32xf32> to vector<1x32xf32>
    %106 = vector.extract_strided_slice %98 {offsets = [0, 0], sizes = [16, 32], strides = [1, 1]} : vector<16x128xf32> to vector<16x32xf32>
    %cst_54 = arith.constant dense<0.000000e+00> : vector<16x16xf32>
    %107 = tpu.matmul %106, %92, %cst_54 {dimension_numbers = #tpu.dot_dimension_numbers<[1], [1], [0], [0], [0, 0, 1, 0], [], []>} : vector<16x32xf32>, vector<16x32xf32>, vector<16x16xf32> -> vector<16x16xf32>
    %108 = vector.extract_strided_slice %98 {offsets = [0, 32], sizes = [16, 32], strides = [1, 1]} : vector<16x128xf32> to vector<16x32xf32>
    %cst_55 = arith.constant dense<0.000000e+00> : vector<16x16xf32>
    %109 = tpu.matmul %108, %92, %cst_55 {dimension_numbers = #tpu.dot_dimension_numbers<[1], [1], [0], [0], [0, 0, 1, 0], [], []>} : vector<16x32xf32>, vector<16x32xf32>, vector<16x16xf32> -> vector<16x16xf32>
    %110 = vector.extract_strided_slice %98 {offsets = [0, 64], sizes = [16, 32], strides = [1, 1]} : vector<16x128xf32> to vector<16x32xf32>
    %cst_56 = arith.constant dense<0.000000e+00> : vector<16x16xf32>
    %111 = tpu.matmul %110, %92, %cst_56 {dimension_numbers = #tpu.dot_dimension_numbers<[1], [1], [0], [0], [0, 0, 1, 0], [], []>} : vector<16x32xf32>, vector<16x32xf32>, vector<16x16xf32> -> vector<16x16xf32>
    %112 = vector.extract_strided_slice %98 {offsets = [0, 96], sizes = [16, 32], strides = [1, 1]} : vector<16x128xf32> to vector<16x32xf32>
    %cst_57 = arith.constant dense<0.000000e+00> : vector<16x16xf32>
    %113 = tpu.matmul %112, %92, %cst_57 {dimension_numbers = #tpu.dot_dimension_numbers<[1], [1], [0], [0], [0, 0, 1, 0], [], []>} : vector<16x32xf32>, vector<16x32xf32>, vector<16x16xf32> -> vector<16x16xf32>
    %114 = tpu.concatenate %107, %109, %111, %113 in 0 : vector<16x16xf32>, vector<16x16xf32>, vector<16x16xf32>, vector<16x16xf32> -> vector<64x16xf32>
    %115 = arith.addf %114, %42 : vector<64x16xf32>
    %cst_58 = arith.constant dense<0xFF800000> : vector<64xf32>
    %116 = vector.multi_reduction <maximumf>, %115, %cst_58 [1] : vector<64x16xf32> to vector<64xf32>
    %117 = vector.shape_cast %116 : vector<64xf32> to vector<64x1xf32>
    %118 = vector.broadcast %117 : vector<64x1xf32> to vector<64x16xf32>
    %119 = arith.subf %115, %118 : vector<64x16xf32>
    %120 = math.exp %119 : vector<64x16xf32>
    %cst_59 = arith.constant dense<0.000000e+00> : vector<64xf32>
    %121 = vector.multi_reduction <add>, %120, %cst_59 [1] : vector<64x16xf32> to vector<64xf32>
    %122 = vector.shape_cast %121 : vector<64xf32> to vector<64x1xf32>
    %123 = tpu.reciprocal %122 {approx = true} : vector<64x1xf32> -> vector<64x1xf32>
    %124 = vector.broadcast %123 : vector<64x1xf32> to vector<64x16xf32>
    %125 = arith.mulf %120, %124 : vector<64x16xf32>
    %126 = vector.extract_strided_slice %125 {offsets = [0, 0], sizes = [16, 16], strides = [1, 1]} : vector<64x16xf32> to vector<16x16xf32>
    %127 = vector.extract_strided_slice %104 {offsets = [0, 0], sizes = [16, 32], strides = [1, 1]} : vector<16x128xf32> to vector<16x32xf32>
    %cst_60 = arith.constant dense<0.000000e+00> : vector<16x32xf32>
    %128 = tpu.matmul %126, %127, %cst_60 {dimension_numbers = #tpu.dot_dimension_numbers<[1], [0], [0], [1], [0, 0, 1, 1], [], []>} : vector<16x16xf32>, vector<16x32xf32>, vector<16x32xf32> -> vector<16x32xf32>
    %129 = vector.extract_strided_slice %125 {offsets = [16, 0], sizes = [16, 16], strides = [1, 1]} : vector<64x16xf32> to vector<16x16xf32>
    %130 = vector.extract_strided_slice %104 {offsets = [0, 32], sizes = [16, 32], strides = [1, 1]} : vector<16x128xf32> to vector<16x32xf32>
    %cst_61 = arith.constant dense<0.000000e+00> : vector<16x32xf32>
    %131 = tpu.matmul %129, %130, %cst_61 {dimension_numbers = #tpu.dot_dimension_numbers<[1], [0], [0], [1], [0, 0, 1, 1], [], []>} : vector<16x16xf32>, vector<16x32xf32>, vector<16x32xf32> -> vector<16x32xf32>
    %132 = arith.addf %128, %131 : vector<16x32xf32>
    %133 = vector.extract_strided_slice %125 {offsets = [32, 0], sizes = [16, 16], strides = [1, 1]} : vector<64x16xf32> to vector<16x16xf32>
    %134 = vector.extract_strided_slice %104 {offsets = [0, 64], sizes = [16, 32], strides = [1, 1]} : vector<16x128xf32> to vector<16x32xf32>
    %cst_62 = arith.constant dense<0.000000e+00> : vector<16x32xf32>
    %135 = tpu.matmul %133, %134, %cst_62 {dimension_numbers = #tpu.dot_dimension_numbers<[1], [0], [0], [1], [0, 0, 1, 1], [], []>} : vector<16x16xf32>, vector<16x32xf32>, vector<16x32xf32> -> vector<16x32xf32>
    %136 = arith.addf %132, %135 : vector<16x32xf32>
    %137 = vector.extract_strided_slice %125 {offsets = [48, 0], sizes = [16, 16], strides = [1, 1]} : vector<64x16xf32> to vector<16x16xf32>
    %138 = vector.extract_strided_slice %104 {offsets = [0, 96], sizes = [16, 32], strides = [1, 1]} : vector<16x128xf32> to vector<16x32xf32>
    %cst_63 = arith.constant dense<0.000000e+00> : vector<16x32xf32>
    %139 = tpu.matmul %137, %138, %cst_63 {dimension_numbers = #tpu.dot_dimension_numbers<[1], [0], [0], [1], [0, 0, 1, 1], [], []>} : vector<16x16xf32>, vector<16x32xf32>, vector<16x32xf32> -> vector<16x32xf32>
    %140 = arith.addf %136, %139 : vector<16x32xf32>
    %141 = vector.broadcast %105 : vector<1x32xf32> to vector<16x32xf32>
    %142 = arith.addf %140, %141 : vector<16x32xf32>
    %143 = arith.addf %0, %142 : vector<16x32xf32>
    %144 = vector.extract_strided_slice %87 {offsets = [3, 0], sizes = [1, 32], strides = [1, 1]} : vector<9x32xf32> to vector<1x32xf32>
    %145 = vector.extract_strided_slice %87 {offsets = [4, 0], sizes = [1, 32], strides = [1, 1]} : vector<9x32xf32> to vector<1x32xf32>
    %146 = arith.mulf %143, %143 : vector<16x32xf32>
    %147 = tpu.concatenate %143, %146 in 0 : vector<16x32xf32>, vector<16x32xf32> -> vector<32x32xf32>
    %cst_64 = arith.constant dense<0.000000e+00> : vector<32xf32>
    %148 = vector.multi_reduction <add>, %147, %cst_64 [1] : vector<32x32xf32> to vector<32xf32>
    %149 = vector.shape_cast %148 : vector<32xf32> to vector<32x1xf32>
    %150 = vector.extract_strided_slice %149 {offsets = [0, 0], sizes = [16, 1], strides = [1, 1]} : vector<32x1xf32> to vector<16x1xf32>
    %cst_65 = arith.constant 3.125000e-02 : f32
    %151 = vector.broadcast %cst_65 : f32 to vector<16x1xf32>
    %152 = arith.mulf %150, %151 : vector<16x1xf32>
    %153 = vector.extract_strided_slice %149 {offsets = [16, 0], sizes = [16, 1], strides = [1, 1]} : vector<32x1xf32> to vector<16x1xf32>
    %cst_66 = arith.constant 3.125000e-02 : f32
    %154 = vector.broadcast %cst_66 : f32 to vector<16x1xf32>
    %155 = arith.mulf %153, %154 : vector<16x1xf32>
    %156 = arith.mulf %152, %152 : vector<16x1xf32>
    %157 = arith.subf %155, %156 : vector<16x1xf32>
    %158 = vector.broadcast %152 : vector<16x1xf32> to vector<16x32xf32>
    %159 = arith.subf %143, %158 : vector<16x32xf32>
    %cst_67 = arith.constant 9.99999974E-6 : f32
    %160 = vector.broadcast %cst_67 : f32 to vector<16x1xf32>
    %161 = arith.addf %157, %160 : vector<16x1xf32>
    %162 = math.rsqrt %161 : vector<16x1xf32>
    %163 = vector.broadcast %162 : vector<16x1xf32> to vector<16x32xf32>
    %164 = arith.mulf %159, %163 : vector<16x32xf32>
    %165 = vector.broadcast %144 : vector<1x32xf32> to vector<16x32xf32>
    %166 = arith.mulf %164, %165 : vector<16x32xf32>
    %167 = vector.broadcast %145 : vector<1x32xf32> to vector<16x32xf32>
    %168 = arith.addf %166, %167 : vector<16x32xf32>
    %169 = arith.addf %168, %2 : vector<16x32xf32>
    %c0_68 = arith.constant 0 : index
    %c0_69 = arith.constant 0 : index
    %c0_70 = arith.constant 0 : index
    %170 = vector.load %arg5[%c0_68, %c0_69, %c0_70] : memref<2x32x128xf32, #tpu.memory_space<vmem>>, vector<1x32x128xf32>
    %171 = vector.shape_cast %170 : vector<1x32x128xf32> to vector<32x128xf32>
    %cst_71 = arith.constant dense<0.000000e+00> : vector<16x128xf32>
    %172 = tpu.matmul %169, %171, %cst_71 {dimension_numbers = #tpu.dot_dimension_numbers<[1], [0], [0], [1], [0, 0, 1, 1], [], []>} : vector<16x32xf32>, vector<32x128xf32>, vector<16x128xf32> -> vector<16x128xf32>
    %173 = vector.extract_strided_slice %89 {offsets = [2, 0], sizes = [1, 128], strides = [1, 1]} : vector<3x128xf32> to vector<1x128xf32>
    %174 = vector.broadcast %173 : vector<1x128xf32> to vector<16x128xf32>
    %175 = arith.addf %172, %174 : vector<16x128xf32>
    %176 = vector.extract_strided_slice %85 {offsets = [0, 0], sizes = [32, 128], strides = [1, 1]} : vector<32x256xf32> to vector<32x128xf32>
    %177 = vector.extract_strided_slice %87 {offsets = [1, 0], sizes = [1, 32], strides = [1, 1]} : vector<9x32xf32> to vector<1x32xf32>
    %178 = vector.extract_strided_slice %175 {offsets = [0, 0], sizes = [16, 32], strides = [1, 1]} : vector<16x128xf32> to vector<16x32xf32>
    %cst_72 = arith.constant dense<0.000000e+00> : vector<16x32xf32>
    %179 = tpu.matmul %178, %4, %cst_72 {dimension_numbers = #tpu.dot_dimension_numbers<[1], [1], [0], [0], [0, 0, 1, 0], [], []>} : vector<16x32xf32>, vector<32x32xf32>, vector<16x32xf32> -> vector<16x32xf32>
    %180 = vector.extract_strided_slice %175 {offsets = [0, 32], sizes = [16, 32], strides = [1, 1]} : vector<16x128xf32> to vector<16x32xf32>
    %cst_73 = arith.constant dense<0.000000e+00> : vector<16x32xf32>
    %181 = tpu.matmul %180, %4, %cst_73 {dimension_numbers = #tpu.dot_dimension_numbers<[1], [1], [0], [0], [0, 0, 1, 0], [], []>} : vector<16x32xf32>, vector<32x32xf32>, vector<16x32xf32> -> vector<16x32xf32>
    %182 = vector.extract_strided_slice %175 {offsets = [0, 64], sizes = [16, 32], strides = [1, 1]} : vector<16x128xf32> to vector<16x32xf32>
    %cst_74 = arith.constant dense<0.000000e+00> : vector<16x32xf32>
    %183 = tpu.matmul %182, %4, %cst_74 {dimension_numbers = #tpu.dot_dimension_numbers<[1], [1], [0], [0], [0, 0, 1, 0], [], []>} : vector<16x32xf32>, vector<32x32xf32>, vector<16x32xf32> -> vector<16x32xf32>
    %184 = vector.extract_strided_slice %175 {offsets = [0, 96], sizes = [16, 32], strides = [1, 1]} : vector<16x128xf32> to vector<16x32xf32>
    %cst_75 = arith.constant dense<0.000000e+00> : vector<16x32xf32>
    %185 = tpu.matmul %184, %4, %cst_75 {dimension_numbers = #tpu.dot_dimension_numbers<[1], [1], [0], [0], [0, 0, 1, 0], [], []>} : vector<16x32xf32>, vector<32x32xf32>, vector<16x32xf32> -> vector<16x32xf32>
    %186 = tpu.concatenate %179, %181, %183, %185 in 0 : vector<16x32xf32>, vector<16x32xf32>, vector<16x32xf32>, vector<16x32xf32> -> vector<64x32xf32>
    %187 = arith.addf %186, %80 : vector<64x32xf32>
    %cst_76 = arith.constant dense<0xFF800000> : vector<64xf32>
    %188 = vector.multi_reduction <maximumf>, %187, %cst_76 [1] : vector<64x32xf32> to vector<64xf32>
    %189 = vector.shape_cast %188 : vector<64xf32> to vector<64x1xf32>
    %190 = vector.broadcast %189 : vector<64x1xf32> to vector<64x32xf32>
    %191 = arith.subf %187, %190 : vector<64x32xf32>
    %192 = math.exp %191 : vector<64x32xf32>
    %cst_77 = arith.constant dense<0.000000e+00> : vector<64xf32>
    %193 = vector.multi_reduction <add>, %192, %cst_77 [1] : vector<64x32xf32> to vector<64xf32>
    %194 = vector.shape_cast %193 : vector<64xf32> to vector<64x1xf32>
    %195 = tpu.reciprocal %194 {approx = true} : vector<64x1xf32> -> vector<64x1xf32>
    %196 = vector.broadcast %195 : vector<64x1xf32> to vector<64x32xf32>
    %197 = arith.mulf %192, %196 : vector<64x32xf32>
    %198 = vector.extract_strided_slice %197 {offsets = [0, 0], sizes = [16, 32], strides = [1, 1]} : vector<64x32xf32> to vector<16x32xf32>
    %199 = vector.extract_strided_slice %176 {offsets = [0, 0], sizes = [32, 32], strides = [1, 1]} : vector<32x128xf32> to vector<32x32xf32>
    %cst_78 = arith.constant dense<0.000000e+00> : vector<16x32xf32>
    %200 = tpu.matmul %198, %199, %cst_78 {dimension_numbers = #tpu.dot_dimension_numbers<[1], [0], [0], [1], [0, 0, 1, 1], [], []>} : vector<16x32xf32>, vector<32x32xf32>, vector<16x32xf32> -> vector<16x32xf32>
    %201 = vector.extract_strided_slice %197 {offsets = [16, 0], sizes = [16, 32], strides = [1, 1]} : vector<64x32xf32> to vector<16x32xf32>
    %202 = vector.extract_strided_slice %176 {offsets = [0, 32], sizes = [32, 32], strides = [1, 1]} : vector<32x128xf32> to vector<32x32xf32>
    %cst_79 = arith.constant dense<0.000000e+00> : vector<16x32xf32>
    %203 = tpu.matmul %201, %202, %cst_79 {dimension_numbers = #tpu.dot_dimension_numbers<[1], [0], [0], [1], [0, 0, 1, 1], [], []>} : vector<16x32xf32>, vector<32x32xf32>, vector<16x32xf32> -> vector<16x32xf32>
    %204 = arith.addf %200, %203 : vector<16x32xf32>
    %205 = vector.extract_strided_slice %197 {offsets = [32, 0], sizes = [16, 32], strides = [1, 1]} : vector<64x32xf32> to vector<16x32xf32>
    %206 = vector.extract_strided_slice %176 {offsets = [0, 64], sizes = [32, 32], strides = [1, 1]} : vector<32x128xf32> to vector<32x32xf32>
    %cst_80 = arith.constant dense<0.000000e+00> : vector<16x32xf32>
    %207 = tpu.matmul %205, %206, %cst_80 {dimension_numbers = #tpu.dot_dimension_numbers<[1], [0], [0], [1], [0, 0, 1, 1], [], []>} : vector<16x32xf32>, vector<32x32xf32>, vector<16x32xf32> -> vector<16x32xf32>
    %208 = arith.addf %204, %207 : vector<16x32xf32>
    %209 = vector.extract_strided_slice %197 {offsets = [48, 0], sizes = [16, 32], strides = [1, 1]} : vector<64x32xf32> to vector<16x32xf32>
    %210 = vector.extract_strided_slice %176 {offsets = [0, 96], sizes = [32, 32], strides = [1, 1]} : vector<32x128xf32> to vector<32x32xf32>
    %cst_81 = arith.constant dense<0.000000e+00> : vector<16x32xf32>
    %211 = tpu.matmul %209, %210, %cst_81 {dimension_numbers = #tpu.dot_dimension_numbers<[1], [0], [0], [1], [0, 0, 1, 1], [], []>} : vector<16x32xf32>, vector<32x32xf32>, vector<16x32xf32> -> vector<16x32xf32>
    %212 = arith.addf %208, %211 : vector<16x32xf32>
    %213 = vector.broadcast %177 : vector<1x32xf32> to vector<16x32xf32>
    %214 = arith.addf %212, %213 : vector<16x32xf32>
    %215 = arith.addf %168, %214 : vector<16x32xf32>
    %216 = vector.extract_strided_slice %87 {offsets = [5, 0], sizes = [1, 32], strides = [1, 1]} : vector<9x32xf32> to vector<1x32xf32>
    %217 = vector.extract_strided_slice %87 {offsets = [6, 0], sizes = [1, 32], strides = [1, 1]} : vector<9x32xf32> to vector<1x32xf32>
    %218 = arith.mulf %215, %215 : vector<16x32xf32>
    %219 = tpu.concatenate %215, %218 in 0 : vector<16x32xf32>, vector<16x32xf32> -> vector<32x32xf32>
    %cst_82 = arith.constant dense<0.000000e+00> : vector<32xf32>
    %220 = vector.multi_reduction <add>, %219, %cst_82 [1] : vector<32x32xf32> to vector<32xf32>
    %221 = vector.shape_cast %220 : vector<32xf32> to vector<32x1xf32>
    %222 = vector.extract_strided_slice %221 {offsets = [0, 0], sizes = [16, 1], strides = [1, 1]} : vector<32x1xf32> to vector<16x1xf32>
    %cst_83 = arith.constant 3.125000e-02 : f32
    %223 = vector.broadcast %cst_83 : f32 to vector<16x1xf32>
    %224 = arith.mulf %222, %223 : vector<16x1xf32>
    %225 = vector.extract_strided_slice %221 {offsets = [16, 0], sizes = [16, 1], strides = [1, 1]} : vector<32x1xf32> to vector<16x1xf32>
    %cst_84 = arith.constant 3.125000e-02 : f32
    %226 = vector.broadcast %cst_84 : f32 to vector<16x1xf32>
    %227 = arith.mulf %225, %226 : vector<16x1xf32>
    %228 = arith.mulf %224, %224 : vector<16x1xf32>
    %229 = arith.subf %227, %228 : vector<16x1xf32>
    %230 = vector.broadcast %224 : vector<16x1xf32> to vector<16x32xf32>
    %231 = arith.subf %215, %230 : vector<16x32xf32>
    %cst_85 = arith.constant 9.99999974E-6 : f32
    %232 = vector.broadcast %cst_85 : f32 to vector<16x1xf32>
    %233 = arith.addf %229, %232 : vector<16x1xf32>
    %234 = math.rsqrt %233 : vector<16x1xf32>
    %235 = vector.broadcast %234 : vector<16x1xf32> to vector<16x32xf32>
    %236 = arith.mulf %231, %235 : vector<16x32xf32>
    %237 = vector.broadcast %216 : vector<1x32xf32> to vector<16x32xf32>
    %238 = arith.mulf %236, %237 : vector<16x32xf32>
    %239 = vector.broadcast %217 : vector<1x32xf32> to vector<16x32xf32>
    %240 = arith.addf %238, %239 : vector<16x32xf32>
    %c0_86 = arith.constant 0 : index
    %c0_87 = arith.constant 0 : index
    %c0_88 = arith.constant 0 : index
    %241 = vector.load %arg8[%c0_86, %c0_87, %c0_88] : memref<2x32x64xf32, #tpu.memory_space<vmem>>, vector<1x32x64xf32>
    %242 = vector.shape_cast %241 : vector<1x32x64xf32> to vector<32x64xf32>
    %cst_89 = arith.constant dense<0.000000e+00> : vector<16x64xf32>
    %243 = tpu.matmul %240, %242, %cst_89 {dimension_numbers = #tpu.dot_dimension_numbers<[1], [0], [0], [1], [0, 0, 1, 1], [], []>} : vector<16x32xf32>, vector<32x64xf32>, vector<16x64xf32> -> vector<16x64xf32>
    %244 = vector.broadcast %91 : vector<1x64xf32> to vector<16x64xf32>
    %245 = arith.addf %243, %244 : vector<16x64xf32>
    %cst_90 = arith.constant 0.000000e+00 : f32
    %246 = vector.broadcast %cst_90 : f32 to vector<16x64xf32>
    %247 = arith.maximumf %245, %246 : vector<16x64xf32>
    %c0_91 = arith.constant 0 : index
    %c0_92 = arith.constant 0 : index
    %c0_93 = arith.constant 0 : index
    %248 = vector.load %arg9[%c0_91, %c0_92, %c0_93] : memref<2x64x32xf32, #tpu.memory_space<vmem>>, vector<1x64x32xf32>
    %249 = vector.shape_cast %248 : vector<1x64x32xf32> to vector<64x32xf32>
    %cst_94 = arith.constant dense<0.000000e+00> : vector<16x32xf32>
    %250 = tpu.matmul %247, %249, %cst_94 {dimension_numbers = #tpu.dot_dimension_numbers<[1], [0], [0], [1], [0, 0, 1, 1], [], []>} : vector<16x64xf32>, vector<64x32xf32>, vector<16x32xf32> -> vector<16x32xf32>
    %251 = vector.extract_strided_slice %87 {offsets = [2, 0], sizes = [1, 32], strides = [1, 1]} : vector<9x32xf32> to vector<1x32xf32>
    %252 = vector.broadcast %251 : vector<1x32xf32> to vector<16x32xf32>
    %253 = arith.addf %250, %252 : vector<16x32xf32>
    %254 = arith.addf %240, %253 : vector<16x32xf32>
    %255 = vector.extract_strided_slice %87 {offsets = [7, 0], sizes = [1, 32], strides = [1, 1]} : vector<9x32xf32> to vector<1x32xf32>
    %256 = vector.extract_strided_slice %87 {offsets = [8, 0], sizes = [1, 32], strides = [1, 1]} : vector<9x32xf32> to vector<1x32xf32>
    %257 = arith.mulf %254, %254 : vector<16x32xf32>
    %258 = tpu.concatenate %254, %257 in 0 : vector<16x32xf32>, vector<16x32xf32> -> vector<32x32xf32>
    %cst_95 = arith.constant dense<0.000000e+00> : vector<32xf32>
    %259 = vector.multi_reduction <add>, %258, %cst_95 [1] : vector<32x32xf32> to vector<32xf32>
    %260 = vector.shape_cast %259 : vector<32xf32> to vector<32x1xf32>
    %261 = vector.extract_strided_slice %260 {offsets = [0, 0], sizes = [16, 1], strides = [1, 1]} : vector<32x1xf32> to vector<16x1xf32>
    %cst_96 = arith.constant 3.125000e-02 : f32
    %262 = vector.broadcast %cst_96 : f32 to vector<16x1xf32>
    %263 = arith.mulf %261, %262 : vector<16x1xf32>
    %264 = vector.extract_strided_slice %260 {offsets = [16, 0], sizes = [16, 1], strides = [1, 1]} : vector<32x1xf32> to vector<16x1xf32>
    %cst_97 = arith.constant 3.125000e-02 : f32
    %265 = vector.broadcast %cst_97 : f32 to vector<16x1xf32>
    %266 = arith.mulf %264, %265 : vector<16x1xf32>
    %267 = arith.mulf %263, %263 : vector<16x1xf32>
    %268 = arith.subf %266, %267 : vector<16x1xf32>
    %269 = vector.broadcast %263 : vector<16x1xf32> to vector<16x32xf32>
    %270 = arith.subf %254, %269 : vector<16x32xf32>
    %cst_98 = arith.constant 9.99999974E-6 : f32
    %271 = vector.broadcast %cst_98 : f32 to vector<16x1xf32>
    %272 = arith.addf %268, %271 : vector<16x1xf32>
    %273 = math.rsqrt %272 : vector<16x1xf32>
    %274 = vector.broadcast %273 : vector<16x1xf32> to vector<16x32xf32>
    %275 = arith.mulf %270, %274 : vector<16x32xf32>
    %276 = vector.broadcast %255 : vector<1x32xf32> to vector<16x32xf32>
    %277 = arith.mulf %275, %276 : vector<16x32xf32>
    %278 = vector.broadcast %256 : vector<1x32xf32> to vector<16x32xf32>
    %279 = arith.addf %277, %278 : vector<16x32xf32>
    %c1_99 = arith.constant 1 : index
    %c0_100 = arith.constant 0 : index
    %c0_101 = arith.constant 0 : index
    %280 = vector.load %arg11[%c1_99, %c0_100, %c0_101] : memref<2x9x32xf32, #tpu.memory_space<vmem>>, vector<1x9x32xf32>
    %281 = vector.shape_cast %280 : vector<1x9x32xf32> to vector<9x32xf32>
    %c1_102 = arith.constant 1 : index
    %c0_103 = arith.constant 0 : index
    %c0_104 = arith.constant 0 : index
    %282 = vector.load %arg10[%c1_102, %c0_103, %c0_104] : memref<2x3x128xf32, #tpu.memory_space<vmem>>, vector<1x3x128xf32>
    %283 = vector.shape_cast %282 : vector<1x3x128xf32> to vector<3x128xf32>
    %c1_105 = arith.constant 1 : index
    %c0_106 = arith.constant 0 : index
    %c0_107 = arith.constant 0 : index
    %284 = vector.load %arg12[%c1_105, %c0_106, %c0_107] : memref<2x1x64xf32, #tpu.memory_space<vmem>>, vector<1x1x64xf32>
    %285 = vector.shape_cast %284 : vector<1x1x64xf32> to vector<1x64xf32>
    %286 = arith.addf %279, %2 : vector<16x32xf32>
    %c1_108 = arith.constant 1 : index
    %c0_109 = arith.constant 0 : index
    %c0_110 = arith.constant 0 : index
    %c0_111 = arith.constant 0 : index
    %287 = vector.load %arg4[%c1_108, %c0_109, %c0_110, %c0_111] : memref<2x2x32x128xf32, #tpu.memory_space<vmem>>, vector<1x1x32x128xf32>
    %288 = vector.shape_cast %287 : vector<1x1x32x128xf32> to vector<32x128xf32>
    %cst_112 = arith.constant dense<0.000000e+00> : vector<16x128xf32>
    %289 = tpu.matmul %286, %288, %cst_112 {dimension_numbers = #tpu.dot_dimension_numbers<[1], [0], [0], [1], [0, 0, 1, 1], [], []>} : vector<16x32xf32>, vector<32x128xf32>, vector<16x128xf32> -> vector<16x128xf32>
    %290 = vector.extract_strided_slice %283 {offsets = [0, 0], sizes = [1, 128], strides = [1, 1]} : vector<3x128xf32> to vector<1x128xf32>
    %291 = vector.broadcast %290 : vector<1x128xf32> to vector<16x128xf32>
    %292 = arith.addf %289, %291 : vector<16x128xf32>
    %c1_113 = arith.constant 1 : index
    %c1_114 = arith.constant 1 : index
    %c0_115 = arith.constant 0 : index
    %c0_116 = arith.constant 0 : index
    %293 = vector.load %arg4[%c1_113, %c1_114, %c0_115, %c0_116] : memref<2x2x32x128xf32, #tpu.memory_space<vmem>>, vector<1x1x32x128xf32>
    %294 = vector.shape_cast %293 : vector<1x1x32x128xf32> to vector<32x128xf32>
    %cst_117 = arith.constant dense<0.000000e+00> : vector<16x128xf32>
    %295 = tpu.matmul %279, %294, %cst_117 {dimension_numbers = #tpu.dot_dimension_numbers<[1], [0], [0], [1], [0, 0, 1, 1], [], []>} : vector<16x32xf32>, vector<32x128xf32>, vector<16x128xf32> -> vector<16x128xf32>
    %296 = vector.extract_strided_slice %283 {offsets = [1, 0], sizes = [1, 128], strides = [1, 1]} : vector<3x128xf32> to vector<1x128xf32>
    %297 = vector.broadcast %296 : vector<1x128xf32> to vector<16x128xf32>
    %298 = arith.addf %295, %297 : vector<16x128xf32>
    %299 = vector.extract_strided_slice %281 {offsets = [0, 0], sizes = [1, 32], strides = [1, 1]} : vector<9x32xf32> to vector<1x32xf32>
    %300 = vector.extract_strided_slice %292 {offsets = [0, 0], sizes = [16, 32], strides = [1, 1]} : vector<16x128xf32> to vector<16x32xf32>
    %cst_118 = arith.constant dense<0.000000e+00> : vector<16x16xf32>
    %301 = tpu.matmul %300, %286, %cst_118 {dimension_numbers = #tpu.dot_dimension_numbers<[1], [1], [0], [0], [0, 0, 1, 0], [], []>} : vector<16x32xf32>, vector<16x32xf32>, vector<16x16xf32> -> vector<16x16xf32>
    %302 = vector.extract_strided_slice %292 {offsets = [0, 32], sizes = [16, 32], strides = [1, 1]} : vector<16x128xf32> to vector<16x32xf32>
    %cst_119 = arith.constant dense<0.000000e+00> : vector<16x16xf32>
    %303 = tpu.matmul %302, %286, %cst_119 {dimension_numbers = #tpu.dot_dimension_numbers<[1], [1], [0], [0], [0, 0, 1, 0], [], []>} : vector<16x32xf32>, vector<16x32xf32>, vector<16x16xf32> -> vector<16x16xf32>
    %304 = vector.extract_strided_slice %292 {offsets = [0, 64], sizes = [16, 32], strides = [1, 1]} : vector<16x128xf32> to vector<16x32xf32>
    %cst_120 = arith.constant dense<0.000000e+00> : vector<16x16xf32>
    %305 = tpu.matmul %304, %286, %cst_120 {dimension_numbers = #tpu.dot_dimension_numbers<[1], [1], [0], [0], [0, 0, 1, 0], [], []>} : vector<16x32xf32>, vector<16x32xf32>, vector<16x16xf32> -> vector<16x16xf32>
    %306 = vector.extract_strided_slice %292 {offsets = [0, 96], sizes = [16, 32], strides = [1, 1]} : vector<16x128xf32> to vector<16x32xf32>
    %cst_121 = arith.constant dense<0.000000e+00> : vector<16x16xf32>
    %307 = tpu.matmul %306, %286, %cst_121 {dimension_numbers = #tpu.dot_dimension_numbers<[1], [1], [0], [0], [0, 0, 1, 0], [], []>} : vector<16x32xf32>, vector<16x32xf32>, vector<16x16xf32> -> vector<16x16xf32>
    %308 = tpu.concatenate %301, %303, %305, %307 in 0 : vector<16x16xf32>, vector<16x16xf32>, vector<16x16xf32>, vector<16x16xf32> -> vector<64x16xf32>
    %309 = arith.addf %308, %42 : vector<64x16xf32>
    %cst_122 = arith.constant dense<0xFF800000> : vector<64xf32>
    %310 = vector.multi_reduction <maximumf>, %309, %cst_122 [1] : vector<64x16xf32> to vector<64xf32>
    %311 = vector.shape_cast %310 : vector<64xf32> to vector<64x1xf32>
    %312 = vector.broadcast %311 : vector<64x1xf32> to vector<64x16xf32>
    %313 = arith.subf %309, %312 : vector<64x16xf32>
    %314 = math.exp %313 : vector<64x16xf32>
    %cst_123 = arith.constant dense<0.000000e+00> : vector<64xf32>
    %315 = vector.multi_reduction <add>, %314, %cst_123 [1] : vector<64x16xf32> to vector<64xf32>
    %316 = vector.shape_cast %315 : vector<64xf32> to vector<64x1xf32>
    %317 = tpu.reciprocal %316 {approx = true} : vector<64x1xf32> -> vector<64x1xf32>
    %318 = vector.broadcast %317 : vector<64x1xf32> to vector<64x16xf32>
    %319 = arith.mulf %314, %318 : vector<64x16xf32>
    %320 = vector.extract_strided_slice %319 {offsets = [0, 0], sizes = [16, 16], strides = [1, 1]} : vector<64x16xf32> to vector<16x16xf32>
    %321 = vector.extract_strided_slice %298 {offsets = [0, 0], sizes = [16, 32], strides = [1, 1]} : vector<16x128xf32> to vector<16x32xf32>
    %cst_124 = arith.constant dense<0.000000e+00> : vector<16x32xf32>
    %322 = tpu.matmul %320, %321, %cst_124 {dimension_numbers = #tpu.dot_dimension_numbers<[1], [0], [0], [1], [0, 0, 1, 1], [], []>} : vector<16x16xf32>, vector<16x32xf32>, vector<16x32xf32> -> vector<16x32xf32>
    %323 = vector.extract_strided_slice %319 {offsets = [16, 0], sizes = [16, 16], strides = [1, 1]} : vector<64x16xf32> to vector<16x16xf32>
    %324 = vector.extract_strided_slice %298 {offsets = [0, 32], sizes = [16, 32], strides = [1, 1]} : vector<16x128xf32> to vector<16x32xf32>
    %cst_125 = arith.constant dense<0.000000e+00> : vector<16x32xf32>
    %325 = tpu.matmul %323, %324, %cst_125 {dimension_numbers = #tpu.dot_dimension_numbers<[1], [0], [0], [1], [0, 0, 1, 1], [], []>} : vector<16x16xf32>, vector<16x32xf32>, vector<16x32xf32> -> vector<16x32xf32>
    %326 = arith.addf %322, %325 : vector<16x32xf32>
    %327 = vector.extract_strided_slice %319 {offsets = [32, 0], sizes = [16, 16], strides = [1, 1]} : vector<64x16xf32> to vector<16x16xf32>
    %328 = vector.extract_strided_slice %298 {offsets = [0, 64], sizes = [16, 32], strides = [1, 1]} : vector<16x128xf32> to vector<16x32xf32>
    %cst_126 = arith.constant dense<0.000000e+00> : vector<16x32xf32>
    %329 = tpu.matmul %327, %328, %cst_126 {dimension_numbers = #tpu.dot_dimension_numbers<[1], [0], [0], [1], [0, 0, 1, 1], [], []>} : vector<16x16xf32>, vector<16x32xf32>, vector<16x32xf32> -> vector<16x32xf32>
    %330 = arith.addf %326, %329 : vector<16x32xf32>
    %331 = vector.extract_strided_slice %319 {offsets = [48, 0], sizes = [16, 16], strides = [1, 1]} : vector<64x16xf32> to vector<16x16xf32>
    %332 = vector.extract_strided_slice %298 {offsets = [0, 96], sizes = [16, 32], strides = [1, 1]} : vector<16x128xf32> to vector<16x32xf32>
    %cst_127 = arith.constant dense<0.000000e+00> : vector<16x32xf32>
    %333 = tpu.matmul %331, %332, %cst_127 {dimension_numbers = #tpu.dot_dimension_numbers<[1], [0], [0], [1], [0, 0, 1, 1], [], []>} : vector<16x16xf32>, vector<16x32xf32>, vector<16x32xf32> -> vector<16x32xf32>
    %334 = arith.addf %330, %333 : vector<16x32xf32>
    %335 = vector.broadcast %299 : vector<1x32xf32> to vector<16x32xf32>
    %336 = arith.addf %334, %335 : vector<16x32xf32>
    %337 = arith.addf %279, %336 : vector<16x32xf32>
    %338 = vector.extract_strided_slice %281 {offsets = [3, 0], sizes = [1, 32], strides = [1, 1]} : vector<9x32xf32> to vector<1x32xf32>
    %339 = vector.extract_strided_slice %281 {offsets = [4, 0], sizes = [1, 32], strides = [1, 1]} : vector<9x32xf32> to vector<1x32xf32>
    %340 = arith.mulf %337, %337 : vector<16x32xf32>
    %341 = tpu.concatenate %337, %340 in 0 : vector<16x32xf32>, vector<16x32xf32> -> vector<32x32xf32>
    %cst_128 = arith.constant dense<0.000000e+00> : vector<32xf32>
    %342 = vector.multi_reduction <add>, %341, %cst_128 [1] : vector<32x32xf32> to vector<32xf32>
    %343 = vector.shape_cast %342 : vector<32xf32> to vector<32x1xf32>
    %344 = vector.extract_strided_slice %343 {offsets = [0, 0], sizes = [16, 1], strides = [1, 1]} : vector<32x1xf32> to vector<16x1xf32>
    %cst_129 = arith.constant 3.125000e-02 : f32
    %345 = vector.broadcast %cst_129 : f32 to vector<16x1xf32>
    %346 = arith.mulf %344, %345 : vector<16x1xf32>
    %347 = vector.extract_strided_slice %343 {offsets = [16, 0], sizes = [16, 1], strides = [1, 1]} : vector<32x1xf32> to vector<16x1xf32>
    %cst_130 = arith.constant 3.125000e-02 : f32
    %348 = vector.broadcast %cst_130 : f32 to vector<16x1xf32>
    %349 = arith.mulf %347, %348 : vector<16x1xf32>
    %350 = arith.mulf %346, %346 : vector<16x1xf32>
    %351 = arith.subf %349, %350 : vector<16x1xf32>
    %352 = vector.broadcast %346 : vector<16x1xf32> to vector<16x32xf32>
    %353 = arith.subf %337, %352 : vector<16x32xf32>
    %cst_131 = arith.constant 9.99999974E-6 : f32
    %354 = vector.broadcast %cst_131 : f32 to vector<16x1xf32>
    %355 = arith.addf %351, %354 : vector<16x1xf32>
    %356 = math.rsqrt %355 : vector<16x1xf32>
    %357 = vector.broadcast %356 : vector<16x1xf32> to vector<16x32xf32>
    %358 = arith.mulf %353, %357 : vector<16x32xf32>
    %359 = vector.broadcast %338 : vector<1x32xf32> to vector<16x32xf32>
    %360 = arith.mulf %358, %359 : vector<16x32xf32>
    %361 = vector.broadcast %339 : vector<1x32xf32> to vector<16x32xf32>
    %362 = arith.addf %360, %361 : vector<16x32xf32>
    %363 = arith.addf %362, %2 : vector<16x32xf32>
    %c1_132 = arith.constant 1 : index
    %c0_133 = arith.constant 0 : index
    %c0_134 = arith.constant 0 : index
    %364 = vector.load %arg5[%c1_132, %c0_133, %c0_134] : memref<2x32x128xf32, #tpu.memory_space<vmem>>, vector<1x32x128xf32>
    %365 = vector.shape_cast %364 : vector<1x32x128xf32> to vector<32x128xf32>
    %cst_135 = arith.constant dense<0.000000e+00> : vector<16x128xf32>
    %366 = tpu.matmul %363, %365, %cst_135 {dimension_numbers = #tpu.dot_dimension_numbers<[1], [0], [0], [1], [0, 0, 1, 1], [], []>} : vector<16x32xf32>, vector<32x128xf32>, vector<16x128xf32> -> vector<16x128xf32>
    %367 = vector.extract_strided_slice %283 {offsets = [2, 0], sizes = [1, 128], strides = [1, 1]} : vector<3x128xf32> to vector<1x128xf32>
    %368 = vector.broadcast %367 : vector<1x128xf32> to vector<16x128xf32>
    %369 = arith.addf %366, %368 : vector<16x128xf32>
    %370 = vector.extract_strided_slice %85 {offsets = [0, 128], sizes = [32, 128], strides = [1, 1]} : vector<32x256xf32> to vector<32x128xf32>
    %371 = vector.extract_strided_slice %281 {offsets = [1, 0], sizes = [1, 32], strides = [1, 1]} : vector<9x32xf32> to vector<1x32xf32>
    %372 = vector.extract_strided_slice %369 {offsets = [0, 0], sizes = [16, 32], strides = [1, 1]} : vector<16x128xf32> to vector<16x32xf32>
    %cst_136 = arith.constant dense<0.000000e+00> : vector<16x32xf32>
    %373 = tpu.matmul %372, %4, %cst_136 {dimension_numbers = #tpu.dot_dimension_numbers<[1], [1], [0], [0], [0, 0, 1, 0], [], []>} : vector<16x32xf32>, vector<32x32xf32>, vector<16x32xf32> -> vector<16x32xf32>
    %374 = vector.extract_strided_slice %369 {offsets = [0, 32], sizes = [16, 32], strides = [1, 1]} : vector<16x128xf32> to vector<16x32xf32>
    %cst_137 = arith.constant dense<0.000000e+00> : vector<16x32xf32>
    %375 = tpu.matmul %374, %4, %cst_137 {dimension_numbers = #tpu.dot_dimension_numbers<[1], [1], [0], [0], [0, 0, 1, 0], [], []>} : vector<16x32xf32>, vector<32x32xf32>, vector<16x32xf32> -> vector<16x32xf32>
    %376 = vector.extract_strided_slice %369 {offsets = [0, 64], sizes = [16, 32], strides = [1, 1]} : vector<16x128xf32> to vector<16x32xf32>
    %cst_138 = arith.constant dense<0.000000e+00> : vector<16x32xf32>
    %377 = tpu.matmul %376, %4, %cst_138 {dimension_numbers = #tpu.dot_dimension_numbers<[1], [1], [0], [0], [0, 0, 1, 0], [], []>} : vector<16x32xf32>, vector<32x32xf32>, vector<16x32xf32> -> vector<16x32xf32>
    %378 = vector.extract_strided_slice %369 {offsets = [0, 96], sizes = [16, 32], strides = [1, 1]} : vector<16x128xf32> to vector<16x32xf32>
    %cst_139 = arith.constant dense<0.000000e+00> : vector<16x32xf32>
    %379 = tpu.matmul %378, %4, %cst_139 {dimension_numbers = #tpu.dot_dimension_numbers<[1], [1], [0], [0], [0, 0, 1, 0], [], []>} : vector<16x32xf32>, vector<32x32xf32>, vector<16x32xf32> -> vector<16x32xf32>
    %380 = tpu.concatenate %373, %375, %377, %379 in 0 : vector<16x32xf32>, vector<16x32xf32>, vector<16x32xf32>, vector<16x32xf32> -> vector<64x32xf32>
    %381 = arith.addf %380, %80 : vector<64x32xf32>
    %cst_140 = arith.constant dense<0xFF800000> : vector<64xf32>
    %382 = vector.multi_reduction <maximumf>, %381, %cst_140 [1] : vector<64x32xf32> to vector<64xf32>
    %383 = vector.shape_cast %382 : vector<64xf32> to vector<64x1xf32>
    %384 = vector.broadcast %383 : vector<64x1xf32> to vector<64x32xf32>
    %385 = arith.subf %381, %384 : vector<64x32xf32>
    %386 = math.exp %385 : vector<64x32xf32>
    %cst_141 = arith.constant dense<0.000000e+00> : vector<64xf32>
    %387 = vector.multi_reduction <add>, %386, %cst_141 [1] : vector<64x32xf32> to vector<64xf32>
    %388 = vector.shape_cast %387 : vector<64xf32> to vector<64x1xf32>
    %389 = tpu.reciprocal %388 {approx = true} : vector<64x1xf32> -> vector<64x1xf32>
    %390 = vector.broadcast %389 : vector<64x1xf32> to vector<64x32xf32>
    %391 = arith.mulf %386, %390 : vector<64x32xf32>
    %392 = vector.extract_strided_slice %391 {offsets = [0, 0], sizes = [16, 32], strides = [1, 1]} : vector<64x32xf32> to vector<16x32xf32>
    %393 = vector.extract_strided_slice %370 {offsets = [0, 0], sizes = [32, 32], strides = [1, 1]} : vector<32x128xf32> to vector<32x32xf32>
    %cst_142 = arith.constant dense<0.000000e+00> : vector<16x32xf32>
    %394 = tpu.matmul %392, %393, %cst_142 {dimension_numbers = #tpu.dot_dimension_numbers<[1], [0], [0], [1], [0, 0, 1, 1], [], []>} : vector<16x32xf32>, vector<32x32xf32>, vector<16x32xf32> -> vector<16x32xf32>
    %395 = vector.extract_strided_slice %391 {offsets = [16, 0], sizes = [16, 32], strides = [1, 1]} : vector<64x32xf32> to vector<16x32xf32>
    %396 = vector.extract_strided_slice %370 {offsets = [0, 32], sizes = [32, 32], strides = [1, 1]} : vector<32x128xf32> to vector<32x32xf32>
    %cst_143 = arith.constant dense<0.000000e+00> : vector<16x32xf32>
    %397 = tpu.matmul %395, %396, %cst_143 {dimension_numbers = #tpu.dot_dimension_numbers<[1], [0], [0], [1], [0, 0, 1, 1], [], []>} : vector<16x32xf32>, vector<32x32xf32>, vector<16x32xf32> -> vector<16x32xf32>
    %398 = arith.addf %394, %397 : vector<16x32xf32>
    %399 = vector.extract_strided_slice %391 {offsets = [32, 0], sizes = [16, 32], strides = [1, 1]} : vector<64x32xf32> to vector<16x32xf32>
    %400 = vector.extract_strided_slice %370 {offsets = [0, 64], sizes = [32, 32], strides = [1, 1]} : vector<32x128xf32> to vector<32x32xf32>
    %cst_144 = arith.constant dense<0.000000e+00> : vector<16x32xf32>
    %401 = tpu.matmul %399, %400, %cst_144 {dimension_numbers = #tpu.dot_dimension_numbers<[1], [0], [0], [1], [0, 0, 1, 1], [], []>} : vector<16x32xf32>, vector<32x32xf32>, vector<16x32xf32> -> vector<16x32xf32>
    %402 = arith.addf %398, %401 : vector<16x32xf32>
    %403 = vector.extract_strided_slice %391 {offsets = [48, 0], sizes = [16, 32], strides = [1, 1]} : vector<64x32xf32> to vector<16x32xf32>
    %404 = vector.extract_strided_slice %370 {offsets = [0, 96], sizes = [32, 32], strides = [1, 1]} : vector<32x128xf32> to vector<32x32xf32>
    %cst_145 = arith.constant dense<0.000000e+00> : vector<16x32xf32>
    %405 = tpu.matmul %403, %404, %cst_145 {dimension_numbers = #tpu.dot_dimension_numbers<[1], [0], [0], [1], [0, 0, 1, 1], [], []>} : vector<16x32xf32>, vector<32x32xf32>, vector<16x32xf32> -> vector<16x32xf32>
    %406 = arith.addf %402, %405 : vector<16x32xf32>
    %407 = vector.broadcast %371 : vector<1x32xf32> to vector<16x32xf32>
    %408 = arith.addf %406, %407 : vector<16x32xf32>
    %409 = arith.addf %362, %408 : vector<16x32xf32>
    %410 = vector.extract_strided_slice %281 {offsets = [5, 0], sizes = [1, 32], strides = [1, 1]} : vector<9x32xf32> to vector<1x32xf32>
    %411 = vector.extract_strided_slice %281 {offsets = [6, 0], sizes = [1, 32], strides = [1, 1]} : vector<9x32xf32> to vector<1x32xf32>
    %412 = arith.mulf %409, %409 : vector<16x32xf32>
    %413 = tpu.concatenate %409, %412 in 0 : vector<16x32xf32>, vector<16x32xf32> -> vector<32x32xf32>
    %cst_146 = arith.constant dense<0.000000e+00> : vector<32xf32>
    %414 = vector.multi_reduction <add>, %413, %cst_146 [1] : vector<32x32xf32> to vector<32xf32>
    %415 = vector.shape_cast %414 : vector<32xf32> to vector<32x1xf32>
    %416 = vector.extract_strided_slice %415 {offsets = [0, 0], sizes = [16, 1], strides = [1, 1]} : vector<32x1xf32> to vector<16x1xf32>
    %cst_147 = arith.constant 3.125000e-02 : f32
    %417 = vector.broadcast %cst_147 : f32 to vector<16x1xf32>
    %418 = arith.mulf %416, %417 : vector<16x1xf32>
    %419 = vector.extract_strided_slice %415 {offsets = [16, 0], sizes = [16, 1], strides = [1, 1]} : vector<32x1xf32> to vector<16x1xf32>
    %cst_148 = arith.constant 3.125000e-02 : f32
    %420 = vector.broadcast %cst_148 : f32 to vector<16x1xf32>
    %421 = arith.mulf %419, %420 : vector<16x1xf32>
    %422 = arith.mulf %418, %418 : vector<16x1xf32>
    %423 = arith.subf %421, %422 : vector<16x1xf32>
    %424 = vector.broadcast %418 : vector<16x1xf32> to vector<16x32xf32>
    %425 = arith.subf %409, %424 : vector<16x32xf32>
    %cst_149 = arith.constant 9.99999974E-6 : f32
    %426 = vector.broadcast %cst_149 : f32 to vector<16x1xf32>
    %427 = arith.addf %423, %426 : vector<16x1xf32>
    %428 = math.rsqrt %427 : vector<16x1xf32>
    %429 = vector.broadcast %428 : vector<16x1xf32> to vector<16x32xf32>
    %430 = arith.mulf %425, %429 : vector<16x32xf32>
    %431 = vector.broadcast %410 : vector<1x32xf32> to vector<16x32xf32>
    %432 = arith.mulf %430, %431 : vector<16x32xf32>
    %433 = vector.broadcast %411 : vector<1x32xf32> to vector<16x32xf32>
    %434 = arith.addf %432, %433 : vector<16x32xf32>
    %c1_150 = arith.constant 1 : index
    %c0_151 = arith.constant 0 : index
    %c0_152 = arith.constant 0 : index
    %435 = vector.load %arg8[%c1_150, %c0_151, %c0_152] : memref<2x32x64xf32, #tpu.memory_space<vmem>>, vector<1x32x64xf32>
    %436 = vector.shape_cast %435 : vector<1x32x64xf32> to vector<32x64xf32>
    %cst_153 = arith.constant dense<0.000000e+00> : vector<16x64xf32>
    %437 = tpu.matmul %434, %436, %cst_153 {dimension_numbers = #tpu.dot_dimension_numbers<[1], [0], [0], [1], [0, 0, 1, 1], [], []>} : vector<16x32xf32>, vector<32x64xf32>, vector<16x64xf32> -> vector<16x64xf32>
    %438 = vector.broadcast %285 : vector<1x64xf32> to vector<16x64xf32>
    %439 = arith.addf %437, %438 : vector<16x64xf32>
    %cst_154 = arith.constant 0.000000e+00 : f32
    %440 = vector.broadcast %cst_154 : f32 to vector<16x64xf32>
    %441 = arith.maximumf %439, %440 : vector<16x64xf32>
    %c1_155 = arith.constant 1 : index
    %c0_156 = arith.constant 0 : index
    %c0_157 = arith.constant 0 : index
    %442 = vector.load %arg9[%c1_155, %c0_156, %c0_157] : memref<2x64x32xf32, #tpu.memory_space<vmem>>, vector<1x64x32xf32>
    %443 = vector.shape_cast %442 : vector<1x64x32xf32> to vector<64x32xf32>
    %cst_158 = arith.constant dense<0.000000e+00> : vector<16x32xf32>
    %444 = tpu.matmul %441, %443, %cst_158 {dimension_numbers = #tpu.dot_dimension_numbers<[1], [0], [0], [1], [0, 0, 1, 1], [], []>} : vector<16x64xf32>, vector<64x32xf32>, vector<16x32xf32> -> vector<16x32xf32>
    %445 = vector.extract_strided_slice %281 {offsets = [2, 0], sizes = [1, 32], strides = [1, 1]} : vector<9x32xf32> to vector<1x32xf32>
    %446 = vector.broadcast %445 : vector<1x32xf32> to vector<16x32xf32>
    %447 = arith.addf %444, %446 : vector<16x32xf32>
    %448 = arith.addf %434, %447 : vector<16x32xf32>
    %449 = vector.extract_strided_slice %281 {offsets = [7, 0], sizes = [1, 32], strides = [1, 1]} : vector<9x32xf32> to vector<1x32xf32>
    %450 = vector.extract_strided_slice %281 {offsets = [8, 0], sizes = [1, 32], strides = [1, 1]} : vector<9x32xf32> to vector<1x32xf32>
    %451 = arith.mulf %448, %448 : vector<16x32xf32>
    %452 = tpu.concatenate %448, %451 in 0 : vector<16x32xf32>, vector<16x32xf32> -> vector<32x32xf32>
    %cst_159 = arith.constant dense<0.000000e+00> : vector<32xf32>
    %453 = vector.multi_reduction <add>, %452, %cst_159 [1] : vector<32x32xf32> to vector<32xf32>
    %454 = vector.shape_cast %453 : vector<32xf32> to vector<32x1xf32>
    %455 = vector.extract_strided_slice %454 {offsets = [0, 0], sizes = [16, 1], strides = [1, 1]} : vector<32x1xf32> to vector<16x1xf32>
    %cst_160 = arith.constant 3.125000e-02 : f32
    %456 = vector.broadcast %cst_160 : f32 to vector<16x1xf32>
    %457 = arith.mulf %455, %456 : vector<16x1xf32>
    %458 = vector.extract_strided_slice %454 {offsets = [16, 0], sizes = [16, 1], strides = [1, 1]} : vector<32x1xf32> to vector<16x1xf32>
    %cst_161 = arith.constant 3.125000e-02 : f32
    %459 = vector.broadcast %cst_161 : f32 to vector<16x1xf32>
    %460 = arith.mulf %458, %459 : vector<16x1xf32>
    %461 = arith.mulf %457, %457 : vector<16x1xf32>
    %462 = arith.subf %460, %461 : vector<16x1xf32>
    %463 = vector.broadcast %457 : vector<16x1xf32> to vector<16x32xf32>
    %464 = arith.subf %448, %463 : vector<16x32xf32>
    %cst_162 = arith.constant 9.99999974E-6 : f32
    %465 = vector.broadcast %cst_162 : f32 to vector<16x1xf32>
    %466 = arith.addf %462, %465 : vector<16x1xf32>
    %467 = math.rsqrt %466 : vector<16x1xf32>
    %468 = vector.broadcast %467 : vector<16x1xf32> to vector<16x32xf32>
    %469 = arith.mulf %464, %468 : vector<16x32xf32>
    %470 = vector.broadcast %449 : vector<1x32xf32> to vector<16x32xf32>
    %471 = arith.mulf %469, %470 : vector<16x32xf32>
    %472 = vector.broadcast %450 : vector<1x32xf32> to vector<16x32xf32>
    %473 = arith.addf %471, %472 : vector<16x32xf32>
    %c0_163 = arith.constant 0 : index
    %c0_164 = arith.constant 0 : index
    %474 = vector.load %arg13[%c0_163, %c0_164] : memref<2x32xf32, #tpu.memory_space<vmem>>, vector<1x32xf32>
    %c1_165 = arith.constant 1 : index
    %c0_166 = arith.constant 0 : index
    %475 = vector.load %arg13[%c1_165, %c0_166] : memref<2x32xf32, #tpu.memory_space<vmem>>, vector<1x32xf32>
    %476 = arith.mulf %473, %473 : vector<16x32xf32>
    %477 = tpu.concatenate %473, %476 in 0 : vector<16x32xf32>, vector<16x32xf32> -> vector<32x32xf32>
    %cst_167 = arith.constant dense<0.000000e+00> : vector<32xf32>
    %478 = vector.multi_reduction <add>, %477, %cst_167 [1] : vector<32x32xf32> to vector<32xf32>
    %479 = vector.shape_cast %478 : vector<32xf32> to vector<32x1xf32>
    %480 = vector.extract_strided_slice %479 {offsets = [0, 0], sizes = [16, 1], strides = [1, 1]} : vector<32x1xf32> to vector<16x1xf32>
    %cst_168 = arith.constant 3.125000e-02 : f32
    %481 = vector.broadcast %cst_168 : f32 to vector<16x1xf32>
    %482 = arith.mulf %480, %481 : vector<16x1xf32>
    %483 = vector.extract_strided_slice %479 {offsets = [16, 0], sizes = [16, 1], strides = [1, 1]} : vector<32x1xf32> to vector<16x1xf32>
    %cst_169 = arith.constant 3.125000e-02 : f32
    %484 = vector.broadcast %cst_169 : f32 to vector<16x1xf32>
    %485 = arith.mulf %483, %484 : vector<16x1xf32>
    %486 = arith.mulf %482, %482 : vector<16x1xf32>
    %487 = arith.subf %485, %486 : vector<16x1xf32>
    %488 = vector.broadcast %482 : vector<16x1xf32> to vector<16x32xf32>
    %489 = arith.subf %473, %488 : vector<16x32xf32>
    %cst_170 = arith.constant 9.99999974E-6 : f32
    %490 = vector.broadcast %cst_170 : f32 to vector<16x1xf32>
    %491 = arith.addf %487, %490 : vector<16x1xf32>
    %492 = math.rsqrt %491 : vector<16x1xf32>
    %493 = vector.broadcast %492 : vector<16x1xf32> to vector<16x32xf32>
    %494 = arith.mulf %489, %493 : vector<16x32xf32>
    %495 = vector.broadcast %474 : vector<1x32xf32> to vector<16x32xf32>
    %496 = arith.mulf %494, %495 : vector<16x32xf32>
    %497 = vector.broadcast %475 : vector<1x32xf32> to vector<16x32xf32>
    %498 = arith.addf %496, %497 : vector<16x32xf32>
    %c0_171 = arith.constant 0 : index
    %c0_172 = arith.constant 0 : index
    %499 = vector.load %arg14[%c0_171, %c0_172] : memref<16x32xf32, #tpu.memory_space<vmem>>, vector<16x32xf32>
    tpu.vector_store %arg14[%c0_171, %c0_172], %498 {strides = array<i32>} : memref<16x32xf32, #tpu.memory_space<vmem>>, vector<16x32xf32>,
    return
  }
}

</mosaic_0001>

<llo_original>
// kernel: transformer_decoder_forward.1
$region0: #{transformer_decoder_forward.1}
  #allocation0 [shape = 'u32[]', space=smem, size = 0x4, offset = 0x4, fixed_abs, tag = 'smem constant byte address 0x4 - core index']
  #allocation1 [shape = 'u32[144,128]{1,0:T(1,128)}', space=vmem, size = 0x12000, scoped, tag = 'internal scratch']
  %s0 = inlined_call_operand.hbm [shape: f32[16,32], index: 0, kind: input, shape index: {}]
  %s1 = inlined_call_operand.hbm [shape: f32[32,32], index: 1, kind: input, shape index: {}]
  %s2 = inlined_call_operand.hbm [shape: f32[16,32], index: 2, kind: input, shape index: {}]
  %s3 = inlined_call_operand.hbm [shape: f32[32,32], index: 3, kind: input, shape index: {}]
  %s4 = inlined_call_operand.vmem [shape: f32[2,2,32,128], index: 4, kind: input, shape index: {}]
  %s5 = inlined_call_operand.vmem [shape: f32[2,32,128], index: 5, kind: input, shape index: {}]
  %s6 = inlined_call_operand.vmem [shape: f32[32,256], index: 6, kind: input, shape index: {}]
  %s7 = inlined_call_operand.hbm [shape: f32[1,256], index: 7, kind: input, shape index: {}]
  %s8 = inlined_call_operand.hbm [shape: f32[2,32,64], index: 8, kind: input, shape index: {}]
  %s9 = inlined_call_operand.vmem [shape: f32[2,64,32], index: 9, kind: input, shape index: {}]
  %s10 = inlined_call_operand.vmem [shape: f32[2,3,128], index: 10, kind: input, shape index: {}]
  %s11 = inlined_call_operand.vmem [shape: f32[2,9,32], index: 11, kind: input, shape index: {}]
  %s12 = inlined_call_operand.hbm [shape: f32[2,1,64], index: 12, kind: input, shape index: {}]
  %s13 = inlined_call_operand.hbm [shape: f32[2,32], index: 13, kind: input, shape index: {}]
  %s14 = inlined_call_operand.hbm [shape: f32[16,32], index: 14, kind: output, shape index: {}]
  %s15 = sld [smem:[#allocation0]]
  $region98: #{transformer_decoder_forward.1} parent=0
    _
  %s17 = ssub.s32 1, %s15
  %s18 = scalar_select 0, %s17, %s15
  $region1: #{transformer_decoder_forward.1} parent=0
    #allocation2 [shape = 'u8[8192]{0}', space=vmem, size = 0x2000, scoped, tag = 'input window, operand 0, single buffered']
    #allocation3 [shape = 's32[1]{0}', space=sflag, size = 0x4, scoped, tag = 'scoped memory for transformer_decoder_forward.1']
    #allocation4 [shape = 's32[1]{0}', space=sflag, size = 0x4, scoped, tag = 'scoped memory for transformer_decoder_forward.1']
    #allocation5 [shape = 'u8[16384]{0}', space=vmem, size = 0x4000, scoped, tag = 'input window, operand 1, single buffered']
    #allocation6 [shape = 's32[1]{0}', space=sflag, size = 0x4, scoped, tag = 'scoped memory for transformer_decoder_forward.1']
    #allocation7 [shape = 'u8[8192]{0}', space=vmem, size = 0x2000, scoped, tag = 'input window, operand 2, single buffered']
    #allocation8 [shape = 'u8[16384]{0}', space=vmem, size = 0x4000, scoped, tag = 'input window, operand 3, single buffered']
    #allocation9 [shape = 's32[1]{0}', space=sflag, size = 0x4, scoped, tag = 'scoped memory for transformer_decoder_forward.1']
    #allocation10 [shape = 'u8[1024]{0}', space=vmem, size = 0x400, scoped, tag = 'input window, operand 7, single buffered']
    #allocation11 [shape = 'u8[32768]{0}', space=vmem, size = 0x8000, scoped, tag = 'input window, operand 8, single buffered']
    #allocation12 [shape = 's32[1]{0}', space=sflag, size = 0x4, scoped, tag = 'scoped memory for transformer_decoder_forward.1']
    #allocation13 [shape = 'u8[1024]{0}', space=vmem, size = 0x400, scoped, tag = 'input window, operand 12, single buffered']
    #allocation14 [shape = 'u8[1024]{0}', space=vmem, size = 0x400, scoped, tag = 'input window, operand 13, single buffered']
    #allocation15 [shape = 's32[1]{0}', space=sflag, size = 0x4, scoped, tag = 'scoped memory for transformer_decoder_forward.1']
    #allocation16 [shape = 'u8[8192]{0}', space=vmem, size = 0x2000, scoped, tag = 'output window, operand 0, single buffered']
    %19 = vsyncpa [#allocation3], 0
    %20 = vsyncpa [#allocation6], 0
    %21 = vsyncpa [#allocation9], 0
    %22 = vsyncpa [#allocation12], 0
    %23 = vsyncpa [#allocation15], 0
    %24 = vsyncpa [#allocation4], 0
    // Predicated region
    $region2: #{transformer_decoder_forward.1} parent=1 // pred_check
      _
    $region3: #{transformer_decoder_forward.1} parent=1 // pred_check_branch
      %26 = sbr.rel (0) target = $region5
    $region4: #{transformer_decoder_forward.1} parent=1 // pred_region
      %s28 = ssub.s32 256, 256
      %29 = vsyncadd [#allocation3], %s28
      %s30 = sshll.u32 [#allocation2], 4
      %s31 = int_to_ptr.vmem [resolvable:$true] %s30
      %36 = dma.hbm_to_vmem [thread:$0]  %s0, 256, %s31, [#allocation3], 128, 128, 8
    $region5: #{transformer_decoder_forward.1} parent=1 // pred_fallthru
      _
    // Predicated region
    $region6: #{transformer_decoder_forward.1} parent=1 // pred_check
      _
    $region7: #{transformer_decoder_forward.1} parent=1 // pred_check_branch
      %38 = sbr.rel (0) target = $region9
    $region8: #{transformer_decoder_forward.1} parent=1 // pred_region
      %s40 = ssub.s32 512, 512
      %41 = vsyncadd [#allocation6], %s40
      %s42 = sshll.u32 [#allocation5], 4
      %s43 = int_to_ptr.vmem [resolvable:$true] %s42
      %48 = dma.hbm_to_vmem [thread:$0]  %s1, 512, %s43, [#allocation6], 128, 128, 8
    $region9: #{transformer_decoder_forward.1} parent=1 // pred_fallthru
      _
    // Predicated region
    $region10: #{transformer_decoder_forward.1} parent=1 // pred_check
      _
    $region11: #{transformer_decoder_forward.1} parent=1 // pred_check_branch
      %50 = sbr.rel (0) target = $region13
    $region12: #{transformer_decoder_forward.1} parent=1 // pred_region
      %s52 = ssub.s32 256, 256
      %53 = vsyncadd [#allocation6], %s52
      %s54 = sshll.u32 [#allocation7], 4
      %s55 = int_to_ptr.vmem [resolvable:$true] %s54
      %60 = dma.hbm_to_vmem [thread:$0]  %s2, 256, %s55, [#allocation6], 128, 128, 8
    $region13: #{transformer_decoder_forward.1} parent=1 // pred_fallthru
      _
    // Predicated region
    $region14: #{transformer_decoder_forward.1} parent=1 // pred_check
      _
    $region15: #{transformer_decoder_forward.1} parent=1 // pred_check_branch
      %62 = sbr.rel (0) target = $region17
    $region16: #{transformer_decoder_forward.1} parent=1 // pred_region
      %s64 = ssub.s32 512, 512
      %65 = vsyncadd [#allocation9], %s64
      %s66 = sshll.u32 [#allocation8], 4
      %s67 = int_to_ptr.vmem [resolvable:$true] %s66
      %72 = dma.hbm_to_vmem [thread:$0]  %s3, 512, %s67, [#allocation9], 128, 128, 8
    $region17: #{transformer_decoder_forward.1} parent=1 // pred_fallthru
      _
    // Predicated region
    $region18: #{transformer_decoder_forward.1} parent=1 // pred_check
      _
    $region19: #{transformer_decoder_forward.1} parent=1 // pred_check_branch
      %74 = sbr.rel (0) target = $region21
    $region20: #{transformer_decoder_forward.1} parent=1 // pred_region
      _
    $region21: #{transformer_decoder_forward.1} parent=1 // pred_fallthru
      _
    // Predicated region
    $region22: #{transformer_decoder_forward.1} parent=1 // pred_check
      _
    $region23: #{transformer_decoder_forward.1} parent=1 // pred_check_branch
      %76 = sbr.rel (0) target = $region25
    $region24: #{transformer_decoder_forward.1} parent=1 // pred_region
      _
    $region25: #{transformer_decoder_forward.1} parent=1 // pred_fallthru
      _
    // Predicated region
    $region26: #{transformer_decoder_forward.1} parent=1 // pred_check
      _
    $region27: #{transformer_decoder_forward.1} parent=1 // pred_check_branch
      %78 = sbr.rel (0) target = $region29
    $region28: #{transformer_decoder_forward.1} parent=1 // pred_region
      _
    $region29: #{transformer_decoder_forward.1} parent=1 // pred_fallthru
      _
    // Predicated region
    $region30: #{transformer_decoder_forward.1} parent=1 // pred_check
      _
    $region31: #{transformer_decoder_forward.1} parent=1 // pred_check_branch
      %80 = sbr.rel (0) target = $region33
    $region32: #{transformer_decoder_forward.1} parent=1 // pred_region
      %s82 = ssub.s32 32, 32
      %83 = vsyncadd [#allocation9], %s82
      %s85 = sshll.u32 [#allocation10], 4
      %s86 = int_to_ptr.vmem [resolvable:$true] %s85
      %88 = dma.hbm_to_vmem [thread:$0]  %s7, 32, %s86, [#allocation9]
    $region33: #{transformer_decoder_forward.1} parent=1 // pred_fallthru
      _
    // Predicated region
    $region34: #{transformer_decoder_forward.1} parent=1 // pred_check
      _
    $region35: #{transformer_decoder_forward.1} parent=1 // pred_check_branch
      %90 = sbr.rel (0) target = $region37
    $region36: #{transformer_decoder_forward.1} parent=1 // pred_region
      %s92 = ssub.s32 1024, 1024
      %93 = vsyncadd [#allocation12], %s92
      %s94 = sshll.u32 [#allocation11], 4
      %s95 = int_to_ptr.vmem [resolvable:$true] %s94
      %100 = dma.hbm_to_vmem [thread:$0]  %s8, 1024, %s95, [#allocation12], 128, 128, 8
    $region37: #{transformer_decoder_forward.1} parent=1 // pred_fallthru
      _
    // Predicated region
    $region38: #{transformer_decoder_forward.1} parent=1 // pred_check
      _
    $region39: #{transformer_decoder_forward.1} parent=1 // pred_check_branch
      %102 = sbr.rel (0) target = $region41
    $region40: #{transformer_decoder_forward.1} parent=1 // pred_region
      _
    $region41: #{transformer_decoder_forward.1} parent=1 // pred_fallthru
      _
    // Predicated region
    $region42: #{transformer_decoder_forward.1} parent=1 // pred_check
      _
    $region43: #{transformer_decoder_forward.1} parent=1 // pred_check_branch
      %104 = sbr.rel (0) target = $region45
    $region44: #{transformer_decoder_forward.1} parent=1 // pred_region
      _
    $region45: #{transformer_decoder_forward.1} parent=1 // pred_fallthru
      _
    // Predicated region
    $region46: #{transformer_decoder_forward.1} parent=1 // pred_check
      _
    $region47: #{transformer_decoder_forward.1} parent=1 // pred_check_branch
      %106 = sbr.rel (0) target = $region49
    $region48: #{transformer_decoder_forward.1} parent=1 // pred_region
      _
    $region49: #{transformer_decoder_forward.1} parent=1 // pred_fallthru
      _
    // Predicated region
    $region50: #{transformer_decoder_forward.1} parent=1 // pred_check
      _
    $region51: #{transformer_decoder_forward.1} parent=1 // pred_check_branch
      %108 = sbr.rel (0) target = $region53
    $region52: #{transformer_decoder_forward.1} parent=1 // pred_region
      %s110 = ssub.s32 32, 32
      %111 = vsyncadd [#allocation12], %s110
      %s112 = sshll.u32 [#allocation13], 4
      %s113 = int_to_ptr.vmem [resolvable:$true] %s112
      %118 = dma.hbm_to_vmem [thread:$0]  %s12, 32, %s113, [#allocation12], 16, 16, 1
    $region53: #{transformer_decoder_forward.1} parent=1 // pred_fallthru
      _
    // Predicated region
    $region54: #{transformer_decoder_forward.1} parent=1 // pred_check
      _
    $region55: #{transformer_decoder_forward.1} parent=1 // pred_check_branch
      %120 = sbr.rel (0) target = $region57
    $region56: #{transformer_decoder_forward.1} parent=1 // pred_region
      %s122 = ssub.s32 32, 32
      %123 = vsyncadd [#allocation15], %s122
      %s125 = sshll.u32 [#allocation14], 4
      %s126 = int_to_ptr.vmem [resolvable:$true] %s125
      %128 = dma.hbm_to_vmem [thread:$0]  %s13, 32, %s126, [#allocation15]
    $region57: #{transformer_decoder_forward.1} parent=1 // pred_fallthru
      _
    // Predicated region
    $region58: #{transformer_decoder_forward.1} parent=1 // pred_check
      _
    $region59: #{transformer_decoder_forward.1} parent=1 // pred_check_branch
      %130 = sbr.rel (0) target = $region61
    $region60: #{transformer_decoder_forward.1} parent=1 // pred_region
      %131 = dma.done [#allocation3], 256
    $region61: #{transformer_decoder_forward.1} parent=1 // pred_fallthru
      _
    // Predicated region
    $region62: #{transformer_decoder_forward.1} parent=1 // pred_check
      _
    $region63: #{transformer_decoder_forward.1} parent=1 // pred_check_branch
      %133 = sbr.rel (0) target = $region65
    $region64: #{transformer_decoder_forward.1} parent=1 // pred_region
      %134 = dma.done [#allocation6], 512
    $region65: #{transformer_decoder_forward.1} parent=1 // pred_fallthru
      _
    // Predicated region
    $region66: #{transformer_decoder_forward.1} parent=1 // pred_check
      _
    $region67: #{transformer_decoder_forward.1} parent=1 // pred_check_branch
      %136 = sbr.rel (0) target = $region69
    $region68: #{transformer_decoder_forward.1} parent=1 // pred_region
      %137 = dma.done [#allocation6], 256
    $region69: #{transformer_decoder_forward.1} parent=1 // pred_fallthru
      _
    // Predicated region
    $region70: #{transformer_decoder_forward.1} parent=1 // pred_check
      _
    $region71: #{transformer_decoder_forward.1} parent=1 // pred_check_branch
      %139 = sbr.rel (0) target = $region73
    $region72: #{transformer_decoder_forward.1} parent=1 // pred_region
      %140 = dma.done [#allocation9], 512
    $region73: #{transformer_decoder_forward.1} parent=1 // pred_fallthru
      _
    // Predicated region
    $region74: #{transformer_decoder_forward.1} parent=1 // pred_check
      _
    $region75: #{transformer_decoder_forward.1} parent=1 // pred_check_branch
      %142 = sbr.rel (0) target = $region77
    $region76: #{transformer_decoder_forward.1} parent=1 // pred_region
      %143 = dma.done [#allocation9], 32
    $region77: #{transformer_decoder_forward.1} parent=1 // pred_fallthru
      _
    // Predicated region
    $region78: #{transformer_decoder_forward.1} parent=1 // pred_check
      _
    $region79: #{transformer_decoder_forward.1} parent=1 // pred_check_branch
      %145 = sbr.rel (0) target = $region81
    $region80: #{transformer_decoder_forward.1} parent=1 // pred_region
      %146 = dma.done [#allocation12], 1024
    $region81: #{transformer_decoder_forward.1} parent=1 // pred_fallthru
      _
    // Predicated region
    $region82: #{transformer_decoder_forward.1} parent=1 // pred_check
      _
    $region83: #{transformer_decoder_forward.1} parent=1 // pred_check_branch
      %148 = sbr.rel (0) target = $region85
    $region84: #{transformer_decoder_forward.1} parent=1 // pred_region
      %149 = dma.done [#allocation12], 32
    $region85: #{transformer_decoder_forward.1} parent=1 // pred_fallthru
      _
    // Predicated region
    $region86: #{transformer_decoder_forward.1} parent=1 // pred_check
      _
    $region87: #{transformer_decoder_forward.1} parent=1 // pred_check_branch
      %151 = sbr.rel (0) target = $region89
    $region88: #{transformer_decoder_forward.1} parent=1 // pred_region
      %152 = dma.done [#allocation15], 32
    $region89: #{transformer_decoder_forward.1} parent=1 // pred_fallthru
      _
    %v153 = vld [vmem:[#allocation2] sm:$0xff]
    %v154 = vld [vmem:[#allocation2 + $0x8] sm:$0xff]
    %v155 = vld [vmem:[#allocation5] sm:$0xff]
    %v156 = vld [vmem:[#allocation5 + $0x8] sm:$0xff]
    %v157 = vld [vmem:[#allocation5 + $0x10] sm:$0xff]
    %v158 = vld [vmem:[#allocation5 + $0x18] sm:$0xff]
    %v159 = vld [vmem:[#allocation7] sm:$0xff]
    %v160 = vld [vmem:[#allocation7 + $0x8] sm:$0xff]
    %v161 = vld [vmem:[#allocation8] sm:$0xff]
    %v162 = vld [vmem:[#allocation8 + $0x8] sm:$0xff]
    %v163 = vld [vmem:[#allocation8 + $0x10] sm:$0xff]
    %v164 = vld [vmem:[#allocation8 + $0x18] sm:$0xff]
    %v165 = vadd.f32 %v155, %v161
    %v166 = vadd.f32 %v156, %v162
    %v167 = vadd.f32 %v157, %v163
    %v168 = vadd.f32 %v158, %v164
    %v169 = vlaneseq
    %v170 = vshrl.u32 %v169, 7
    %v171 = vadd.s32 %v170, 8
    %v172 = vadd.s32 %v170, 16
    %v173 = vadd.s32 %v170, 24
    %v174 = vadd.s32 %v170, 32
    %v175 = vadd.s32 %v170, 40
    %v176 = vadd.s32 %v170, 48
    %v177 = vadd.s32 %v170, 56
    %v178 = vlaneseq
    %v179 = vand.u32 %v178, 127
    %vm180 = vcmp.lt.s32.totalorder %v170, 0
    %v181 = vsub.s32 0, %v170
    %v182 = vsel %vm180, %v181, %v170
    %v183 = vshrl.u32 %v182, 1
    %v184 = vand.u32 %v182, 1
    %v185 = vsub.s32 0, %v184
    %v186 = vsel %vm180, %v185, %v184
    %vm187 = vcmp.lt.s32.totalorder %v171, 0
    %v188 = vsub.s32 0, %v171
    %v189 = vsel %vm187, %v188, %v171
    %v190 = vshrl.u32 %v189, 1
    %v191 = vand.u32 %v189, 1
    %v192 = vsub.s32 0, %v191
    %v193 = vsel %vm187, %v192, %v191
    %vm194 = vcmp.lt.s32.totalorder %v172, 0
    %v195 = vsub.s32 0, %v172
    %v196 = vsel %vm194, %v195, %v172
    %v197 = vshrl.u32 %v196, 1
    %v198 = vand.u32 %v196, 1
    %v199 = vsub.s32 0, %v198
    %v200 = vsel %vm194, %v199, %v198
    %vm201 = vcmp.lt.s32.totalorder %v173, 0
    %v202 = vsub.s32 0, %v173
    %v203 = vsel %vm201, %v202, %v173
    %v204 = vshrl.u32 %v203, 1
    %v205 = vand.u32 %v203, 1
    %v206 = vsub.s32 0, %v205
    %v207 = vsel %vm201, %v206, %v205
    %vm208 = vcmp.lt.s32.totalorder %v174, 0
    %v209 = vsub.s32 0, %v174
    %v210 = vsel %vm208, %v209, %v174
    %v211 = vshrl.u32 %v210, 1
    %v212 = vand.u32 %v210, 1
    %v213 = vsub.s32 0, %v212
    %v214 = vsel %vm208, %v213, %v212
    %vm215 = vcmp.lt.s32.totalorder %v175, 0
    %v216 = vsub.s32 0, %v175
    %v217 = vsel %vm215, %v216, %v175
    %v218 = vshrl.u32 %v217, 1
    %v219 = vand.u32 %v217, 1
    %v220 = vsub.s32 0, %v219
    %v221 = vsel %vm215, %v220, %v219
    %vm222 = vcmp.lt.s32.totalorder %v176, 0
    %v223 = vsub.s32 0, %v176
    %v224 = vsel %vm222, %v223, %v176
    %v225 = vshrl.u32 %v224, 1
    %v226 = vand.u32 %v224, 1
    %v227 = vsub.s32 0, %v226
    %v228 = vsel %vm222, %v227, %v226
    %vm229 = vcmp.lt.s32.totalorder %v177, 0
    %v230 = vsub.s32 0, %v177
    %v231 = vsel %vm229, %v230, %v177
    %v232 = vshrl.u32 %v231, 1
    %v233 = vand.u32 %v231, 1
    %v234 = vsub.s32 0, %v233
    %v235 = vsel %vm229, %v234, %v233
    %vm236 = vcmp.ne.s32.totalorder %v186, 0
    %vm237 = vcmp.ne.s32.totalorder %v193, 0
    %vm238 = vcmp.ne.s32.totalorder %v200, 0
    %vm239 = vcmp.ne.s32.totalorder %v207, 0
    %vm240 = vcmp.ne.s32.totalorder %v214, 0
    %vm241 = vcmp.ne.s32.totalorder %v221, 0
    %vm242 = vcmp.ne.s32.totalorder %v228, 0
    %vm243 = vcmp.ne.s32.totalorder %v235, 0
    %vm244 = vcmp.lt.s32.totalorder %v186, 0
    %vm245 = vcmp.lt.s32.totalorder %v193, 0
    %vm246 = vcmp.lt.s32.totalorder %v200, 0
    %vm247 = vcmp.lt.s32.totalorder %v207, 0
    %vm248 = vcmp.lt.s32.totalorder %v214, 0
    %vm249 = vcmp.lt.s32.totalorder %v221, 0
    %vm250 = vcmp.lt.s32.totalorder %v228, 0
    %vm251 = vcmp.lt.s32.totalorder %v235, 0
    %vm252 = vmand %vm244, %vm236
    %vm253 = vmand %vm245, %vm237
    %vm254 = vmand %vm246, %vm238
    %vm255 = vmand %vm247, %vm239
    %vm256 = vmand %vm248, %vm240
    %vm257 = vmand %vm249, %vm241
    %vm258 = vmand %vm250, %vm242
    %vm259 = vmand %vm251, %vm243
    %v260 = vadd.s32 %v186, 2
    %v261 = vadd.s32 %v193, 2
    %v262 = vadd.s32 %v200, 2
    %v263 = vadd.s32 %v207, 2
    %v264 = vadd.s32 %v214, 2
    %v265 = vadd.s32 %v221, 2
    %v266 = vadd.s32 %v228, 2
    %v267 = vadd.s32 %v235, 2
    %v268 = vsel %vm252, %v260, %v186
    %v269 = vsel %vm253, %v261, %v193
    %v270 = vsel %vm254, %v262, %v200
    %v271 = vsel %vm255, %v263, %v207
    %v272 = vsel %vm256, %v264, %v214
    %v273 = vsel %vm257, %v265, %v221
    %v274 = vsel %vm258, %v266, %v228
    %v275 = vsel %vm259, %v267, %v235
    %vm276 = vcmp.lt.s32.totalorder %v179, 0
    %v277 = vsub.s32 0, %v179
    %v278 = vsel %vm276, %v277, %v179
    %v279 = vshrl.u32 %v278, 1
    %v280 = vand.u32 %v278, 1
    %v281 = vsub.s32 0, %v280
    %v282 = vsel %vm276, %v281, %v280
    %vm283 = vcmp.ne.s32.totalorder %v282, 0
    %vm284 = vcmp.lt.s32.totalorder %v282, 0
    %vm285 = vmand %vm284, %vm283
    %v286 = vadd.s32 %v282, 2
    %v287 = vsel %vm285, %v286, %v282
    %vm288 = vcmp.eq.s32.totalorder %v268, %v287
    %vm289 = vcmp.eq.s32.totalorder %v269, %v287
    %vm290 = vcmp.eq.s32.totalorder %v270, %v287
    %vm291 = vcmp.eq.s32.totalorder %v271, %v287
    %vm292 = vcmp.eq.s32.totalorder %v272, %v287
    %vm293 = vcmp.eq.s32.totalorder %v273, %v287
    %vm294 = vcmp.eq.s32.totalorder %v274, %v287
    %vm295 = vcmp.eq.s32.totalorder %v275, %v287
    %v296 = vsel %vm288, 0.0, -1e+30
    %v297 = vsel %vm289, 0.0, -1e+30
    %v298 = vsel %vm290, 0.0, -1e+30
    %v299 = vsel %vm291, 0.0, -1e+30
    %v300 = vsel %vm292, 0.0, -1e+30
    %v301 = vsel %vm293, 0.0, -1e+30
    %v302 = vsel %vm294, 0.0, -1e+30
    %v303 = vsel %vm295, 0.0, -1e+30
    %v304 = vld [vmem:[%s6] sm:$0xff]
    %v305 = vld [vmem:[%s6 + $0x8] sm:$0xff]
    %v306 = vld [vmem:[%s6 + $0x10] sm:$0xff]
    %v307 = vld [vmem:[%s6 + $0x18] sm:$0xff]
    %v308 = vld [vmem:[%s6 + $0x20] sm:$0xff]
    %v309 = vld [vmem:[%s6 + $0x28] sm:$0xff]
    %v310 = vld [vmem:[%s6 + $0x30] sm:$0xff]
    %v311 = vld [vmem:[%s6 + $0x38] sm:$0xff]
    %v312 = vld [vmem:[#allocation10] sm:$0x3]
    %v314 = vlaneseq
    %v315 = vshrl.u32 %v314, 7
    %v316 = vsub.s32 0, %v315
    %v317 = vrot.slane %v312, %v316
    %v318 = vlaneseq
    %v319 = vshrl.u32 %v318, 7
    %v320 = vsub.s32 1, %v319
    %v321 = vrot.slane %v312, %v320
    %vm324 = vcmask 261120
    %v326 = vsel %vm324, %v155, 0
    %v329 = vsel %vm324, %v156, 0
    %v332 = vsel %vm324, %v157, 0
    %v335 = vsel %vm324, %v158, 0
    %337 = vmatprep.subr.mxu0 %v305
    %338 = vmatpush1.msra.mxu0 %v304
    %339 = vmatprep.subr.mxu0 %v307
    %340 = vmatpush1.msra.mxu0 %v306
    %341 = vmatprep.subr.mxu0 %v309
    %342 = vmatpush1.msra.mxu0 %v308
    %343 = vmatprep.subr.mxu0 %v311
    %344 = vmatpush1.msra.mxu0 %v310
    %345 = vmatprep.subr.mxu0 0.0
    %346 = vmatpush1.msra.mxu0 0.0
    %347 = vmatprep.subr.mxu0 0.0
    %348 = vmatpush1.msra.mxu0 0.0
    %349 = vmatprep.subr.mxu0 0.0
    %350 = vmatpush1.msra.mxu0 0.0
    %351 = vmatprep.subr.mxu0 0.0
    %352 = vmatpush1.msra.mxu0 0.0
    %353 = vmatprep.subr.mxu0 0.0
    %354 = vmatpush1.msra.mxu0 0.0
    %355 = vmatprep.subr.mxu0 0.0
    %356 = vmatpush1.msra.mxu0 0.0
    %357 = vmatprep.subr.mxu0 0.0
    %358 = vmatpush1.msra.mxu0 0.0
    %359 = vmatprep.subr.mxu0 0.0
    %360 = vmatpush1.msra.mxu0 0.0
    %361 = vmatprep.subr.mxu0 0.0
    %362 = vmatpush1.msra.mxu0 0.0
    %363 = vmatprep.subr.mxu0 0.0
    %364 = vmatpush1.msra.mxu0 0.0
    %365 = vmatprep.subr.mxu0 0.0
    %366 = vmatpush1.msra.mxu0 0.0
    %367 = vmatprep.subr.mxu0 0.0
    %368 = vmatpush1.msra.mxu0 0.0
    %369 = vmatprep.subr.mxu0 0.0
    %370 = vmatpush1.msra.mxu0 0.0
    %371 = vmatprep.subr.mxu0 0.0
    %372 = vmatpush1.msra.mxu0 0.0
    %373 = vmatprep.subr.mxu0 0.0
    %374 = vmatpush1.msra.mxu0 0.0
    %375 = vmatprep.subr.mxu0 0.0
    %376 = vmatpush1.msra.mxu0 0.0
    %377 = vmatprep.subr.mxu0 0.0
    %378 = vmatpush1.msra.mxu0 0.0
    %379 = vmatprep.subr.mxu0 0.0
    %380 = vmatpush1.msra.mxu0 0.0
    %381 = vmatprep.subr.mxu0 0.0
    %382 = vmatpush1.msra.mxu0 0.0
    %383 = vmatprep.subr.mxu0 0.0
    %384 = vmatpush1.msra.mxu0 0.0
    %385 = vmatprep.subr.mxu0 0.0
    %386 = vmatpush1.msra.mxu0 0.0
    %387 = vmatprep.subr.mxu0 0.0
    %388 = vmatpush1.msra.mxu0 0.0
    %389 = vmatprep.subr.mxu0 0.0
    %390 = vmatpush1.msra.mxu0 0.0
    %391 = vmatprep.subr.mxu0 0.0
    %392 = vmatpush1.msra.mxu0 0.0
    %393 = vmatprep.subr.mxu0 0.0
    %394 = vmatpush1.msra.mxu0 0.0
    %395 = vmatprep.subr.mxu0 0.0
    %396 = vmatpush1.msra.mxu0 0.0
    %397 = vmatprep.subr.mxu0 0.0
    %398 = vmatpush1.msra.mxu0 0.0
    %399 = vmatprep.subr.mxu0 0.0
    %400 = vmatpush1.msra.mxu0 0.0
    %401 = vmatprep.mubr.f32.mxu0 0.0
    %402 = vmatmul.mubr.f32.gmra.mrb[0].mxu0 %v326
    %v403 = vpop.f32.mrb[0].mxu0
    %v404 = vadd.f32 %v317, %v403
    %v405 = vpop.f32.mrb[0].mxu0
    %v406 = vadd.f32 %v321, %v405
    %407 = vmatprep.mubr.f32.mxu0 0.0
    %408 = vmatmul.mubr.f32.gmra.mrb[0].mxu0 %v329
    %v409 = vpop.f32.mrb[0].mxu0
    %v410 = vadd.f32 %v317, %v409
    %v411 = vpop.f32.mrb[0].mxu0
    %v412 = vadd.f32 %v321, %v411
    %413 = vmatprep.mubr.f32.mxu0 0.0
    %414 = vmatmul.mubr.f32.gmra.mrb[0].mxu0 %v332
    %v415 = vpop.f32.mrb[0].mxu0
    %v416 = vadd.f32 %v317, %v415
    %v417 = vpop.f32.mrb[0].mxu0
    %v418 = vadd.f32 %v321, %v417
    %419 = vmatprep.mubr.f32.mxu0 0.0
    %420 = vmatmul.mubr.f32.gmra.mrb[0].mxu0 %v335
    %v421 = vpop.f32.mrb[0].mxu0
    %v422 = vadd.f32 %v317, %v421
    %v423 = vpop.f32.mrb[0].mxu0
    %v424 = vadd.f32 %v321, %v423
    %425 = vdwg.mxu0
    %v426 = vld [vmem:[%s11] sm:$0xff]
    %v427 = vld [vmem:[%s11 + $0x8] sm:$0x1]
    %v428 = vld [vmem:[%s10] sm:$0x7]
    %v429 = vld [vmem:[#allocation13] sm:$0x1]
    %v430 = vadd.f32 %v153, %v159
    %v431 = vadd.f32 %v154, %v160
    %v432 = vld [vmem:[%s4] sm:$0xff]
    %v433 = vld [vmem:[%s4 + $0x8] sm:$0xff]
    %v434 = vld [vmem:[%s4 + $0x10] sm:$0xff]
    %v435 = vld [vmem:[%s4 + $0x18] sm:$0xff]
    %v436 = vlaneseq
    %v437 = vshrl.u32 %v436, 7
    %v438 = vsub.s32 0, %v437
    %v439 = vrot.slane %v428, %v438
    %v441 = vsel %vm324, %v430, 0
    %v444 = vsel %vm324, %v431, 0
    %446 = vmatprep.subr.mxu0 0.0
    %447 = vmatpush1.msra.mxu0 %v432
    %448 = vmatprep.subr.mxu0 0.0
    %449 = vmatpush1.msra.mxu0 %v433
    %450 = vmatprep.subr.mxu0 0.0
    %451 = vmatpush1.msra.mxu0 %v434
    %452 = vmatprep.subr.mxu0 0.0
    %453 = vmatpush1.msra.mxu0 %v435
    %454 = vmatprep.subr.mxu0 0.0
    %455 = vmatpush1.msra.mxu0 0.0
    %456 = vmatprep.subr.mxu0 0.0
    %457 = vmatpush1.msra.mxu0 0.0
    %458 = vmatprep.subr.mxu0 0.0
    %459 = vmatpush1.msra.mxu0 0.0
    %460 = vmatprep.subr.mxu0 0.0
    %461 = vmatpush1.msra.mxu0 0.0
    %462 = vmatprep.subr.mxu0 0.0
    %463 = vmatpush1.msra.mxu0 0.0
    %464 = vmatprep.subr.mxu0 0.0
    %465 = vmatpush1.msra.mxu0 0.0
    %466 = vmatprep.subr.mxu0 0.0
    %467 = vmatpush1.msra.mxu0 0.0
    %468 = vmatprep.subr.mxu0 0.0
    %469 = vmatpush1.msra.mxu0 0.0
    %470 = vmatprep.subr.mxu0 0.0
    %471 = vmatpush1.msra.mxu0 0.0
    %472 = vmatprep.subr.mxu0 0.0
    %473 = vmatpush1.msra.mxu0 0.0
    %474 = vmatprep.subr.mxu0 0.0
    %475 = vmatpush1.msra.mxu0 0.0
    %476 = vmatprep.subr.mxu0 0.0
    %477 = vmatpush1.msra.mxu0 0.0
    %478 = vmatprep.subr.mxu0 0.0
    %479 = vmatpush1.msra.mxu0 0.0
    %480 = vmatprep.subr.mxu0 0.0
    %481 = vmatpush1.msra.mxu0 0.0
    %482 = vmatprep.subr.mxu0 0.0
    %483 = vmatpush1.msra.mxu0 0.0
    %484 = vmatprep.subr.mxu0 0.0
    %485 = vmatpush1.msra.mxu0 0.0
    %486 = vmatprep.subr.mxu0 0.0
    %487 = vmatpush1.msra.mxu0 0.0
    %488 = vmatprep.subr.mxu0 0.0
    %489 = vmatpush1.msra.mxu0 0.0
    %490 = vmatprep.subr.mxu0 0.0
    %491 = vmatpush1.msra.mxu0 0.0
    %492 = vmatprep.subr.mxu0 0.0
    %493 = vmatpush1.msra.mxu0 0.0
    %494 = vmatprep.subr.mxu0 0.0
    %495 = vmatpush1.msra.mxu0 0.0
    %496 = vmatprep.subr.mxu0 0.0
    %497 = vmatpush1.msra.mxu0 0.0
    %498 = vmatprep.subr.mxu0 0.0
    %499 = vmatpush1.msra.mxu0 0.0
    %500 = vmatprep.subr.mxu0 0.0
    %501 = vmatpush1.msra.mxu0 0.0
    %502 = vmatprep.subr.mxu0 0.0
    %503 = vmatpush1.msra.mxu0 0.0
    %504 = vmatprep.subr.mxu0 0.0
    %505 = vmatpush1.msra.mxu0 0.0
    %506 = vmatprep.subr.mxu0 0.0
    %507 = vmatpush1.msra.mxu0 0.0
    %508 = vmatprep.subr.mxu0 0.0
    %509 = vmatpush1.msra.mxu0 0.0
    %510 = vmatprep.mubr.f32.mxu0 0.0
    %511 = vmatmul.mubr.f32.gmra.mrb[0].mxu0 %v441
    %v512 = vpop.f32.mrb[0].mxu0
    %v513 = vadd.f32 %v439, %v512
    %v514 = vpop.f32.mrb[0].mxu0
    %515 = vmatprep.mubr.f32.mxu0 0.0
    %516 = vmatmul.mubr.f32.gmra.mrb[0].mxu0 %v444
    %v517 = vpop.f32.mrb[0].mxu0
    %v518 = vadd.f32 %v439, %v517
    %v519 = vpop.f32.mrb[0].mxu0
    %520 = vdwg.mxu0
    %s521 = scalar_lea.vmem %s4, 32
    %v522 = vld [vmem:[%s521] sm:$0xff]
    %v523 = vld [vmem:[%s521 + $0x8] sm:$0xff]
    %v524 = vld [vmem:[%s521 + $0x10] sm:$0xff]
    %v525 = vld [vmem:[%s521 + $0x18] sm:$0xff]
    %v526 = vlaneseq
    %v527 = vshrl.u32 %v526, 7
    %v528 = vsub.s32 1, %v527
    %v529 = vrot.slane %v428, %v528
    %v531 = vsel %vm324, %v153, 0
    %v534 = vsel %vm324, %v154, 0
    %536 = vmatprep.subr.mxu0 0.0
    %537 = vmatpush1.msra.mxu0 %v522
    %538 = vmatprep.subr.mxu0 0.0
    %539 = vmatpush1.msra.mxu0 %v523
    %540 = vmatprep.subr.mxu0 0.0
    %541 = vmatpush1.msra.mxu0 %v524
    %542 = vmatprep.subr.mxu0 0.0
    %543 = vmatpush1.msra.mxu0 %v525
    %544 = vmatprep.subr.mxu0 0.0
    %545 = vmatpush1.msra.mxu0 0.0
    %546 = vmatprep.subr.mxu0 0.0
    %547 = vmatpush1.msra.mxu0 0.0
    %548 = vmatprep.subr.mxu0 0.0
    %549 = vmatpush1.msra.mxu0 0.0
    %550 = vmatprep.subr.mxu0 0.0
    %551 = vmatpush1.msra.mxu0 0.0
    %552 = vmatprep.subr.mxu0 0.0
    %553 = vmatpush1.msra.mxu0 0.0
    %554 = vmatprep.subr.mxu0 0.0
    %555 = vmatpush1.msra.mxu0 0.0
    %556 = vmatprep.subr.mxu0 0.0
    %557 = vmatpush1.msra.mxu0 0.0
    %558 = vmatprep.subr.mxu0 0.0
    %559 = vmatpush1.msra.mxu0 0.0
    %560 = vmatprep.subr.mxu0 0.0
    %561 = vmatpush1.msra.mxu0 0.0
    %562 = vmatprep.subr.mxu0 0.0
    %563 = vmatpush1.msra.mxu0 0.0
    %564 = vmatprep.subr.mxu0 0.0
    %565 = vmatpush1.msra.mxu0 0.0
    %566 = vmatprep.subr.mxu0 0.0
    %567 = vmatpush1.msra.mxu0 0.0
    %568 = vmatprep.subr.mxu0 0.0
    %569 = vmatpush1.msra.mxu0 0.0
    %570 = vmatprep.subr.mxu0 0.0
    %571 = vmatpush1.msra.mxu0 0.0
    %572 = vmatprep.subr.mxu0 0.0
    %573 = vmatpush1.msra.mxu0 0.0
    %574 = vmatprep.subr.mxu0 0.0
    %575 = vmatpush1.msra.mxu0 0.0
    %576 = vmatprep.subr.mxu0 0.0
    %577 = vmatpush1.msra.mxu0 0.0
    %578 = vmatprep.subr.mxu0 0.0
    %579 = vmatpush1.msra.mxu0 0.0
    %580 = vmatprep.subr.mxu0 0.0
    %581 = vmatpush1.msra.mxu0 0.0
    %582 = vmatprep.subr.mxu0 0.0
    %583 = vmatpush1.msra.mxu0 0.0
    %584 = vmatprep.subr.mxu0 0.0
    %585 = vmatpush1.msra.mxu0 0.0
    %586 = vmatprep.subr.mxu0 0.0
    %587 = vmatpush1.msra.mxu0 0.0
    %588 = vmatprep.subr.mxu0 0.0
    %589 = vmatpush1.msra.mxu0 0.0
    %590 = vmatprep.subr.mxu0 0.0
    %591 = vmatpush1.msra.mxu0 0.0
    %592 = vmatprep.subr.mxu0 0.0
    %593 = vmatpush1.msra.mxu0 0.0
    %594 = vmatprep.subr.mxu0 0.0
    %595 = vmatpush1.msra.mxu0 0.0
    %596 = vmatprep.subr.mxu0 0.0
    %597 = vmatpush1.msra.mxu0 0.0
    %598 = vmatprep.subr.mxu0 0.0
    %599 = vmatpush1.msra.mxu0 0.0
    %600 = vmatprep.mubr.f32.mxu0 0.0
    %601 = vmatmul.mubr.f32.gmra.mrb[0].mxu0 %v531
    %v602 = vpop.f32.mrb[0].mxu0
    %v603 = vadd.f32 %v529, %v602
    %v604 = vpop.f32.mrb[0].mxu0
    %605 = vmatprep.mubr.f32.mxu0 0.0
    %606 = vmatmul.mubr.f32.gmra.mrb[0].mxu0 %v534
    %v607 = vpop.f32.mrb[0].mxu0
    %v608 = vadd.f32 %v529, %v607
    %v609 = vpop.f32.mrb[0].mxu0
    %610 = vdwg.mxu0
    %v612 = vsel %vm324, %v513, 0
    %v615 = vsel %vm324, %v518, 0
    %617 = vmatprep.subr.mxu0 0.0
    %618 = vmatpush1.xpose.msra.mxu0 %v441
    %619 = vmatprep.subr.mxu0 0.0
    %620 = vmatpush1.xpose.msra.mxu0 %v444
    %621 = vmatprep.subr.mxu0 0.0
    %622 = vmatpush1.xpose.msra.mxu0 0.0
    %623 = vmatprep.subr.mxu0 0.0
    %624 = vmatpush1.xpose.msra.mxu0 0.0
    %625 = vmatprep.subr.mxu0 0.0
    %626 = vmatpush1.xpose.msra.mxu0 0.0
    %627 = vmatprep.subr.mxu0 0.0
    %628 = vmatpush1.xpose.msra.mxu0 0.0
    %629 = vmatprep.subr.mxu0 0.0
    %630 = vmatpush1.xpose.msra.mxu0 0.0
    %631 = vmatprep.subr.mxu0 0.0
    %632 = vmatpush1.xpose.msra.mxu0 0.0
    %633 = vmatprep.subr.mxu0 0.0
    %634 = vmatpush1.xpose.msra.mxu0 0.0
    %635 = vmatprep.subr.mxu0 0.0
    %636 = vmatpush1.xpose.msra.mxu0 0.0
    %637 = vmatprep.subr.mxu0 0.0
    %638 = vmatpush1.xpose.msra.mxu0 0.0
    %639 = vmatprep.subr.mxu0 0.0
    %640 = vmatpush1.xpose.msra.mxu0 0.0
    %641 = vmatprep.subr.mxu0 0.0
    %642 = vmatpush1.xpose.msra.mxu0 0.0
    %643 = vmatprep.subr.mxu0 0.0
    %644 = vmatpush1.xpose.msra.mxu0 0.0
    %645 = vmatprep.subr.mxu0 0.0
    %646 = vmatpush1.xpose.msra.mxu0 0.0
    %647 = vmatprep.subr.mxu0 0.0
    %648 = vmatpush1.xpose.msra.mxu0 0.0
    %649 = vmatprep.subr.mxu0 0.0
    %650 = vmatpush1.xpose.msra.mxu0 0.0
    %651 = vmatprep.subr.mxu0 0.0
    %652 = vmatpush1.xpose.msra.mxu0 0.0
    %653 = vmatprep.subr.mxu0 0.0
    %654 = vmatpush1.xpose.msra.mxu0 0.0
    %655 = vmatprep.subr.mxu0 0.0
    %656 = vmatpush1.xpose.msra.mxu0 0.0
    %657 = vmatprep.subr.mxu0 0.0
    %658 = vmatpush1.xpose.msra.mxu0 0.0
    %659 = vmatprep.subr.mxu0 0.0
    %660 = vmatpush1.xpose.msra.mxu0 0.0
    %661 = vmatprep.subr.mxu0 0.0
    %662 = vmatpush1.xpose.msra.mxu0 0.0
    %663 = vmatprep.subr.mxu0 0.0
    %664 = vmatpush1.xpose.msra.mxu0 0.0
    %665 = vmatprep.subr.mxu0 0.0
    %666 = vmatpush1.xpose.msra.mxu0 0.0
    %667 = vmatprep.subr.mxu0 0.0
    %668 = vmatpush1.xpose.msra.mxu0 0.0
    %669 = vmatprep.subr.mxu0 0.0
    %670 = vmatpush1.xpose.msra.mxu0 0.0
    %671 = vmatprep.subr.mxu0 0.0
    %672 = vmatpush1.xpose.msra.mxu0 0.0
    %673 = vmatprep.subr.mxu0 0.0
    %674 = vmatpush1.xpose.msra.mxu0 0.0
    %675 = vmatprep.subr.mxu0 0.0
    %676 = vmatpush1.xpose.msra.mxu0 0.0
    %677 = vmatprep.subr.mxu0 0.0
    %678 = vmatpush1.xpose.msra.mxu0 0.0
    %679 = vmatprep.subr.mxu0 0.0
    %680 = vmatpush1.xpose.msra.mxu0 0.0
    %681 = vmatprep.mubr.f32.mxu0 0.0
    %682 = vmatmul.mubr.f32.gmra.mrb[0].mxu0 %v612
    %v683 = vpop.f32.mrb[0].mxu0
    %v684 = vadd.f32 0.0, %v683
    %v685 = vpop.f32.mrb[0].mxu0
    %686 = vmatprep.mubr.f32.mxu0 0.0
    %687 = vmatmul.mubr.f32.gmra.mrb[0].mxu0 %v615
    %v688 = vpop.f32.mrb[0].mxu0
    %v689 = vadd.f32 0.0, %v688
    %v690 = vpop.f32.mrb[0].mxu0
    %691 = vdwg.mxu0
    %692 = vrot.lane.b32.xlu0 %v513, 96
    %v693 = vpop.permute.xlu0 %692
    %694 = vrot.lane.b32.xlu0 %v518, 96
    %v695 = vpop.permute.xlu0 %694
    %v696 = vsel %vm324, %v693, 0
    %v698 = vsel %vm324, %v695, 0
    %700 = vmatprep.subr.mxu0 0.0
    %701 = vmatpush1.xpose.msra.mxu0 %v441
    %702 = vmatprep.subr.mxu0 0.0
    %703 = vmatpush1.xpose.msra.mxu0 %v444
    %704 = vmatprep.subr.mxu0 0.0
    %705 = vmatpush1.xpose.msra.mxu0 0.0
    %706 = vmatprep.subr.mxu0 0.0
    %707 = vmatpush1.xpose.msra.mxu0 0.0
    %708 = vmatprep.subr.mxu0 0.0
    %709 = vmatpush1.xpose.msra.mxu0 0.0
    %710 = vmatprep.subr.mxu0 0.0
    %711 = vmatpush1.xpose.msra.mxu0 0.0
    %712 = vmatprep.subr.mxu0 0.0
    %713 = vmatpush1.xpose.msra.mxu0 0.0
    %714 = vmatprep.subr.mxu0 0.0
    %715 = vmatpush1.xpose.msra.mxu0 0.0
    %716 = vmatprep.subr.mxu0 0.0
    %717 = vmatpush1.xpose.msra.mxu0 0.0
    %718 = vmatprep.subr.mxu0 0.0
    %719 = vmatpush1.xpose.msra.mxu0 0.0
    %720 = vmatprep.subr.mxu0 0.0
    %721 = vmatpush1.xpose.msra.mxu0 0.0
    %722 = vmatprep.subr.mxu0 0.0
    %723 = vmatpush1.xpose.msra.mxu0 0.0
    %724 = vmatprep.subr.mxu0 0.0
    %725 = vmatpush1.xpose.msra.mxu0 0.0
    %726 = vmatprep.subr.mxu0 0.0
    %727 = vmatpush1.xpose.msra.mxu0 0.0
    %728 = vmatprep.subr.mxu0 0.0
    %729 = vmatpush1.xpose.msra.mxu0 0.0
    %730 = vmatprep.subr.mxu0 0.0
    %731 = vmatpush1.xpose.msra.mxu0 0.0
    %732 = vmatprep.subr.mxu0 0.0
    %733 = vmatpush1.xpose.msra.mxu0 0.0
    %734 = vmatprep.subr.mxu0 0.0
    %735 = vmatpush1.xpose.msra.mxu0 0.0
    %736 = vmatprep.subr.mxu0 0.0
    %737 = vmatpush1.xpose.msra.mxu0 0.0
    %738 = vmatprep.subr.mxu0 0.0
    %739 = vmatpush1.xpose.msra.mxu0 0.0
    %740 = vmatprep.subr.mxu0 0.0
    %741 = vmatpush1.xpose.msra.mxu0 0.0
    %742 = vmatprep.subr.mxu0 0.0
    %743 = vmatpush1.xpose.msra.mxu0 0.0
    %744 = vmatprep.subr.mxu0 0.0
    %745 = vmatpush1.xpose.msra.mxu0 0.0
    %746 = vmatprep.subr.mxu0 0.0
    %747 = vmatpush1.xpose.msra.mxu0 0.0
    %748 = vmatprep.subr.mxu0 0.0
    %749 = vmatpush1.xpose.msra.mxu0 0.0
    %750 = vmatprep.subr.mxu0 0.0
    %751 = vmatpush1.xpose.msra.mxu0 0.0
    %752 = vmatprep.subr.mxu0 0.0
    %753 = vmatpush1.xpose.msra.mxu0 0.0
    %754 = vmatprep.subr.mxu0 0.0
    %755 = vmatpush1.xpose.msra.mxu0 0.0
    %756 = vmatprep.subr.mxu0 0.0
    %757 = vmatpush1.xpose.msra.mxu0 0.0
    %758 = vmatprep.subr.mxu0 0.0
    %759 = vmatpush1.xpose.msra.mxu0 0.0
    %760 = vmatprep.subr.mxu0 0.0
    %761 = vmatpush1.xpose.msra.mxu0 0.0
    %762 = vmatprep.subr.mxu0 0.0
    %763 = vmatpush1.xpose.msra.mxu0 0.0
    %764 = vmatprep.mubr.f32.mxu0 0.0
    %765 = vmatmul.mubr.f32.gmra.mrb[0].mxu0 %v696
    %v766 = vpop.f32.mrb[0].mxu0
    %v767 = vadd.f32 0.0, %v766
    %v768 = vpop.f32.mrb[0].mxu0
    %769 = vmatprep.mubr.f32.mxu0 0.0
    %770 = vmatmul.mubr.f32.gmra.mrb[0].mxu0 %v698
    %v771 = vpop.f32.mrb[0].mxu0
    %v772 = vadd.f32 0.0, %v771
    %v773 = vpop.f32.mrb[0].mxu0
    %774 = vdwg.mxu0
    %775 = vrot.lane.b32.xlu0 %v513, 64
    %v776 = vpop.permute.xlu0 %775
    %777 = vrot.lane.b32.xlu0 %v518, 64
    %v778 = vpop.permute.xlu0 %777
    %v779 = vsel %vm324, %v776, 0
    %v781 = vsel %vm324, %v778, 0
    %783 = vmatprep.subr.mxu0 0.0
    %784 = vmatpush1.xpose.msra.mxu0 %v441
    %785 = vmatprep.subr.mxu0 0.0
    %786 = vmatpush1.xpose.msra.mxu0 %v444
    %787 = vmatprep.subr.mxu0 0.0
    %788 = vmatpush1.xpose.msra.mxu0 0.0
    %789 = vmatprep.subr.mxu0 0.0
    %790 = vmatpush1.xpose.msra.mxu0 0.0
    %791 = vmatprep.subr.mxu0 0.0
    %792 = vmatpush1.xpose.msra.mxu0 0.0
    %793 = vmatprep.subr.mxu0 0.0
    %794 = vmatpush1.xpose.msra.mxu0 0.0
    %795 = vmatprep.subr.mxu0 0.0
    %796 = vmatpush1.xpose.msra.mxu0 0.0
    %797 = vmatprep.subr.mxu0 0.0
    %798 = vmatpush1.xpose.msra.mxu0 0.0
    %799 = vmatprep.subr.mxu0 0.0
    %800 = vmatpush1.xpose.msra.mxu0 0.0
    %801 = vmatprep.subr.mxu0 0.0
    %802 = vmatpush1.xpose.msra.mxu0 0.0
    %803 = vmatprep.subr.mxu0 0.0
    %804 = vmatpush1.xpose.msra.mxu0 0.0
    %805 = vmatprep.subr.mxu0 0.0
    %806 = vmatpush1.xpose.msra.mxu0 0.0
    %807 = vmatprep.subr.mxu0 0.0
    %808 = vmatpush1.xpose.msra.mxu0 0.0
    %809 = vmatprep.subr.mxu0 0.0
    %810 = vmatpush1.xpose.msra.mxu0 0.0
    %811 = vmatprep.subr.mxu0 0.0
    %812 = vmatpush1.xpose.msra.mxu0 0.0
    %813 = vmatprep.subr.mxu0 0.0
    %814 = vmatpush1.xpose.msra.mxu0 0.0
    %815 = vmatprep.subr.mxu0 0.0
    %816 = vmatpush1.xpose.msra.mxu0 0.0
    %817 = vmatprep.subr.mxu0 0.0
    %818 = vmatpush1.xpose.msra.mxu0 0.0
    %819 = vmatprep.subr.mxu0 0.0
    %820 = vmatpush1.xpose.msra.mxu0 0.0
    %821 = vmatprep.subr.mxu0 0.0
    %822 = vmatpush1.xpose.msra.mxu0 0.0
    %823 = vmatprep.subr.mxu0 0.0
    %824 = vmatpush1.xpose.msra.mxu0 0.0
    %825 = vmatprep.subr.mxu0 0.0
    %826 = vmatpush1.xpose.msra.mxu0 0.0
    %827 = vmatprep.subr.mxu0 0.0
    %828 = vmatpush1.xpose.msra.mxu0 0.0
    %829 = vmatprep.subr.mxu0 0.0
    %830 = vmatpush1.xpose.msra.mxu0 0.0
    %831 = vmatprep.subr.mxu0 0.0
    %832 = vmatpush1.xpose.msra.mxu0 0.0
    %833 = vmatprep.subr.mxu0 0.0
    %834 = vmatpush1.xpose.msra.mxu0 0.0
    %835 = vmatprep.subr.mxu0 0.0
    %836 = vmatpush1.xpose.msra.mxu0 0.0
    %837 = vmatprep.subr.mxu0 0.0
    %838 = vmatpush1.xpose.msra.mxu0 0.0
    %839 = vmatprep.subr.mxu0 0.0
    %840 = vmatpush1.xpose.msra.mxu0 0.0
    %841 = vmatprep.subr.mxu0 0.0
    %842 = vmatpush1.xpose.msra.mxu0 0.0
    %843 = vmatprep.subr.mxu0 0.0
    %844 = vmatpush1.xpose.msra.mxu0 0.0
    %845 = vmatprep.subr.mxu0 0.0
    %846 = vmatpush1.xpose.msra.mxu0 0.0
    %847 = vmatprep.mubr.f32.mxu0 0.0
    %848 = vmatmul.mubr.f32.gmra.mrb[0].mxu0 %v779
    %v849 = vpop.f32.mrb[0].mxu0
    %v850 = vadd.f32 0.0, %v849
    %v851 = vpop.f32.mrb[0].mxu0
    %852 = vmatprep.mubr.f32.mxu0 0.0
    %853 = vmatmul.mubr.f32.gmra.mrb[0].mxu0 %v781
    %v854 = vpop.f32.mrb[0].mxu0
    %v855 = vadd.f32 0.0, %v854
    %v856 = vpop.f32.mrb[0].mxu0
    %857 = vdwg.mxu0
    %858 = vrot.lane.b32.xlu0 %v513, 32
    %v859 = vpop.permute.xlu0 %858
    %860 = vrot.lane.b32.xlu0 %v518, 32
    %v861 = vpop.permute.xlu0 %860
    %v862 = vsel %vm324, %v859, 0
    %v864 = vsel %vm324, %v861, 0
    %866 = vmatprep.subr.mxu0 0.0
    %867 = vmatpush1.xpose.msra.mxu0 %v441
    %868 = vmatprep.subr.mxu0 0.0
    %869 = vmatpush1.xpose.msra.mxu0 %v444
    %870 = vmatprep.subr.mxu0 0.0
    %871 = vmatpush1.xpose.msra.mxu0 0.0
    %872 = vmatprep.subr.mxu0 0.0
    %873 = vmatpush1.xpose.msra.mxu0 0.0
    %874 = vmatprep.subr.mxu0 0.0
    %875 = vmatpush1.xpose.msra.mxu0 0.0
    %876 = vmatprep.subr.mxu0 0.0
    %877 = vmatpush1.xpose.msra.mxu0 0.0
    %878 = vmatprep.subr.mxu0 0.0
    %879 = vmatpush1.xpose.msra.mxu0 0.0
    %880 = vmatprep.subr.mxu0 0.0
    %881 = vmatpush1.xpose.msra.mxu0 0.0
    %882 = vmatprep.subr.mxu0 0.0
    %883 = vmatpush1.xpose.msra.mxu0 0.0
    %884 = vmatprep.subr.mxu0 0.0
    %885 = vmatpush1.xpose.msra.mxu0 0.0
    %886 = vmatprep.subr.mxu0 0.0
    %887 = vmatpush1.xpose.msra.mxu0 0.0
    %888 = vmatprep.subr.mxu0 0.0
    %889 = vmatpush1.xpose.msra.mxu0 0.0
    %890 = vmatprep.subr.mxu0 0.0
    %891 = vmatpush1.xpose.msra.mxu0 0.0
    %892 = vmatprep.subr.mxu0 0.0
    %893 = vmatpush1.xpose.msra.mxu0 0.0
    %894 = vmatprep.subr.mxu0 0.0
    %895 = vmatpush1.xpose.msra.mxu0 0.0
    %896 = vmatprep.subr.mxu0 0.0
    %897 = vmatpush1.xpose.msra.mxu0 0.0
    %898 = vmatprep.subr.mxu0 0.0
    %899 = vmatpush1.xpose.msra.mxu0 0.0
    %900 = vmatprep.subr.mxu0 0.0
    %901 = vmatpush1.xpose.msra.mxu0 0.0
    %902 = vmatprep.subr.mxu0 0.0
    %903 = vmatpush1.xpose.msra.mxu0 0.0
    %904 = vmatprep.subr.mxu0 0.0
    %905 = vmatpush1.xpose.msra.mxu0 0.0
    %906 = vmatprep.subr.mxu0 0.0
    %907 = vmatpush1.xpose.msra.mxu0 0.0
    %908 = vmatprep.subr.mxu0 0.0
    %909 = vmatpush1.xpose.msra.mxu0 0.0
    %910 = vmatprep.subr.mxu0 0.0
    %911 = vmatpush1.xpose.msra.mxu0 0.0
    %912 = vmatprep.subr.mxu0 0.0
    %913 = vmatpush1.xpose.msra.mxu0 0.0
    %914 = vmatprep.subr.mxu0 0.0
    %915 = vmatpush1.xpose.msra.mxu0 0.0
    %916 = vmatprep.subr.mxu0 0.0
    %917 = vmatpush1.xpose.msra.mxu0 0.0
    %918 = vmatprep.subr.mxu0 0.0
    %919 = vmatpush1.xpose.msra.mxu0 0.0
    %920 = vmatprep.subr.mxu0 0.0
    %921 = vmatpush1.xpose.msra.mxu0 0.0
    %922 = vmatprep.subr.mxu0 0.0
    %923 = vmatpush1.xpose.msra.mxu0 0.0
    %924 = vmatprep.subr.mxu0 0.0
    %925 = vmatpush1.xpose.msra.mxu0 0.0
    %926 = vmatprep.subr.mxu0 0.0
    %927 = vmatpush1.xpose.msra.mxu0 0.0
    %928 = vmatprep.subr.mxu0 0.0
    %929 = vmatpush1.xpose.msra.mxu0 0.0
    %930 = vmatprep.mubr.f32.mxu0 0.0
    %931 = vmatmul.mubr.f32.gmra.mrb[0].mxu0 %v862
    %v932 = vpop.f32.mrb[0].mxu0
    %v933 = vadd.f32 0.0, %v932
    %v934 = vpop.f32.mrb[0].mxu0
    %935 = vmatprep.mubr.f32.mxu0 0.0
    %936 = vmatmul.mubr.f32.gmra.mrb[0].mxu0 %v864
    %v937 = vpop.f32.mrb[0].mxu0
    %v938 = vadd.f32 0.0, %v937
    %v939 = vpop.f32.mrb[0].mxu0
    %940 = vdwg.mxu0
    %v941 = vadd.f32 %v684, %v296
    %v942 = vadd.f32 %v689, %v297
    %v943 = vadd.f32 %v767, %v298
    %v944 = vadd.f32 %v772, %v299
    %v945 = vadd.f32 %v850, %v300
    %v946 = vadd.f32 %v855, %v301
    %v947 = vadd.f32 %v933, %v302
    %v948 = vadd.f32 %v938, %v303
    %vm949 = vcmask 130048
    %v950 = vsel %vm949, %v941, -inf
    %951 = vmax.xlane.f32.xlu0 %v950
    %v952 = vpop.xlane.xlu0 %951
    %v953 = vsel %vm949, %v942, -inf
    %954 = vmax.xlane.f32.xlu0 %v953
    %v955 = vpop.xlane.xlu0 %954
    %v956 = vsel %vm949, %v943, -inf
    %957 = vmax.xlane.f32.xlu0 %v956
    %v958 = vpop.xlane.xlu0 %957
    %v959 = vsel %vm949, %v944, -inf
    %960 = vmax.xlane.f32.xlu0 %v959
    %v961 = vpop.xlane.xlu0 %960
    %v962 = vsel %vm949, %v945, -inf
    %963 = vmax.xlane.f32.xlu0 %v962
    %v964 = vpop.xlane.xlu0 %963
    %v965 = vsel %vm949, %v946, -inf
    %966 = vmax.xlane.f32.xlu0 %v965
    %v967 = vpop.xlane.xlu0 %966
    %v968 = vsel %vm949, %v947, -inf
    %969 = vmax.xlane.f32.xlu0 %v968
    %v970 = vpop.xlane.xlu0 %969
    %v971 = vsel %vm949, %v948, -inf
    %972 = vmax.xlane.f32.xlu0 %v971
    %v973 = vpop.xlane.xlu0 %972
    %v974 = vsub.f32 %v941, %v952
    %v975 = vsub.f32 %v942, %v955
    %v976 = vsub.f32 %v943, %v958
    %v977 = vsub.f32 %v944, %v961
    %v978 = vsub.f32 %v945, %v964
    %v979 = vsub.f32 %v946, %v967
    %v980 = vsub.f32 %v947, %v970
    %v981 = vsub.f32 %v948, %v973
    %v982 = vmul.f32 %v974, 1.442695
    %v983 = vpow.pop %v982
    %v984 = vmul.f32 %v975, 1.442695
    %v985 = vpow.pop %v984
    %v986 = vmul.f32 %v976, 1.442695
    %v987 = vpow.pop %v986
    %v988 = vmul.f32 %v977, 1.442695
    %v989 = vpow.pop %v988
    %v990 = vmul.f32 %v978, 1.442695
    %v991 = vpow.pop %v990
    %v992 = vmul.f32 %v979, 1.442695
    %v993 = vpow.pop %v992
    %v994 = vmul.f32 %v980, 1.442695
    %v995 = vpow.pop %v994
    %v996 = vmul.f32 %v981, 1.442695
    %v997 = vpow.pop %v996
    %v998 = vsel %vm949, %v983, 0.0
    %999 = vadd.xlane.f32.xlu0 %v998
    %v1000 = vpop.xlane.xlu0 %999
    %v1001 = vsel %vm949, %v985, 0.0
    %1002 = vadd.xlane.f32.xlu0 %v1001
    %v1003 = vpop.xlane.xlu0 %1002
    %v1004 = vsel %vm949, %v987, 0.0
    %1005 = vadd.xlane.f32.xlu0 %v1004
    %v1006 = vpop.xlane.xlu0 %1005
    %v1007 = vsel %vm949, %v989, 0.0
    %1008 = vadd.xlane.f32.xlu0 %v1007
    %v1009 = vpop.xlane.xlu0 %1008
    %v1010 = vsel %vm949, %v991, 0.0
    %1011 = vadd.xlane.f32.xlu0 %v1010
    %v1012 = vpop.xlane.xlu0 %1011
    %v1013 = vsel %vm949, %v993, 0.0
    %1014 = vadd.xlane.f32.xlu0 %v1013
    %v1015 = vpop.xlane.xlu0 %1014
    %v1016 = vsel %vm949, %v995, 0.0
    %1017 = vadd.xlane.f32.xlu0 %v1016
    %v1018 = vpop.xlane.xlu0 %1017
    %v1019 = vsel %vm949, %v997, 0.0
    %1020 = vadd.xlane.f32.xlu0 %v1019
    %v1021 = vpop.xlane.xlu0 %1020
    %v1022 = vrcp.pop %v1000
    %v1023 = vrcp.pop %v1003
    %v1024 = vrcp.pop %v1006
    %v1025 = vrcp.pop %v1009
    %v1026 = vrcp.pop %v1012
    %v1027 = vrcp.pop %v1015
    %v1028 = vrcp.pop %v1018
    %v1029 = vrcp.pop %v1021
    %v1030 = vmul.f32 %v983, %v1022
    %v1031 = vmul.f32 %v985, %v1023
    %v1032 = vmul.f32 %v987, %v1024
    %v1033 = vmul.f32 %v989, %v1025
    %v1034 = vmul.f32 %v991, %v1026
    %v1035 = vmul.f32 %v993, %v1027
    %v1036 = vmul.f32 %v995, %v1028
    %v1037 = vmul.f32 %v997, %v1029
    %1040 = vrot.lane.b32.xlu0 %v603, 96
    %v1041 = vpop.permute.xlu0 %1040
    %1042 = vrot.lane.b32.xlu0 %v608, 96
    %v1043 = vpop.permute.xlu0 %1042
    %v1047 = vsel %vm949, %v1032, 0
    %v1050 = vsel %vm949, %v1033, 0
    %1052 = vmatprep.subr.mxu0 0.0
    %1053 = vmatpush1.msra.mxu0 %v1041
    %1054 = vmatprep.subr.mxu0 0.0
    %1055 = vmatpush1.msra.mxu0 %v1043
    %1056 = vmatprep.subr.mxu0 0.0
    %1057 = vmatpush1.msra.mxu0 0.0
    %1058 = vmatprep.subr.mxu0 0.0
    %1059 = vmatpush1.msra.mxu0 0.0
    %1060 = vmatprep.subr.mxu0 0.0
    %1061 = vmatpush1.msra.mxu0 0.0
    %1062 = vmatprep.subr.mxu0 0.0
    %1063 = vmatpush1.msra.mxu0 0.0
    %1064 = vmatprep.subr.mxu0 0.0
    %1065 = vmatpush1.msra.mxu0 0.0
    %1066 = vmatprep.subr.mxu0 0.0
    %1067 = vmatpush1.msra.mxu0 0.0
    %1068 = vmatprep.subr.mxu0 0.0
    %1069 = vmatpush1.msra.mxu0 0.0
    %1070 = vmatprep.subr.mxu0 0.0
    %1071 = vmatpush1.msra.mxu0 0.0
    %1072 = vmatprep.subr.mxu0 0.0
    %1073 = vmatpush1.msra.mxu0 0.0
    %1074 = vmatprep.subr.mxu0 0.0
    %1075 = vmatpush1.msra.mxu0 0.0
    %1076 = vmatprep.subr.mxu0 0.0
    %1077 = vmatpush1.msra.mxu0 0.0
    %1078 = vmatprep.subr.mxu0 0.0
    %1079 = vmatpush1.msra.mxu0 0.0
    %1080 = vmatprep.subr.mxu0 0.0
    %1081 = vmatpush1.msra.mxu0 0.0
    %1082 = vmatprep.subr.mxu0 0.0
    %1083 = vmatpush1.msra.mxu0 0.0
    %1084 = vmatprep.subr.mxu0 0.0
    %1085 = vmatpush1.msra.mxu0 0.0
    %1086 = vmatprep.subr.mxu0 0.0
    %1087 = vmatpush1.msra.mxu0 0.0
    %1088 = vmatprep.subr.mxu0 0.0
    %1089 = vmatpush1.msra.mxu0 0.0
    %1090 = vmatprep.subr.mxu0 0.0
    %1091 = vmatpush1.msra.mxu0 0.0
    %1092 = vmatprep.subr.mxu0 0.0
    %1093 = vmatpush1.msra.mxu0 0.0
    %1094 = vmatprep.subr.mxu0 0.0
    %1095 = vmatpush1.msra.mxu0 0.0
    %1096 = vmatprep.subr.mxu0 0.0
    %1097 = vmatpush1.msra.mxu0 0.0
    %1098 = vmatprep.subr.mxu0 0.0
    %1099 = vmatpush1.msra.mxu0 0.0
    %1100 = vmatprep.subr.mxu0 0.0
    %1101 = vmatpush1.msra.mxu0 0.0
    %1102 = vmatprep.subr.mxu0 0.0
    %1103 = vmatpush1.msra.mxu0 0.0
    %1104 = vmatprep.subr.mxu0 0.0
    %1105 = vmatpush1.msra.mxu0 0.0
    %1106 = vmatprep.subr.mxu0 0.0
    %1107 = vmatpush1.msra.mxu0 0.0
    %1108 = vmatprep.subr.mxu0 0.0
    %1109 = vmatpush1.msra.mxu0 0.0
    %1110 = vmatprep.subr.mxu0 0.0
    %1111 = vmatpush1.msra.mxu0 0.0
    %1112 = vmatprep.subr.mxu0 0.0
    %1113 = vmatpush1.msra.mxu0 0.0
    %1114 = vmatprep.subr.mxu0 0.0
    %1115 = vmatpush1.msra.mxu0 0.0
    %1116 = vmatprep.mubr.f32.mxu0 0.0
    %1117 = vmatmul.mubr.f32.gmra.mrb[0].mxu0 %v1047
    %v1118 = vpop.f32.mrb[0].mxu0
    %v1119 = vadd.f32 0.0, %v1118
    %v1120 = vpop.f32.mrb[0].mxu0
    %1121 = vmatprep.mubr.f32.mxu0 0.0
    %1122 = vmatmul.mubr.f32.gmra.mrb[0].mxu0 %v1050
    %v1123 = vpop.f32.mrb[0].mxu0
    %v1124 = vadd.f32 0.0, %v1123
    %v1125 = vpop.f32.mrb[0].mxu0
    %1126 = vdwg.mxu0
    %v1128 = vsel %vm949, %v1030, 0
    %v1131 = vsel %vm949, %v1031, 0
    %1133 = vmatprep.subr.mxu0 0.0
    %1134 = vmatpush1.msra.mxu0 %v603
    %1135 = vmatprep.subr.mxu0 0.0
    %1136 = vmatpush1.msra.mxu0 %v608
    %1137 = vmatprep.subr.mxu0 0.0
    %1138 = vmatpush1.msra.mxu0 0.0
    %1139 = vmatprep.subr.mxu0 0.0
    %1140 = vmatpush1.msra.mxu0 0.0
    %1141 = vmatprep.subr.mxu0 0.0
    %1142 = vmatpush1.msra.mxu0 0.0
    %1143 = vmatprep.subr.mxu0 0.0
    %1144 = vmatpush1.msra.mxu0 0.0
    %1145 = vmatprep.subr.mxu0 0.0
    %1146 = vmatpush1.msra.mxu0 0.0
    %1147 = vmatprep.subr.mxu0 0.0
    %1148 = vmatpush1.msra.mxu0 0.0
    %1149 = vmatprep.subr.mxu0 0.0
    %1150 = vmatpush1.msra.mxu0 0.0
    %1151 = vmatprep.subr.mxu0 0.0
    %1152 = vmatpush1.msra.mxu0 0.0
    %1153 = vmatprep.subr.mxu0 0.0
    %1154 = vmatpush1.msra.mxu0 0.0
    %1155 = vmatprep.subr.mxu0 0.0
    %1156 = vmatpush1.msra.mxu0 0.0
    %1157 = vmatprep.subr.mxu0 0.0
    %1158 = vmatpush1.msra.mxu0 0.0
    %1159 = vmatprep.subr.mxu0 0.0
    %1160 = vmatpush1.msra.mxu0 0.0
    %1161 = vmatprep.subr.mxu0 0.0
    %1162 = vmatpush1.msra.mxu0 0.0
    %1163 = vmatprep.subr.mxu0 0.0
    %1164 = vmatpush1.msra.mxu0 0.0
    %1165 = vmatprep.subr.mxu0 0.0
    %1166 = vmatpush1.msra.mxu0 0.0
    %1167 = vmatprep.subr.mxu0 0.0
    %1168 = vmatpush1.msra.mxu0 0.0
    %1169 = vmatprep.subr.mxu0 0.0
    %1170 = vmatpush1.msra.mxu0 0.0
    %1171 = vmatprep.subr.mxu0 0.0
    %1172 = vmatpush1.msra.mxu0 0.0
    %1173 = vmatprep.subr.mxu0 0.0
    %1174 = vmatpush1.msra.mxu0 0.0
    %1175 = vmatprep.subr.mxu0 0.0
    %1176 = vmatpush1.msra.mxu0 0.0
    %1177 = vmatprep.subr.mxu0 0.0
    %1178 = vmatpush1.msra.mxu0 0.0
    %1179 = vmatprep.subr.mxu0 0.0
    %1180 = vmatpush1.msra.mxu0 0.0
    %1181 = vmatprep.subr.mxu0 0.0
    %1182 = vmatpush1.msra.mxu0 0.0
    %1183 = vmatprep.subr.mxu0 0.0
    %1184 = vmatpush1.msra.mxu0 0.0
    %1185 = vmatprep.subr.mxu0 0.0
    %1186 = vmatpush1.msra.mxu0 0.0
    %1187 = vmatprep.subr.mxu0 0.0
    %1188 = vmatpush1.msra.mxu0 0.0
    %1189 = vmatprep.subr.mxu0 0.0
    %1190 = vmatpush1.msra.mxu0 0.0
    %1191 = vmatprep.subr.mxu0 0.0
    %1192 = vmatpush1.msra.mxu0 0.0
    %1193 = vmatprep.subr.mxu0 0.0
    %1194 = vmatpush1.msra.mxu0 0.0
    %1195 = vmatprep.subr.mxu0 0.0
    %1196 = vmatpush1.msra.mxu0 0.0
    %1197 = vmatprep.mubr.f32.mxu0 0.0
    %1198 = vmatmul.mubr.f32.gmra.mrb[0].mxu0 %v1128
    %v1199 = vpop.f32.mrb[0].mxu0
    %v1200 = vadd.f32 %v1119, %v1199
    %v1201 = vpop.f32.mrb[0].mxu0
    %1202 = vmatprep.mubr.f32.mxu0 0.0
    %1203 = vmatmul.mubr.f32.gmra.mrb[0].mxu0 %v1131
    %v1204 = vpop.f32.mrb[0].mxu0
    %v1205 = vadd.f32 %v1124, %v1204
    %v1206 = vpop.f32.mrb[0].mxu0
    %1207 = vdwg.mxu0
    %1208 = vrot.lane.b32.xlu0 %v603, 64
    %v1209 = vpop.permute.xlu0 %1208
    %1210 = vrot.lane.b32.xlu0 %v608, 64
    %v1211 = vpop.permute.xlu0 %1210
    %v1215 = vsel %vm949, %v1034, 0
    %v1218 = vsel %vm949, %v1035, 0
    %1220 = vmatprep.subr.mxu0 0.0
    %1221 = vmatpush1.msra.mxu0 %v1209
    %1222 = vmatprep.subr.mxu0 0.0
    %1223 = vmatpush1.msra.mxu0 %v1211
    %1224 = vmatprep.subr.mxu0 0.0
    %1225 = vmatpush1.msra.mxu0 0.0
    %1226 = vmatprep.subr.mxu0 0.0
    %1227 = vmatpush1.msra.mxu0 0.0
    %1228 = vmatprep.subr.mxu0 0.0
    %1229 = vmatpush1.msra.mxu0 0.0
    %1230 = vmatprep.subr.mxu0 0.0
    %1231 = vmatpush1.msra.mxu0 0.0
    %1232 = vmatprep.subr.mxu0 0.0
    %1233 = vmatpush1.msra.mxu0 0.0
    %1234 = vmatprep.subr.mxu0 0.0
    %1235 = vmatpush1.msra.mxu0 0.0
    %1236 = vmatprep.subr.mxu0 0.0
    %1237 = vmatpush1.msra.mxu0 0.0
    %1238 = vmatprep.subr.mxu0 0.0
    %1239 = vmatpush1.msra.mxu0 0.0
    %1240 = vmatprep.subr.mxu0 0.0
    %1241 = vmatpush1.msra.mxu0 0.0
    %1242 = vmatprep.subr.mxu0 0.0
    %1243 = vmatpush1.msra.mxu0 0.0
    %1244 = vmatprep.subr.mxu0 0.0
    %1245 = vmatpush1.msra.mxu0 0.0
    %1246 = vmatprep.subr.mxu0 0.0
    %1247 = vmatpush1.msra.mxu0 0.0
    %1248 = vmatprep.subr.mxu0 0.0
    %1249 = vmatpush1.msra.mxu0 0.0
    %1250 = vmatprep.subr.mxu0 0.0
    %1251 = vmatpush1.msra.mxu0 0.0
    %1252 = vmatprep.subr.mxu0 0.0
    %1253 = vmatpush1.msra.mxu0 0.0
    %1254 = vmatprep.subr.mxu0 0.0
    %1255 = vmatpush1.msra.mxu0 0.0
    %1256 = vmatprep.subr.mxu0 0.0
    %1257 = vmatpush1.msra.mxu0 0.0
    %1258 = vmatprep.subr.mxu0 0.0
    %1259 = vmatpush1.msra.mxu0 0.0
    %1260 = vmatprep.subr.mxu0 0.0
    %1261 = vmatpush1.msra.mxu0 0.0
    %1262 = vmatprep.subr.mxu0 0.0
    %1263 = vmatpush1.msra.mxu0 0.0
    %1264 = vmatprep.subr.mxu0 0.0
    %1265 = vmatpush1.msra.mxu0 0.0
    %1266 = vmatprep.subr.mxu0 0.0
    %1267 = vmatpush1.msra.mxu0 0.0
    %1268 = vmatprep.subr.mxu0 0.0
    %1269 = vmatpush1.msra.mxu0 0.0
    %1270 = vmatprep.subr.mxu0 0.0
    %1271 = vmatpush1.msra.mxu0 0.0
    %1272 = vmatprep.subr.mxu0 0.0
    %1273 = vmatpush1.msra.mxu0 0.0
    %1274 = vmatprep.subr.mxu0 0.0
    %1275 = vmatpush1.msra.mxu0 0.0
    %1276 = vmatprep.subr.mxu0 0.0
    %1277 = vmatpush1.msra.mxu0 0.0
    %1278 = vmatprep.subr.mxu0 0.0
    %1279 = vmatpush1.msra.mxu0 0.0
    %1280 = vmatprep.subr.mxu0 0.0
    %1281 = vmatpush1.msra.mxu0 0.0
    %1282 = vmatprep.subr.mxu0 0.0
    %1283 = vmatpush1.msra.mxu0 0.0
    %1284 = vmatprep.mubr.f32.mxu0 0.0
    %1285 = vmatmul.mubr.f32.gmra.mrb[0].mxu0 %v1215
    %v1286 = vpop.f32.mrb[0].mxu0
    %v1287 = vadd.f32 0.0, %v1286
    %v1288 = vpop.f32.mrb[0].mxu0
    %1289 = vmatprep.mubr.f32.mxu0 0.0
    %1290 = vmatmul.mubr.f32.gmra.mrb[0].mxu0 %v1218
    %v1291 = vpop.f32.mrb[0].mxu0
    %v1292 = vadd.f32 0.0, %v1291
    %v1293 = vpop.f32.mrb[0].mxu0
    %1294 = vdwg.mxu0
    %v1295 = vadd.f32 %v1200, %v1287
    %v1296 = vadd.f32 %v1205, %v1292
    %1297 = vrot.lane.b32.xlu0 %v603, 32
    %v1298 = vpop.permute.xlu0 %1297
    %1299 = vrot.lane.b32.xlu0 %v608, 32
    %v1300 = vpop.permute.xlu0 %1299
    %v1304 = vsel %vm949, %v1036, 0
    %v1307 = vsel %vm949, %v1037, 0
    %1309 = vmatprep.subr.mxu0 0.0
    %1310 = vmatpush1.msra.mxu0 %v1298
    %1311 = vmatprep.subr.mxu0 0.0
    %1312 = vmatpush1.msra.mxu0 %v1300
    %1313 = vmatprep.subr.mxu0 0.0
    %1314 = vmatpush1.msra.mxu0 0.0
    %1315 = vmatprep.subr.mxu0 0.0
    %1316 = vmatpush1.msra.mxu0 0.0
    %1317 = vmatprep.subr.mxu0 0.0
    %1318 = vmatpush1.msra.mxu0 0.0
    %1319 = vmatprep.subr.mxu0 0.0
    %1320 = vmatpush1.msra.mxu0 0.0
    %1321 = vmatprep.subr.mxu0 0.0
    %1322 = vmatpush1.msra.mxu0 0.0
    %1323 = vmatprep.subr.mxu0 0.0
    %1324 = vmatpush1.msra.mxu0 0.0
    %1325 = vmatprep.subr.mxu0 0.0
    %1326 = vmatpush1.msra.mxu0 0.0
    %1327 = vmatprep.subr.mxu0 0.0
    %1328 = vmatpush1.msra.mxu0 0.0
    %1329 = vmatprep.subr.mxu0 0.0
    %1330 = vmatpush1.msra.mxu0 0.0
    %1331 = vmatprep.subr.mxu0 0.0
    %1332 = vmatpush1.msra.mxu0 0.0
    %1333 = vmatprep.subr.mxu0 0.0
    %1334 = vmatpush1.msra.mxu0 0.0
    %1335 = vmatprep.subr.mxu0 0.0
    %1336 = vmatpush1.msra.mxu0 0.0
    %1337 = vmatprep.subr.mxu0 0.0
    %1338 = vmatpush1.msra.mxu0 0.0
    %1339 = vmatprep.subr.mxu0 0.0
    %1340 = vmatpush1.msra.mxu0 0.0
    %1341 = vmatprep.subr.mxu0 0.0
    %1342 = vmatpush1.msra.mxu0 0.0
    %1343 = vmatprep.subr.mxu0 0.0
    %1344 = vmatpush1.msra.mxu0 0.0
    %1345 = vmatprep.subr.mxu0 0.0
    %1346 = vmatpush1.msra.mxu0 0.0
    %1347 = vmatprep.subr.mxu0 0.0
    %1348 = vmatpush1.msra.mxu0 0.0
    %1349 = vmatprep.subr.mxu0 0.0
    %1350 = vmatpush1.msra.mxu0 0.0
    %1351 = vmatprep.subr.mxu0 0.0
    %1352 = vmatpush1.msra.mxu0 0.0
    %1353 = vmatprep.subr.mxu0 0.0
    %1354 = vmatpush1.msra.mxu0 0.0
    %1355 = vmatprep.subr.mxu0 0.0
    %1356 = vmatpush1.msra.mxu0 0.0
    %1357 = vmatprep.subr.mxu0 0.0
    %1358 = vmatpush1.msra.mxu0 0.0
    %1359 = vmatprep.subr.mxu0 0.0
    %1360 = vmatpush1.msra.mxu0 0.0
    %1361 = vmatprep.subr.mxu0 0.0
    %1362 = vmatpush1.msra.mxu0 0.0
    %1363 = vmatprep.subr.mxu0 0.0
    %1364 = vmatpush1.msra.mxu0 0.0
    %1365 = vmatprep.subr.mxu0 0.0
    %1366 = vmatpush1.msra.mxu0 0.0
    %1367 = vmatprep.subr.mxu0 0.0
    %1368 = vmatpush1.msra.mxu0 0.0
    %1369 = vmatprep.subr.mxu0 0.0
    %1370 = vmatpush1.msra.mxu0 0.0
    %1371 = vmatprep.subr.mxu0 0.0
    %1372 = vmatpush1.msra.mxu0 0.0
    %1373 = vmatprep.mubr.f32.mxu0 0.0
    %1374 = vmatmul.mubr.f32.gmra.mrb[0].mxu0 %v1304
    %v1375 = vpop.f32.mrb[0].mxu0
    %v1376 = vadd.f32 0.0, %v1375
    %v1377 = vpop.f32.mrb[0].mxu0
    %1378 = vmatprep.mubr.f32.mxu0 0.0
    %1379 = vmatmul.mubr.f32.gmra.mrb[0].mxu0 %v1307
    %v1380 = vpop.f32.mrb[0].mxu0
    %v1381 = vadd.f32 0.0, %v1380
    %v1382 = vpop.f32.mrb[0].mxu0
    %1383 = vdwg.mxu0
    %v1384 = vadd.f32 %v1295, %v1376
    %v1385 = vadd.f32 %v1296, %v1381
    %v1386 = vlaneseq
    %v1387 = vshrl.u32 %v1386, 7
    %v1388 = vsub.s32 0, %v1387
    %v1389 = vrot.slane %v426, %v1388
    %v1390 = vadd.f32 %v1384, %v1389
    %v1391 = vadd.f32 %v1385, %v1389
    %v1392 = vadd.f32 %v153, %v1390
    %v1393 = vadd.f32 %v154, %v1391
    %v1394 = vmul.f32 %v1392, %v1392
    %v1395 = vmul.f32 %v1393, %v1393
    %v1396 = vsel %vm324, %v1392, 0.0
    %1397 = vadd.xlane.f32.xlu0 %v1396
    %v1398 = vpop.xlane.xlu0 %1397
    %v1399 = vsel %vm324, %v1393, 0.0
    %1400 = vadd.xlane.f32.xlu0 %v1399
    %v1401 = vpop.xlane.xlu0 %1400
    %v1402 = vsel %vm324, %v1394, 0.0
    %1403 = vadd.xlane.f32.xlu0 %v1402
    %v1404 = vpop.xlane.xlu0 %1403
    %v1405 = vsel %vm324, %v1395, 0.0
    %1406 = vadd.xlane.f32.xlu0 %v1405
    %v1407 = vpop.xlane.xlu0 %1406
    %v1408 = vmul.f32 %v1398, 0.03125
    %v1409 = vmul.f32 %v1401, 0.03125
    %v1410 = vmul.f32 %v1404, 0.03125
    %v1411 = vmul.f32 %v1407, 0.03125
    %v1412 = vmul.f32 %v1408, %v1408
    %v1413 = vmul.f32 %v1409, %v1409
    %v1414 = vsub.f32 %v1410, %v1412
    %v1415 = vsub.f32 %v1411, %v1413
    %v1416 = vsub.f32 %v1392, %v1408
    %v1417 = vsub.f32 %v1393, %v1409
    %v1418 = vadd.f32 %v1414, 1e-05
    %v1419 = vadd.f32 %v1415, 1e-05
    %v1420 = vrsqrt.pop %v1418
    %v1421 = vrsqrt.pop %v1419
    %v1422 = vmul.f32 %v1416, %v1420
    %v1423 = vmul.f32 %v1417, %v1421
    %v1424 = vlaneseq
    %v1425 = vshrl.u32 %v1424, 7
    %v1426 = vsub.s32 3, %v1425
    %v1427 = vrot.slane %v426, %v1426
    %v1428 = vmul.f32 %v1422, %v1427
    %v1429 = vmul.f32 %v1423, %v1427
    %v1430 = vlaneseq
    %v1431 = vshrl.u32 %v1430, 7
    %v1432 = vsub.s32 4, %v1431
    %v1433 = vrot.slane %v426, %v1432
    %v1434 = vadd.f32 %v1428, %v1433
    %v1435 = vadd.f32 %v1429, %v1433
    %v1436 = vadd.f32 %v1434, %v159
    %v1437 = vadd.f32 %v1435, %v160
    %v1438 = vld [vmem:[%s5] sm:$0xff]
    %v1439 = vld [vmem:[%s5 + $0x8] sm:$0xff]
    %v1440 = vld [vmem:[%s5 + $0x10] sm:$0xff]
    %v1441 = vld [vmem:[%s5 + $0x18] sm:$0xff]
    %v1442 = vlaneseq
    %v1443 = vshrl.u32 %v1442, 7
    %v1444 = vsub.s32 2, %v1443
    %v1445 = vrot.slane %v428, %v1444
    %v1447 = vsel %vm324, %v1436, 0
    %v1450 = vsel %vm324, %v1437, 0
    %1452 = vmatprep.subr.mxu0 0.0
    %1453 = vmatpush1.msra.mxu0 %v1438
    %1454 = vmatprep.subr.mxu0 0.0
    %1455 = vmatpush1.msra.mxu0 %v1439
    %1456 = vmatprep.subr.mxu0 0.0
    %1457 = vmatpush1.msra.mxu0 %v1440
    %1458 = vmatprep.subr.mxu0 0.0
    %1459 = vmatpush1.msra.mxu0 %v1441
    %1460 = vmatprep.subr.mxu0 0.0
    %1461 = vmatpush1.msra.mxu0 0.0
    %1462 = vmatprep.subr.mxu0 0.0
    %1463 = vmatpush1.msra.mxu0 0.0
    %1464 = vmatprep.subr.mxu0 0.0
    %1465 = vmatpush1.msra.mxu0 0.0
    %1466 = vmatprep.subr.mxu0 0.0
    %1467 = vmatpush1.msra.mxu0 0.0
    %1468 = vmatprep.subr.mxu0 0.0
    %1469 = vmatpush1.msra.mxu0 0.0
    %1470 = vmatprep.subr.mxu0 0.0
    %1471 = vmatpush1.msra.mxu0 0.0
    %1472 = vmatprep.subr.mxu0 0.0
    %1473 = vmatpush1.msra.mxu0 0.0
    %1474 = vmatprep.subr.mxu0 0.0
    %1475 = vmatpush1.msra.mxu0 0.0
    %1476 = vmatprep.subr.mxu0 0.0
    %1477 = vmatpush1.msra.mxu0 0.0
    %1478 = vmatprep.subr.mxu0 0.0
    %1479 = vmatpush1.msra.mxu0 0.0
    %1480 = vmatprep.subr.mxu0 0.0
    %1481 = vmatpush1.msra.mxu0 0.0
    %1482 = vmatprep.subr.mxu0 0.0
    %1483 = vmatpush1.msra.mxu0 0.0
    %1484 = vmatprep.subr.mxu0 0.0
    %1485 = vmatpush1.msra.mxu0 0.0
    %1486 = vmatprep.subr.mxu0 0.0
    %1487 = vmatpush1.msra.mxu0 0.0
    %1488 = vmatprep.subr.mxu0 0.0
    %1489 = vmatpush1.msra.mxu0 0.0
    %1490 = vmatprep.subr.mxu0 0.0
    %1491 = vmatpush1.msra.mxu0 0.0
    %1492 = vmatprep.subr.mxu0 0.0
    %1493 = vmatpush1.msra.mxu0 0.0
    %1494 = vmatprep.subr.mxu0 0.0
    %1495 = vmatpush1.msra.mxu0 0.0
    %1496 = vmatprep.subr.mxu0 0.0
    %1497 = vmatpush1.msra.mxu0 0.0
    %1498 = vmatprep.subr.mxu0 0.0
    %1499 = vmatpush1.msra.mxu0 0.0
    %1500 = vmatprep.subr.mxu0 0.0
    %1501 = vmatpush1.msra.mxu0 0.0
    %1502 = vmatprep.subr.mxu0 0.0
    %1503 = vmatpush1.msra.mxu0 0.0
    %1504 = vmatprep.subr.mxu0 0.0
    %1505 = vmatpush1.msra.mxu0 0.0
    %1506 = vmatprep.subr.mxu0 0.0
    %1507 = vmatpush1.msra.mxu0 0.0
    %1508 = vmatprep.subr.mxu0 0.0
    %1509 = vmatpush1.msra.mxu0 0.0
    %1510 = vmatprep.subr.mxu0 0.0
    %1511 = vmatpush1.msra.mxu0 0.0
    %1512 = vmatprep.subr.mxu0 0.0
    %1513 = vmatpush1.msra.mxu0 0.0
    %1514 = vmatprep.subr.mxu0 0.0
    %1515 = vmatpush1.msra.mxu0 0.0
    %1516 = vmatprep.mubr.f32.mxu0 0.0
    %1517 = vmatmul.mubr.f32.gmra.mrb[0].mxu0 %v1447
    %v1518 = vpop.f32.mrb[0].mxu0
    %v1519 = vadd.f32 %v1445, %v1518
    %v1520 = vpop.f32.mrb[0].mxu0
    %1521 = vmatprep.mubr.f32.mxu0 0.0
    %1522 = vmatmul.mubr.f32.gmra.mrb[0].mxu0 %v1450
    %v1523 = vpop.f32.mrb[0].mxu0
    %v1524 = vadd.f32 %v1445, %v1523
    %v1525 = vpop.f32.mrb[0].mxu0
    %1526 = vdwg.mxu0
    %v1528 = vsel %vm324, %v1519, 0
    %v1531 = vsel %vm324, %v1524, 0
    %v1534 = vsel %vm324, %v165, 0
    %v1537 = vsel %vm324, %v166, 0
    %v1540 = vsel %vm324, %v167, 0
    %v1543 = vsel %vm324, %v168, 0
    %1545 = vmatprep.subr.mxu0 0.0
    %1546 = vmatpush1.xpose.msra.mxu0 %v1534
    %1547 = vmatprep.subr.mxu0 0.0
    %1548 = vmatpush1.xpose.msra.mxu0 %v1537
    %1549 = vmatprep.subr.mxu0 0.0
    %1550 = vmatpush1.xpose.msra.mxu0 %v1540
    %1551 = vmatprep.subr.mxu0 0.0
    %1552 = vmatpush1.xpose.msra.mxu0 %v1543
    %1553 = vmatprep.subr.mxu0 0.0
    %1554 = vmatpush1.xpose.msra.mxu0 0.0
    %1555 = vmatprep.subr.mxu0 0.0
    %1556 = vmatpush1.xpose.msra.mxu0 0.0
    %1557 = vmatprep.subr.mxu0 0.0
    %1558 = vmatpush1.xpose.msra.mxu0 0.0
    %1559 = vmatprep.subr.mxu0 0.0
    %1560 = vmatpush1.xpose.msra.mxu0 0.0
    %1561 = vmatprep.subr.mxu0 0.0
    %1562 = vmatpush1.xpose.msra.mxu0 0.0
    %1563 = vmatprep.subr.mxu0 0.0
    %1564 = vmatpush1.xpose.msra.mxu0 0.0
    %1565 = vmatprep.subr.mxu0 0.0
    %1566 = vmatpush1.xpose.msra.mxu0 0.0
    %1567 = vmatprep.subr.mxu0 0.0
    %1568 = vmatpush1.xpose.msra.mxu0 0.0
    %1569 = vmatprep.subr.mxu0 0.0
    %1570 = vmatpush1.xpose.msra.mxu0 0.0
    %1571 = vmatprep.subr.mxu0 0.0
    %1572 = vmatpush1.xpose.msra.mxu0 0.0
    %1573 = vmatprep.subr.mxu0 0.0
    %1574 = vmatpush1.xpose.msra.mxu0 0.0
    %1575 = vmatprep.subr.mxu0 0.0
    %1576 = vmatpush1.xpose.msra.mxu0 0.0
    %1577 = vmatprep.subr.mxu0 0.0
    %1578 = vmatpush1.xpose.msra.mxu0 0.0
    %1579 = vmatprep.subr.mxu0 0.0
    %1580 = vmatpush1.xpose.msra.mxu0 0.0
    %1581 = vmatprep.subr.mxu0 0.0
    %1582 = vmatpush1.xpose.msra.mxu0 0.0
    %1583 = vmatprep.subr.mxu0 0.0
    %1584 = vmatpush1.xpose.msra.mxu0 0.0
    %1585 = vmatprep.subr.mxu0 0.0
    %1586 = vmatpush1.xpose.msra.mxu0 0.0
    %1587 = vmatprep.subr.mxu0 0.0
    %1588 = vmatpush1.xpose.msra.mxu0 0.0
    %1589 = vmatprep.subr.mxu0 0.0
    %1590 = vmatpush1.xpose.msra.mxu0 0.0
    %1591 = vmatprep.subr.mxu0 0.0
    %1592 = vmatpush1.xpose.msra.mxu0 0.0
    %1593 = vmatprep.subr.mxu0 0.0
    %1594 = vmatpush1.xpose.msra.mxu0 0.0
    %1595 = vmatprep.subr.mxu0 0.0
    %1596 = vmatpush1.xpose.msra.mxu0 0.0
    %1597 = vmatprep.subr.mxu0 0.0
    %1598 = vmatpush1.xpose.msra.mxu0 0.0
    %1599 = vmatprep.subr.mxu0 0.0
    %1600 = vmatpush1.xpose.msra.mxu0 0.0
    %1601 = vmatprep.subr.mxu0 0.0
    %1602 = vmatpush1.xpose.msra.mxu0 0.0
    %1603 = vmatprep.subr.mxu0 0.0
    %1604 = vmatpush1.xpose.msra.mxu0 0.0
    %1605 = vmatprep.subr.mxu0 0.0
    %1606 = vmatpush1.xpose.msra.mxu0 0.0
    %1607 = vmatprep.subr.mxu0 0.0
    %1608 = vmatpush1.xpose.msra.mxu0 0.0
    %1609 = vmatprep.mubr.f32.mxu0 0.0
    %1610 = vmatmul.mubr.f32.gmra.mrb[0].mxu0 %v1528
    %v1611 = vpop.f32.mrb[0].mxu0
    %v1612 = vadd.f32 0.0, %v1611
    %v1613 = vpop.f32.mrb[0].mxu0
    %1614 = vmatprep.mubr.f32.mxu0 0.0
    %1615 = vmatmul.mubr.f32.gmra.mrb[0].mxu0 %v1531
    %v1616 = vpop.f32.mrb[0].mxu0
    %v1617 = vadd.f32 0.0, %v1616
    %v1618 = vpop.f32.mrb[0].mxu0
    %1619 = vdwg.mxu0
    %1620 = vrot.lane.b32.xlu0 %v1519, 96
    %v1621 = vpop.permute.xlu0 %1620
    %1622 = vrot.lane.b32.xlu0 %v1524, 96
    %v1623 = vpop.permute.xlu0 %1622
    %v1624 = vsel %vm324, %v1621, 0
    %v1626 = vsel %vm324, %v1623, 0
    %1628 = vmatprep.subr.mxu0 0.0
    %1629 = vmatpush1.xpose.msra.mxu0 %v1534
    %1630 = vmatprep.subr.mxu0 0.0
    %1631 = vmatpush1.xpose.msra.mxu0 %v1537
    %1632 = vmatprep.subr.mxu0 0.0
    %1633 = vmatpush1.xpose.msra.mxu0 %v1540
    %1634 = vmatprep.subr.mxu0 0.0
    %1635 = vmatpush1.xpose.msra.mxu0 %v1543
    %1636 = vmatprep.subr.mxu0 0.0
    %1637 = vmatpush1.xpose.msra.mxu0 0.0
    %1638 = vmatprep.subr.mxu0 0.0
    %1639 = vmatpush1.xpose.msra.mxu0 0.0
    %1640 = vmatprep.subr.mxu0 0.0
    %1641 = vmatpush1.xpose.msra.mxu0 0.0
    %1642 = vmatprep.subr.mxu0 0.0
    %1643 = vmatpush1.xpose.msra.mxu0 0.0
    %1644 = vmatprep.subr.mxu0 0.0
    %1645 = vmatpush1.xpose.msra.mxu0 0.0
    %1646 = vmatprep.subr.mxu0 0.0
    %1647 = vmatpush1.xpose.msra.mxu0 0.0
    %1648 = vmatprep.subr.mxu0 0.0
    %1649 = vmatpush1.xpose.msra.mxu0 0.0
    %1650 = vmatprep.subr.mxu0 0.0
    %1651 = vmatpush1.xpose.msra.mxu0 0.0
    %1652 = vmatprep.subr.mxu0 0.0
    %1653 = vmatpush1.xpose.msra.mxu0 0.0
    %1654 = vmatprep.subr.mxu0 0.0
    %1655 = vmatpush1.xpose.msra.mxu0 0.0
    %1656 = vmatprep.subr.mxu0 0.0
    %1657 = vmatpush1.xpose.msra.mxu0 0.0
    %1658 = vmatprep.subr.mxu0 0.0
    %1659 = vmatpush1.xpose.msra.mxu0 0.0
    %1660 = vmatprep.subr.mxu0 0.0
    %1661 = vmatpush1.xpose.msra.mxu0 0.0
    %1662 = vmatprep.subr.mxu0 0.0
    %1663 = vmatpush1.xpose.msra.mxu0 0.0
    %1664 = vmatprep.subr.mxu0 0.0
    %1665 = vmatpush1.xpose.msra.mxu0 0.0
    %1666 = vmatprep.subr.mxu0 0.0
    %1667 = vmatpush1.xpose.msra.mxu0 0.0
    %1668 = vmatprep.subr.mxu0 0.0
    %1669 = vmatpush1.xpose.msra.mxu0 0.0
    %1670 = vmatprep.subr.mxu0 0.0
    %1671 = vmatpush1.xpose.msra.mxu0 0.0
    %1672 = vmatprep.subr.mxu0 0.0
    %1673 = vmatpush1.xpose.msra.mxu0 0.0
    %1674 = vmatprep.subr.mxu0 0.0
    %1675 = vmatpush1.xpose.msra.mxu0 0.0
    %1676 = vmatprep.subr.mxu0 0.0
    %1677 = vmatpush1.xpose.msra.mxu0 0.0
    %1678 = vmatprep.subr.mxu0 0.0
    %1679 = vmatpush1.xpose.msra.mxu0 0.0
    %1680 = vmatprep.subr.mxu0 0.0
    %1681 = vmatpush1.xpose.msra.mxu0 0.0
    %1682 = vmatprep.subr.mxu0 0.0
    %1683 = vmatpush1.xpose.msra.mxu0 0.0
    %1684 = vmatprep.subr.mxu0 0.0
    %1685 = vmatpush1.xpose.msra.mxu0 0.0
    %1686 = vmatprep.subr.mxu0 0.0
    %1687 = vmatpush1.xpose.msra.mxu0 0.0
    %1688 = vmatprep.subr.mxu0 0.0
    %1689 = vmatpush1.xpose.msra.mxu0 0.0
    %1690 = vmatprep.subr.mxu0 0.0
    %1691 = vmatpush1.xpose.msra.mxu0 0.0
    %1692 = vmatprep.mubr.f32.mxu0 0.0
    %1693 = vmatmul.mubr.f32.gmra.mrb[0].mxu0 %v1624
    %v1694 = vpop.f32.mrb[0].mxu0
    %v1695 = vadd.f32 0.0, %v1694
    %v1696 = vpop.f32.mrb[0].mxu0
    %1697 = vmatprep.mubr.f32.mxu0 0.0
    %1698 = vmatmul.mubr.f32.gmra.mrb[0].mxu0 %v1626
    %v1699 = vpop.f32.mrb[0].mxu0
    %v1700 = vadd.f32 0.0, %v1699
    %v1701 = vpop.f32.mrb[0].mxu0
    %1702 = vdwg.mxu0
    %1703 = vrot.lane.b32.xlu0 %v1519, 64
    %v1704 = vpop.permute.xlu0 %1703
    %1705 = vrot.lane.b32.xlu0 %v1524, 64
    %v1706 = vpop.permute.xlu0 %1705
    %v1707 = vsel %vm324, %v1704, 0
    %v1709 = vsel %vm324, %v1706, 0
    %1711 = vmatprep.subr.mxu0 0.0
    %1712 = vmatpush1.xpose.msra.mxu0 %v1534
    %1713 = vmatprep.subr.mxu0 0.0
    %1714 = vmatpush1.xpose.msra.mxu0 %v1537
    %1715 = vmatprep.subr.mxu0 0.0
    %1716 = vmatpush1.xpose.msra.mxu0 %v1540
    %1717 = vmatprep.subr.mxu0 0.0
    %1718 = vmatpush1.xpose.msra.mxu0 %v1543
    %1719 = vmatprep.subr.mxu0 0.0
    %1720 = vmatpush1.xpose.msra.mxu0 0.0
    %1721 = vmatprep.subr.mxu0 0.0
    %1722 = vmatpush1.xpose.msra.mxu0 0.0
    %1723 = vmatprep.subr.mxu0 0.0
    %1724 = vmatpush1.xpose.msra.mxu0 0.0
    %1725 = vmatprep.subr.mxu0 0.0
    %1726 = vmatpush1.xpose.msra.mxu0 0.0
    %1727 = vmatprep.subr.mxu0 0.0
    %1728 = vmatpush1.xpose.msra.mxu0 0.0
    %1729 = vmatprep.subr.mxu0 0.0
    %1730 = vmatpush1.xpose.msra.mxu0 0.0
    %1731 = vmatprep.subr.mxu0 0.0
    %1732 = vmatpush1.xpose.msra.mxu0 0.0
    %1733 = vmatprep.subr.mxu0 0.0
    %1734 = vmatpush1.xpose.msra.mxu0 0.0
    %1735 = vmatprep.subr.mxu0 0.0
    %1736 = vmatpush1.xpose.msra.mxu0 0.0
    %1737 = vmatprep.subr.mxu0 0.0
    %1738 = vmatpush1.xpose.msra.mxu0 0.0
    %1739 = vmatprep.subr.mxu0 0.0
    %1740 = vmatpush1.xpose.msra.mxu0 0.0
    %1741 = vmatprep.subr.mxu0 0.0
    %1742 = vmatpush1.xpose.msra.mxu0 0.0
    %1743 = vmatprep.subr.mxu0 0.0
    %1744 = vmatpush1.xpose.msra.mxu0 0.0
    %1745 = vmatprep.subr.mxu0 0.0
    %1746 = vmatpush1.xpose.msra.mxu0 0.0
    %1747 = vmatprep.subr.mxu0 0.0
    %1748 = vmatpush1.xpose.msra.mxu0 0.0
    %1749 = vmatprep.subr.mxu0 0.0
    %1750 = vmatpush1.xpose.msra.mxu0 0.0
    %1751 = vmatprep.subr.mxu0 0.0
    %1752 = vmatpush1.xpose.msra.mxu0 0.0
    %1753 = vmatprep.subr.mxu0 0.0
    %1754 = vmatpush1.xpose.msra.mxu0 0.0
    %1755 = vmatprep.subr.mxu0 0.0
    %1756 = vmatpush1.xpose.msra.mxu0 0.0
    %1757 = vmatprep.subr.mxu0 0.0
    %1758 = vmatpush1.xpose.msra.mxu0 0.0
    %1759 = vmatprep.subr.mxu0 0.0
    %1760 = vmatpush1.xpose.msra.mxu0 0.0
    %1761 = vmatprep.subr.mxu0 0.0
    %1762 = vmatpush1.xpose.msra.mxu0 0.0
    %1763 = vmatprep.subr.mxu0 0.0
    %1764 = vmatpush1.xpose.msra.mxu0 0.0
    %1765 = vmatprep.subr.mxu0 0.0
    %1766 = vmatpush1.xpose.msra.mxu0 0.0
    %1767 = vmatprep.subr.mxu0 0.0
    %1768 = vmatpush1.xpose.msra.mxu0 0.0
    %1769 = vmatprep.subr.mxu0 0.0
    %1770 = vmatpush1.xpose.msra.mxu0 0.0
    %1771 = vmatprep.subr.mxu0 0.0
    %1772 = vmatpush1.xpose.msra.mxu0 0.0
    %1773 = vmatprep.subr.mxu0 0.0
    %1774 = vmatpush1.xpose.msra.mxu0 0.0
    %1775 = vmatprep.mubr.f32.mxu0 0.0
    %1776 = vmatmul.mubr.f32.gmra.mrb[0].mxu0 %v1707
    %v1777 = vpop.f32.mrb[0].mxu0
    %v1778 = vadd.f32 0.0, %v1777
    %v1779 = vpop.f32.mrb[0].mxu0
    %1780 = vmatprep.mubr.f32.mxu0 0.0
    %1781 = vmatmul.mubr.f32.gmra.mrb[0].mxu0 %v1709
    %v1782 = vpop.f32.mrb[0].mxu0
    %v1783 = vadd.f32 0.0, %v1782
    %v1784 = vpop.f32.mrb[0].mxu0
    %1785 = vdwg.mxu0
    %1786 = vrot.lane.b32.xlu0 %v1519, 32
    %v1787 = vpop.permute.xlu0 %1786
    %1788 = vrot.lane.b32.xlu0 %v1524, 32
    %v1789 = vpop.permute.xlu0 %1788
    %v1790 = vsel %vm324, %v1787, 0
    %v1792 = vsel %vm324, %v1789, 0
    %1794 = vmatprep.subr.mxu0 0.0
    %1795 = vmatpush1.xpose.msra.mxu0 %v1534
    %1796 = vmatprep.subr.mxu0 0.0
    %1797 = vmatpush1.xpose.msra.mxu0 %v1537
    %1798 = vmatprep.subr.mxu0 0.0
    %1799 = vmatpush1.xpose.msra.mxu0 %v1540
    %1800 = vmatprep.subr.mxu0 0.0
    %1801 = vmatpush1.xpose.msra.mxu0 %v1543
    %1802 = vmatprep.subr.mxu0 0.0
    %1803 = vmatpush1.xpose.msra.mxu0 0.0
    %1804 = vmatprep.subr.mxu0 0.0
    %1805 = vmatpush1.xpose.msra.mxu0 0.0
    %1806 = vmatprep.subr.mxu0 0.0
    %1807 = vmatpush1.xpose.msra.mxu0 0.0
    %1808 = vmatprep.subr.mxu0 0.0
    %1809 = vmatpush1.xpose.msra.mxu0 0.0
    %1810 = vmatprep.subr.mxu0 0.0
    %1811 = vmatpush1.xpose.msra.mxu0 0.0
    %1812 = vmatprep.subr.mxu0 0.0
    %1813 = vmatpush1.xpose.msra.mxu0 0.0
    %1814 = vmatprep.subr.mxu0 0.0
    %1815 = vmatpush1.xpose.msra.mxu0 0.0
    %1816 = vmatprep.subr.mxu0 0.0
    %1817 = vmatpush1.xpose.msra.mxu0 0.0
    %1818 = vmatprep.subr.mxu0 0.0
    %1819 = vmatpush1.xpose.msra.mxu0 0.0
    %1820 = vmatprep.subr.mxu0 0.0
    %1821 = vmatpush1.xpose.msra.mxu0 0.0
    %1822 = vmatprep.subr.mxu0 0.0
    %1823 = vmatpush1.xpose.msra.mxu0 0.0
    %1824 = vmatprep.subr.mxu0 0.0
    %1825 = vmatpush1.xpose.msra.mxu0 0.0
    %1826 = vmatprep.subr.mxu0 0.0
    %1827 = vmatpush1.xpose.msra.mxu0 0.0
    %1828 = vmatprep.subr.mxu0 0.0
    %1829 = vmatpush1.xpose.msra.mxu0 0.0
    %1830 = vmatprep.subr.mxu0 0.0
    %1831 = vmatpush1.xpose.msra.mxu0 0.0
    %1832 = vmatprep.subr.mxu0 0.0
    %1833 = vmatpush1.xpose.msra.mxu0 0.0
    %1834 = vmatprep.subr.mxu0 0.0
    %1835 = vmatpush1.xpose.msra.mxu0 0.0
    %1836 = vmatprep.subr.mxu0 0.0
    %1837 = vmatpush1.xpose.msra.mxu0 0.0
    %1838 = vmatprep.subr.mxu0 0.0
    %1839 = vmatpush1.xpose.msra.mxu0 0.0
    %1840 = vmatprep.subr.mxu0 0.0
    %1841 = vmatpush1.xpose.msra.mxu0 0.0
    %1842 = vmatprep.subr.mxu0 0.0
    %1843 = vmatpush1.xpose.msra.mxu0 0.0
    %1844 = vmatprep.subr.mxu0 0.0
    %1845 = vmatpush1.xpose.msra.mxu0 0.0
    %1846 = vmatprep.subr.mxu0 0.0
    %1847 = vmatpush1.xpose.msra.mxu0 0.0
    %1848 = vmatprep.subr.mxu0 0.0
    %1849 = vmatpush1.xpose.msra.mxu0 0.0
    %1850 = vmatprep.subr.mxu0 0.0
    %1851 = vmatpush1.xpose.msra.mxu0 0.0
    %1852 = vmatprep.subr.mxu0 0.0
    %1853 = vmatpush1.xpose.msra.mxu0 0.0
    %1854 = vmatprep.subr.mxu0 0.0
    %1855 = vmatpush1.xpose.msra.mxu0 0.0
    %1856 = vmatprep.subr.mxu0 0.0
    %1857 = vmatpush1.xpose.msra.mxu0 0.0
    %1858 = vmatprep.mubr.f32.mxu0 0.0
    %1859 = vmatmul.mubr.f32.gmra.mrb[0].mxu0 %v1790
    %v1860 = vpop.f32.mrb[0].mxu0
    %v1861 = vadd.f32 0.0, %v1860
    %v1862 = vpop.f32.mrb[0].mxu0
    %1863 = vmatprep.mubr.f32.mxu0 0.0
    %1864 = vmatmul.mubr.f32.gmra.mrb[0].mxu0 %v1792
    %v1865 = vpop.f32.mrb[0].mxu0
    %v1866 = vadd.f32 0.0, %v1865
    %v1867 = vpop.f32.mrb[0].mxu0
    %1868 = vdwg.mxu0
    %v1869 = vadd.f32 %v1612, %v296
    %v1870 = vadd.f32 %v1617, %v297
    %v1871 = vadd.f32 %v1695, %v298
    %v1872 = vadd.f32 %v1700, %v299
    %v1873 = vadd.f32 %v1778, %v300
    %v1874 = vadd.f32 %v1783, %v301
    %v1875 = vadd.f32 %v1861, %v302
    %v1876 = vadd.f32 %v1866, %v303
    %v1877 = vsel %vm324, %v1869, -inf
    %1878 = vmax.xlane.f32.xlu0 %v1877
    %v1879 = vpop.xlane.xlu0 %1878
    %v1880 = vsel %vm324, %v1870, -inf
    %1881 = vmax.xlane.f32.xlu0 %v1880
    %v1882 = vpop.xlane.xlu0 %1881
    %v1883 = vsel %vm324, %v1871, -inf
    %1884 = vmax.xlane.f32.xlu0 %v1883
    %v1885 = vpop.xlane.xlu0 %1884
    %v1886 = vsel %vm324, %v1872, -inf
    %1887 = vmax.xlane.f32.xlu0 %v1886
    %v1888 = vpop.xlane.xlu0 %1887
    %v1889 = vsel %vm324, %v1873, -inf
    %1890 = vmax.xlane.f32.xlu0 %v1889
    %v1891 = vpop.xlane.xlu0 %1890
    %v1892 = vsel %vm324, %v1874, -inf
    %1893 = vmax.xlane.f32.xlu0 %v1892
    %v1894 = vpop.xlane.xlu0 %1893
    %v1895 = vsel %vm324, %v1875, -inf
    %1896 = vmax.xlane.f32.xlu0 %v1895
    %v1897 = vpop.xlane.xlu0 %1896
    %v1898 = vsel %vm324, %v1876, -inf
    %1899 = vmax.xlane.f32.xlu0 %v1898
    %v1900 = vpop.xlane.xlu0 %1899
    %v1901 = vsub.f32 %v1869, %v1879
    %v1902 = vsub.f32 %v1870, %v1882
    %v1903 = vsub.f32 %v1871, %v1885
    %v1904 = vsub.f32 %v1872, %v1888
    %v1905 = vsub.f32 %v1873, %v1891
    %v1906 = vsub.f32 %v1874, %v1894
    %v1907 = vsub.f32 %v1875, %v1897
    %v1908 = vsub.f32 %v1876, %v1900
    %v1909 = vmul.f32 %v1901, 1.442695
    %v1910 = vpow.pop %v1909
    %v1911 = vmul.f32 %v1902, 1.442695
    %v1912 = vpow.pop %v1911
    %v1913 = vmul.f32 %v1903, 1.442695
    %v1914 = vpow.pop %v1913
    %v1915 = vmul.f32 %v1904, 1.442695
    %v1916 = vpow.pop %v1915
    %v1917 = vmul.f32 %v1905, 1.442695
    %v1918 = vpow.pop %v1917
    %v1919 = vmul.f32 %v1906, 1.442695
    %v1920 = vpow.pop %v1919
    %v1921 = vmul.f32 %v1907, 1.442695
    %v1922 = vpow.pop %v1921
    %v1923 = vmul.f32 %v1908, 1.442695
    %v1924 = vpow.pop %v1923
    %v1925 = vsel %vm324, %v1910, 0.0
    %1926 = vadd.xlane.f32.xlu0 %v1925
    %v1927 = vpop.xlane.xlu0 %1926
    %v1928 = vsel %vm324, %v1912, 0.0
    %1929 = vadd.xlane.f32.xlu0 %v1928
    %v1930 = vpop.xlane.xlu0 %1929
    %v1931 = vsel %vm324, %v1914, 0.0
    %1932 = vadd.xlane.f32.xlu0 %v1931
    %v1933 = vpop.xlane.xlu0 %1932
    %v1934 = vsel %vm324, %v1916, 0.0
    %1935 = vadd.xlane.f32.xlu0 %v1934
    %v1936 = vpop.xlane.xlu0 %1935
    %v1937 = vsel %vm324, %v1918, 0.0
    %1938 = vadd.xlane.f32.xlu0 %v1937
    %v1939 = vpop.xlane.xlu0 %1938
    %v1940 = vsel %vm324, %v1920, 0.0
    %1941 = vadd.xlane.f32.xlu0 %v1940
    %v1942 = vpop.xlane.xlu0 %1941
    %v1943 = vsel %vm324, %v1922, 0.0
    %1944 = vadd.xlane.f32.xlu0 %v1943
    %v1945 = vpop.xlane.xlu0 %1944
    %v1946 = vsel %vm324, %v1924, 0.0
    %1947 = vadd.xlane.f32.xlu0 %v1946
    %v1948 = vpop.xlane.xlu0 %1947
    %v1949 = vrcp.pop %v1927
    %v1950 = vrcp.pop %v1930
    %v1951 = vrcp.pop %v1933
    %v1952 = vrcp.pop %v1936
    %v1953 = vrcp.pop %v1939
    %v1954 = vrcp.pop %v1942
    %v1955 = vrcp.pop %v1945
    %v1956 = vrcp.pop %v1948
    %v1957 = vmul.f32 %v1910, %v1949
    %v1958 = vmul.f32 %v1912, %v1950
    %v1959 = vmul.f32 %v1914, %v1951
    %v1960 = vmul.f32 %v1916, %v1952
    %v1961 = vmul.f32 %v1918, %v1953
    %v1962 = vmul.f32 %v1920, %v1954
    %v1963 = vmul.f32 %v1922, %v1955
    %v1964 = vmul.f32 %v1924, %v1956
    %1969 = vrot.lane.b32.xlu0 %v404, 96
    %v1970 = vpop.permute.xlu0 %1969
    %1971 = vrot.lane.b32.xlu0 %v410, 96
    %v1972 = vpop.permute.xlu0 %1971
    %1973 = vrot.lane.b32.xlu0 %v416, 96
    %v1974 = vpop.permute.xlu0 %1973
    %1975 = vrot.lane.b32.xlu0 %v422, 96
    %v1976 = vpop.permute.xlu0 %1975
    %v1982 = vsel %vm324, %v1959, 0
    %v1985 = vsel %vm324, %v1960, 0
    %1987 = vmatprep.subr.mxu0 0.0
    %1988 = vmatpush1.msra.mxu0 %v1970
    %1989 = vmatprep.subr.mxu0 0.0
    %1990 = vmatpush1.msra.mxu0 %v1972
    %1991 = vmatprep.subr.mxu0 0.0
    %1992 = vmatpush1.msra.mxu0 %v1974
    %1993 = vmatprep.subr.mxu0 0.0
    %1994 = vmatpush1.msra.mxu0 %v1976
    %1995 = vmatprep.subr.mxu0 0.0
    %1996 = vmatpush1.msra.mxu0 0.0
    %1997 = vmatprep.subr.mxu0 0.0
    %1998 = vmatpush1.msra.mxu0 0.0
    %1999 = vmatprep.subr.mxu0 0.0
    %2000 = vmatpush1.msra.mxu0 0.0
    %2001 = vmatprep.subr.mxu0 0.0
    %2002 = vmatpush1.msra.mxu0 0.0
    %2003 = vmatprep.subr.mxu0 0.0
    %2004 = vmatpush1.msra.mxu0 0.0
    %2005 = vmatprep.subr.mxu0 0.0
    %2006 = vmatpush1.msra.mxu0 0.0
    %2007 = vmatprep.subr.mxu0 0.0
    %2008 = vmatpush1.msra.mxu0 0.0
    %2009 = vmatprep.subr.mxu0 0.0
    %2010 = vmatpush1.msra.mxu0 0.0
    %2011 = vmatprep.subr.mxu0 0.0
    %2012 = vmatpush1.msra.mxu0 0.0
    %2013 = vmatprep.subr.mxu0 0.0
    %2014 = vmatpush1.msra.mxu0 0.0
    %2015 = vmatprep.subr.mxu0 0.0
    %2016 = vmatpush1.msra.mxu0 0.0
    %2017 = vmatprep.subr.mxu0 0.0
    %2018 = vmatpush1.msra.mxu0 0.0
    %2019 = vmatprep.subr.mxu0 0.0
    %2020 = vmatpush1.msra.mxu0 0.0
    %2021 = vmatprep.subr.mxu0 0.0
    %2022 = vmatpush1.msra.mxu0 0.0
    %2023 = vmatprep.subr.mxu0 0.0
    %2024 = vmatpush1.msra.mxu0 0.0
    %2025 = vmatprep.subr.mxu0 0.0
    %2026 = vmatpush1.msra.mxu0 0.0
    %2027 = vmatprep.subr.mxu0 0.0
    %2028 = vmatpush1.msra.mxu0 0.0
    %2029 = vmatprep.subr.mxu0 0.0
    %2030 = vmatpush1.msra.mxu0 0.0
    %2031 = vmatprep.subr.mxu0 0.0
    %2032 = vmatpush1.msra.mxu0 0.0
    %2033 = vmatprep.subr.mxu0 0.0
    %2034 = vmatpush1.msra.mxu0 0.0
    %2035 = vmatprep.subr.mxu0 0.0
    %2036 = vmatpush1.msra.mxu0 0.0
    %2037 = vmatprep.subr.mxu0 0.0
    %2038 = vmatpush1.msra.mxu0 0.0
    %2039 = vmatprep.subr.mxu0 0.0
    %2040 = vmatpush1.msra.mxu0 0.0
    %2041 = vmatprep.subr.mxu0 0.0
    %2042 = vmatpush1.msra.mxu0 0.0
    %2043 = vmatprep.subr.mxu0 0.0
    %2044 = vmatpush1.msra.mxu0 0.0
    %2045 = vmatprep.subr.mxu0 0.0
    %2046 = vmatpush1.msra.mxu0 0.0
    %2047 = vmatprep.subr.mxu0 0.0
    %2048 = vmatpush1.msra.mxu0 0.0
    %2049 = vmatprep.subr.mxu0 0.0
    %2050 = vmatpush1.msra.mxu0 0.0
    %2051 = vmatprep.mubr.f32.mxu0 0.0
    %2052 = vmatmul.mubr.f32.gmra.mrb[0].mxu0 %v1982
    %v2053 = vpop.f32.mrb[0].mxu0
    %v2054 = vadd.f32 0.0, %v2053
    %v2055 = vpop.f32.mrb[0].mxu0
    %2056 = vmatprep.mubr.f32.mxu0 0.0
    %2057 = vmatmul.mubr.f32.gmra.mrb[0].mxu0 %v1985
    %v2058 = vpop.f32.mrb[0].mxu0
    %v2059 = vadd.f32 0.0, %v2058
    %v2060 = vpop.f32.mrb[0].mxu0
    %2061 = vdwg.mxu0
    %v2063 = vsel %vm324, %v1957, 0
    %v2066 = vsel %vm324, %v1958, 0
    %2068 = vmatprep.subr.mxu0 0.0
    %2069 = vmatpush1.msra.mxu0 %v404
    %2070 = vmatprep.subr.mxu0 0.0
    %2071 = vmatpush1.msra.mxu0 %v410
    %2072 = vmatprep.subr.mxu0 0.0
    %2073 = vmatpush1.msra.mxu0 %v416
    %2074 = vmatprep.subr.mxu0 0.0
    %2075 = vmatpush1.msra.mxu0 %v422
    %2076 = vmatprep.subr.mxu0 0.0
    %2077 = vmatpush1.msra.mxu0 0.0
    %2078 = vmatprep.subr.mxu0 0.0
    %2079 = vmatpush1.msra.mxu0 0.0
    %2080 = vmatprep.subr.mxu0 0.0
    %2081 = vmatpush1.msra.mxu0 0.0
    %2082 = vmatprep.subr.mxu0 0.0
    %2083 = vmatpush1.msra.mxu0 0.0
    %2084 = vmatprep.subr.mxu0 0.0
    %2085 = vmatpush1.msra.mxu0 0.0
    %2086 = vmatprep.subr.mxu0 0.0
    %2087 = vmatpush1.msra.mxu0 0.0
    %2088 = vmatprep.subr.mxu0 0.0
    %2089 = vmatpush1.msra.mxu0 0.0
    %2090 = vmatprep.subr.mxu0 0.0
    %2091 = vmatpush1.msra.mxu0 0.0
    %2092 = vmatprep.subr.mxu0 0.0
    %2093 = vmatpush1.msra.mxu0 0.0
    %2094 = vmatprep.subr.mxu0 0.0
    %2095 = vmatpush1.msra.mxu0 0.0
    %2096 = vmatprep.subr.mxu0 0.0
    %2097 = vmatpush1.msra.mxu0 0.0
    %2098 = vmatprep.subr.mxu0 0.0
    %2099 = vmatpush1.msra.mxu0 0.0
    %2100 = vmatprep.subr.mxu0 0.0
    %2101 = vmatpush1.msra.mxu0 0.0
    %2102 = vmatprep.subr.mxu0 0.0
    %2103 = vmatpush1.msra.mxu0 0.0
    %2104 = vmatprep.subr.mxu0 0.0
    %2105 = vmatpush1.msra.mxu0 0.0
    %2106 = vmatprep.subr.mxu0 0.0
    %2107 = vmatpush1.msra.mxu0 0.0
    %2108 = vmatprep.subr.mxu0 0.0
    %2109 = vmatpush1.msra.mxu0 0.0
    %2110 = vmatprep.subr.mxu0 0.0
    %2111 = vmatpush1.msra.mxu0 0.0
    %2112 = vmatprep.subr.mxu0 0.0
    %2113 = vmatpush1.msra.mxu0 0.0
    %2114 = vmatprep.subr.mxu0 0.0
    %2115 = vmatpush1.msra.mxu0 0.0
    %2116 = vmatprep.subr.mxu0 0.0
    %2117 = vmatpush1.msra.mxu0 0.0
    %2118 = vmatprep.subr.mxu0 0.0
    %2119 = vmatpush1.msra.mxu0 0.0
    %2120 = vmatprep.subr.mxu0 0.0
    %2121 = vmatpush1.msra.mxu0 0.0
    %2122 = vmatprep.subr.mxu0 0.0
    %2123 = vmatpush1.msra.mxu0 0.0
    %2124 = vmatprep.subr.mxu0 0.0
    %2125 = vmatpush1.msra.mxu0 0.0
    %2126 = vmatprep.subr.mxu0 0.0
    %2127 = vmatpush1.msra.mxu0 0.0
    %2128 = vmatprep.subr.mxu0 0.0
    %2129 = vmatpush1.msra.mxu0 0.0
    %2130 = vmatprep.subr.mxu0 0.0
    %2131 = vmatpush1.msra.mxu0 0.0
    %2132 = vmatprep.mubr.f32.mxu0 0.0
    %2133 = vmatmul.mubr.f32.gmra.mrb[0].mxu0 %v2063
    %v2134 = vpop.f32.mrb[0].mxu0
    %v2135 = vadd.f32 %v2054, %v2134
    %v2136 = vpop.f32.mrb[0].mxu0
    %2137 = vmatprep.mubr.f32.mxu0 0.0
    %2138 = vmatmul.mubr.f32.gmra.mrb[0].mxu0 %v2066
    %v2139 = vpop.f32.mrb[0].mxu0
    %v2140 = vadd.f32 %v2059, %v2139
    %v2141 = vpop.f32.mrb[0].mxu0
    %2142 = vdwg.mxu0
    %2143 = vrot.lane.b32.xlu0 %v404, 64
    %v2144 = vpop.permute.xlu0 %2143
    %2145 = vrot.lane.b32.xlu0 %v410, 64
    %v2146 = vpop.permute.xlu0 %2145
    %2147 = vrot.lane.b32.xlu0 %v416, 64
    %v2148 = vpop.permute.xlu0 %2147
    %2149 = vrot.lane.b32.xlu0 %v422, 64
    %v2150 = vpop.permute.xlu0 %2149
    %v2156 = vsel %vm324, %v1961, 0
    %v2159 = vsel %vm324, %v1962, 0
    %2161 = vmatprep.subr.mxu0 0.0
    %2162 = vmatpush1.msra.mxu0 %v2144
    %2163 = vmatprep.subr.mxu0 0.0
    %2164 = vmatpush1.msra.mxu0 %v2146
    %2165 = vmatprep.subr.mxu0 0.0
    %2166 = vmatpush1.msra.mxu0 %v2148
    %2167 = vmatprep.subr.mxu0 0.0
    %2168 = vmatpush1.msra.mxu0 %v2150
    %2169 = vmatprep.subr.mxu0 0.0
    %2170 = vmatpush1.msra.mxu0 0.0
    %2171 = vmatprep.subr.mxu0 0.0
    %2172 = vmatpush1.msra.mxu0 0.0
    %2173 = vmatprep.subr.mxu0 0.0
    %2174 = vmatpush1.msra.mxu0 0.0
    %2175 = vmatprep.subr.mxu0 0.0
    %2176 = vmatpush1.msra.mxu0 0.0
    %2177 = vmatprep.subr.mxu0 0.0
    %2178 = vmatpush1.msra.mxu0 0.0
    %2179 = vmatprep.subr.mxu0 0.0
    %2180 = vmatpush1.msra.mxu0 0.0
    %2181 = vmatprep.subr.mxu0 0.0
    %2182 = vmatpush1.msra.mxu0 0.0
    %2183 = vmatprep.subr.mxu0 0.0
    %2184 = vmatpush1.msra.mxu0 0.0
    %2185 = vmatprep.subr.mxu0 0.0
    %2186 = vmatpush1.msra.mxu0 0.0
    %2187 = vmatprep.subr.mxu0 0.0
    %2188 = vmatpush1.msra.mxu0 0.0
    %2189 = vmatprep.subr.mxu0 0.0
    %2190 = vmatpush1.msra.mxu0 0.0
    %2191 = vmatprep.subr.mxu0 0.0
    %2192 = vmatpush1.msra.mxu0 0.0
    %2193 = vmatprep.subr.mxu0 0.0
    %2194 = vmatpush1.msra.mxu0 0.0
    %2195 = vmatprep.subr.mxu0 0.0
    %2196 = vmatpush1.msra.mxu0 0.0
    %2197 = vmatprep.subr.mxu0 0.0
    %2198 = vmatpush1.msra.mxu0 0.0
    %2199 = vmatprep.subr.mxu0 0.0
    %2200 = vmatpush1.msra.mxu0 0.0
    %2201 = vmatprep.subr.mxu0 0.0
    %2202 = vmatpush1.msra.mxu0 0.0
    %2203 = vmatprep.subr.mxu0 0.0
    %2204 = vmatpush1.msra.mxu0 0.0
    %2205 = vmatprep.subr.mxu0 0.0
    %2206 = vmatpush1.msra.mxu0 0.0
    %2207 = vmatprep.subr.mxu0 0.0
    %2208 = vmatpush1.msra.mxu0 0.0
    %2209 = vmatprep.subr.mxu0 0.0
    %2210 = vmatpush1.msra.mxu0 0.0
    %2211 = vmatprep.subr.mxu0 0.0
    %2212 = vmatpush1.msra.mxu0 0.0
    %2213 = vmatprep.subr.mxu0 0.0
    %2214 = vmatpush1.msra.mxu0 0.0
    %2215 = vmatprep.subr.mxu0 0.0
    %2216 = vmatpush1.msra.mxu0 0.0
    %2217 = vmatprep.subr.mxu0 0.0
    %2218 = vmatpush1.msra.mxu0 0.0
    %2219 = vmatprep.subr.mxu0 0.0
    %2220 = vmatpush1.msra.mxu0 0.0
    %2221 = vmatprep.subr.mxu0 0.0
    %2222 = vmatpush1.msra.mxu0 0.0
    %2223 = vmatprep.subr.mxu0 0.0
    %2224 = vmatpush1.msra.mxu0 0.0
    %2225 = vmatprep.mubr.f32.mxu0 0.0
    %2226 = vmatmul.mubr.f32.gmra.mrb[0].mxu0 %v2156
    %v2227 = vpop.f32.mrb[0].mxu0
    %v2228 = vadd.f32 0.0, %v2227
    %v2229 = vpop.f32.mrb[0].mxu0
    %2230 = vmatprep.mubr.f32.mxu0 0.0
    %2231 = vmatmul.mubr.f32.gmra.mrb[0].mxu0 %v2159
    %v2232 = vpop.f32.mrb[0].mxu0
    %v2233 = vadd.f32 0.0, %v2232
    %v2234 = vpop.f32.mrb[0].mxu0
    %2235 = vdwg.mxu0
    %v2236 = vadd.f32 %v2135, %v2228
    %v2237 = vadd.f32 %v2140, %v2233
    %2238 = vrot.lane.b32.xlu0 %v404, 32
    %v2239 = vpop.permute.xlu0 %2238
    %2240 = vrot.lane.b32.xlu0 %v410, 32
    %v2241 = vpop.permute.xlu0 %2240
    %2242 = vrot.lane.b32.xlu0 %v416, 32
    %v2243 = vpop.permute.xlu0 %2242
    %2244 = vrot.lane.b32.xlu0 %v422, 32
    %v2245 = vpop.permute.xlu0 %2244
    %v2251 = vsel %vm324, %v1963, 0
    %v2254 = vsel %vm324, %v1964, 0
    %2256 = vmatprep.subr.mxu0 0.0
    %2257 = vmatpush1.msra.mxu0 %v2239
    %2258 = vmatprep.subr.mxu0 0.0
    %2259 = vmatpush1.msra.mxu0 %v2241
    %2260 = vmatprep.subr.mxu0 0.0
    %2261 = vmatpush1.msra.mxu0 %v2243
    %2262 = vmatprep.subr.mxu0 0.0
    %2263 = vmatpush1.msra.mxu0 %v2245
    %2264 = vmatprep.subr.mxu0 0.0
    %2265 = vmatpush1.msra.mxu0 0.0
    %2266 = vmatprep.subr.mxu0 0.0
    %2267 = vmatpush1.msra.mxu0 0.0
    %2268 = vmatprep.subr.mxu0 0.0
    %2269 = vmatpush1.msra.mxu0 0.0
    %2270 = vmatprep.subr.mxu0 0.0
    %2271 = vmatpush1.msra.mxu0 0.0
    %2272 = vmatprep.subr.mxu0 0.0
    %2273 = vmatpush1.msra.mxu0 0.0
    %2274 = vmatprep.subr.mxu0 0.0
    %2275 = vmatpush1.msra.mxu0 0.0
    %2276 = vmatprep.subr.mxu0 0.0
    %2277 = vmatpush1.msra.mxu0 0.0
    %2278 = vmatprep.subr.mxu0 0.0
    %2279 = vmatpush1.msra.mxu0 0.0
    %2280 = vmatprep.subr.mxu0 0.0
    %2281 = vmatpush1.msra.mxu0 0.0
    %2282 = vmatprep.subr.mxu0 0.0
    %2283 = vmatpush1.msra.mxu0 0.0
    %2284 = vmatprep.subr.mxu0 0.0
    %2285 = vmatpush1.msra.mxu0 0.0
    %2286 = vmatprep.subr.mxu0 0.0
    %2287 = vmatpush1.msra.mxu0 0.0
    %2288 = vmatprep.subr.mxu0 0.0
    %2289 = vmatpush1.msra.mxu0 0.0
    %2290 = vmatprep.subr.mxu0 0.0
    %2291 = vmatpush1.msra.mxu0 0.0
    %2292 = vmatprep.subr.mxu0 0.0
    %2293 = vmatpush1.msra.mxu0 0.0
    %2294 = vmatprep.subr.mxu0 0.0
    %2295 = vmatpush1.msra.mxu0 0.0
    %2296 = vmatprep.subr.mxu0 0.0
    %2297 = vmatpush1.msra.mxu0 0.0
    %2298 = vmatprep.subr.mxu0 0.0
    %2299 = vmatpush1.msra.mxu0 0.0
    %2300 = vmatprep.subr.mxu0 0.0
    %2301 = vmatpush1.msra.mxu0 0.0
    %2302 = vmatprep.subr.mxu0 0.0
    %2303 = vmatpush1.msra.mxu0 0.0
    %2304 = vmatprep.subr.mxu0 0.0
    %2305 = vmatpush1.msra.mxu0 0.0
    %2306 = vmatprep.subr.mxu0 0.0
    %2307 = vmatpush1.msra.mxu0 0.0
    %2308 = vmatprep.subr.mxu0 0.0
    %2309 = vmatpush1.msra.mxu0 0.0
    %2310 = vmatprep.subr.mxu0 0.0
    %2311 = vmatpush1.msra.mxu0 0.0
    %2312 = vmatprep.subr.mxu0 0.0
    %2313 = vmatpush1.msra.mxu0 0.0
    %2314 = vmatprep.subr.mxu0 0.0
    %2315 = vmatpush1.msra.mxu0 0.0
    %2316 = vmatprep.subr.mxu0 0.0
    %2317 = vmatpush1.msra.mxu0 0.0
    %2318 = vmatprep.subr.mxu0 0.0
    %2319 = vmatpush1.msra.mxu0 0.0
    %2320 = vmatprep.mubr.f32.mxu0 0.0
    %2321 = vmatmul.mubr.f32.gmra.mrb[0].mxu0 %v2251
    %v2322 = vpop.f32.mrb[0].mxu0
    %v2323 = vadd.f32 0.0, %v2322
    %v2324 = vpop.f32.mrb[0].mxu0
    %2325 = vmatprep.mubr.f32.mxu0 0.0
    %2326 = vmatmul.mubr.f32.gmra.mrb[0].mxu0 %v2254
    %v2327 = vpop.f32.mrb[0].mxu0
    %v2328 = vadd.f32 0.0, %v2327
    %v2329 = vpop.f32.mrb[0].mxu0
    %2330 = vdwg.mxu0
    %v2331 = vadd.f32 %v2236, %v2323
    %v2332 = vadd.f32 %v2237, %v2328
    %v2333 = vlaneseq
    %v2334 = vshrl.u32 %v2333, 7
    %v2335 = vsub.s32 1, %v2334
    %v2336 = vrot.slane %v426, %v2335
    %v2337 = vadd.f32 %v2331, %v2336
    %v2338 = vadd.f32 %v2332, %v2336
    %v2339 = vadd.f32 %v1434, %v2337
    %v2340 = vadd.f32 %v1435, %v2338
    %v2341 = vmul.f32 %v2339, %v2339
    %v2342 = vmul.f32 %v2340, %v2340
    %v2343 = vsel %vm324, %v2339, 0.0
    %2344 = vadd.xlane.f32.xlu0 %v2343
    %v2345 = vpop.xlane.xlu0 %2344
    %v2346 = vsel %vm324, %v2340, 0.0
    %2347 = vadd.xlane.f32.xlu0 %v2346
    %v2348 = vpop.xlane.xlu0 %2347
    %v2349 = vsel %vm324, %v2341, 0.0
    %2350 = vadd.xlane.f32.xlu0 %v2349
    %v2351 = vpop.xlane.xlu0 %2350
    %v2352 = vsel %vm324, %v2342, 0.0
    %2353 = vadd.xlane.f32.xlu0 %v2352
    %v2354 = vpop.xlane.xlu0 %2353
    %v2355 = vmul.f32 %v2345, 0.03125
    %v2356 = vmul.f32 %v2348, 0.03125
    %v2357 = vmul.f32 %v2351, 0.03125
    %v2358 = vmul.f32 %v2354, 0.03125
    %v2359 = vmul.f32 %v2355, %v2355
    %v2360 = vmul.f32 %v2356, %v2356
    %v2361 = vsub.f32 %v2357, %v2359
    %v2362 = vsub.f32 %v2358, %v2360
    %v2363 = vsub.f32 %v2339, %v2355
    %v2364 = vsub.f32 %v2340, %v2356
    %v2365 = vadd.f32 %v2361, 1e-05
    %v2366 = vadd.f32 %v2362, 1e-05
    %v2367 = vrsqrt.pop %v2365
    %v2368 = vrsqrt.pop %v2366
    %v2369 = vmul.f32 %v2363, %v2367
    %v2370 = vmul.f32 %v2364, %v2368
    %v2371 = vlaneseq
    %v2372 = vshrl.u32 %v2371, 7
    %v2373 = vsub.s32 5, %v2372
    %v2374 = vrot.slane %v426, %v2373
    %v2375 = vmul.f32 %v2369, %v2374
    %v2376 = vmul.f32 %v2370, %v2374
    %v2377 = vlaneseq
    %v2378 = vshrl.u32 %v2377, 7
    %v2379 = vsub.s32 6, %v2378
    %v2380 = vrot.slane %v426, %v2379
    %v2381 = vadd.f32 %v2375, %v2380
    %v2382 = vadd.f32 %v2376, %v2380
    %v2383 = vld [vmem:[#allocation11] sm:$0xff]
    %v2384 = vld [vmem:[#allocation11 + $0x8] sm:$0xff]
    %v2385 = vld [vmem:[#allocation11 + $0x10] sm:$0xff]
    %v2386 = vld [vmem:[#allocation11 + $0x18] sm:$0xff]
    %v2388 = vlaneseq
    %v2389 = vshrl.u32 %v2388, 7
    %v2390 = vsub.s32 0, %v2389
    %v2391 = vrot.slane %v429, %v2390
    %v2394 = vsel %vm324, %v2381, 0
    %v2397 = vsel %vm324, %v2382, 0
    %2399 = vmatprep.subr.mxu0 0.0
    %2400 = vmatpush1.msra.mxu0 %v2383
    %2401 = vmatprep.subr.mxu0 0.0
    %2402 = vmatpush1.msra.mxu0 %v2384
    %2403 = vmatprep.subr.mxu0 0.0
    %2404 = vmatpush1.msra.mxu0 %v2385
    %2405 = vmatprep.subr.mxu0 0.0
    %2406 = vmatpush1.msra.mxu0 %v2386
    %2407 = vmatprep.subr.mxu0 0.0
    %2408 = vmatpush1.msra.mxu0 0.0
    %2409 = vmatprep.subr.mxu0 0.0
    %2410 = vmatpush1.msra.mxu0 0.0
    %2411 = vmatprep.subr.mxu0 0.0
    %2412 = vmatpush1.msra.mxu0 0.0
    %2413 = vmatprep.subr.mxu0 0.0
    %2414 = vmatpush1.msra.mxu0 0.0
    %2415 = vmatprep.subr.mxu0 0.0
    %2416 = vmatpush1.msra.mxu0 0.0
    %2417 = vmatprep.subr.mxu0 0.0
    %2418 = vmatpush1.msra.mxu0 0.0
    %2419 = vmatprep.subr.mxu0 0.0
    %2420 = vmatpush1.msra.mxu0 0.0
    %2421 = vmatprep.subr.mxu0 0.0
    %2422 = vmatpush1.msra.mxu0 0.0
    %2423 = vmatprep.subr.mxu0 0.0
    %2424 = vmatpush1.msra.mxu0 0.0
    %2425 = vmatprep.subr.mxu0 0.0
    %2426 = vmatpush1.msra.mxu0 0.0
    %2427 = vmatprep.subr.mxu0 0.0
    %2428 = vmatpush1.msra.mxu0 0.0
    %2429 = vmatprep.subr.mxu0 0.0
    %2430 = vmatpush1.msra.mxu0 0.0
    %2431 = vmatprep.subr.mxu0 0.0
    %2432 = vmatpush1.msra.mxu0 0.0
    %2433 = vmatprep.subr.mxu0 0.0
    %2434 = vmatpush1.msra.mxu0 0.0
    %2435 = vmatprep.subr.mxu0 0.0
    %2436 = vmatpush1.msra.mxu0 0.0
    %2437 = vmatprep.subr.mxu0 0.0
    %2438 = vmatpush1.msra.mxu0 0.0
    %2439 = vmatprep.subr.mxu0 0.0
    %2440 = vmatpush1.msra.mxu0 0.0
    %2441 = vmatprep.subr.mxu0 0.0
    %2442 = vmatpush1.msra.mxu0 0.0
    %2443 = vmatprep.subr.mxu0 0.0
    %2444 = vmatpush1.msra.mxu0 0.0
    %2445 = vmatprep.subr.mxu0 0.0
    %2446 = vmatpush1.msra.mxu0 0.0
    %2447 = vmatprep.subr.mxu0 0.0
    %2448 = vmatpush1.msra.mxu0 0.0
    %2449 = vmatprep.subr.mxu0 0.0
    %2450 = vmatpush1.msra.mxu0 0.0
    %2451 = vmatprep.subr.mxu0 0.0
    %2452 = vmatpush1.msra.mxu0 0.0
    %2453 = vmatprep.subr.mxu0 0.0
    %2454 = vmatpush1.msra.mxu0 0.0
    %2455 = vmatprep.subr.mxu0 0.0
    %2456 = vmatpush1.msra.mxu0 0.0
    %2457 = vmatprep.subr.mxu0 0.0
    %2458 = vmatpush1.msra.mxu0 0.0
    %2459 = vmatprep.subr.mxu0 0.0
    %2460 = vmatpush1.msra.mxu0 0.0
    %2461 = vmatprep.subr.mxu0 0.0
    %2462 = vmatpush1.msra.mxu0 0.0
    %2463 = vmatprep.mubr.f32.mxu0 0.0
    %2464 = vmatmul.mubr.f32.gmra.mrb[0].mxu0 %v2394
    %v2465 = vpop.f32.mrb[0].mxu0
    %v2466 = vadd.f32 %v2391, %v2465
    %v2467 = vpop.f32.mrb[0].mxu0
    %2468 = vmatprep.mubr.f32.mxu0 0.0
    %2469 = vmatmul.mubr.f32.gmra.mrb[0].mxu0 %v2397
    %v2470 = vpop.f32.mrb[0].mxu0
    %v2471 = vadd.f32 %v2391, %v2470
    %v2472 = vpop.f32.mrb[0].mxu0
    %2473 = vdwg.mxu0
    %v2474 = vmax.f32 %v2466, 0.0
    %v2475 = vmax.f32 %v2471, 0.0
    %v2476 = vld [vmem:[%s9] sm:$0xff]
    %v2477 = vld [vmem:[%s9 + $0x8] sm:$0xff]
    %v2478 = vld [vmem:[%s9 + $0x10] sm:$0xff]
    %v2479 = vld [vmem:[%s9 + $0x18] sm:$0xff]
    %v2480 = vld [vmem:[%s9 + $0x20] sm:$0xff]
    %v2481 = vld [vmem:[%s9 + $0x28] sm:$0xff]
    %v2482 = vld [vmem:[%s9 + $0x30] sm:$0xff]
    %v2483 = vld [vmem:[%s9 + $0x38] sm:$0xff]
    %v2484 = vlaneseq
    %v2485 = vshrl.u32 %v2484, 7
    %v2486 = vsub.s32 2, %v2485
    %v2487 = vrot.slane %v426, %v2486
    %vm2488 = vcmask 523264
    %v2490 = vsel %vm2488, %v2474, 0
    %v2493 = vsel %vm2488, %v2475, 0
    %2495 = vmatprep.subr.mxu0 0.0
    %2496 = vmatpush1.msra.mxu0 %v2476
    %2497 = vmatprep.subr.mxu0 0.0
    %2498 = vmatpush1.msra.mxu0 %v2477
    %2499 = vmatprep.subr.mxu0 0.0
    %2500 = vmatpush1.msra.mxu0 %v2478
    %2501 = vmatprep.subr.mxu0 0.0
    %2502 = vmatpush1.msra.mxu0 %v2479
    %2503 = vmatprep.subr.mxu0 0.0
    %2504 = vmatpush1.msra.mxu0 %v2480
    %2505 = vmatprep.subr.mxu0 0.0
    %2506 = vmatpush1.msra.mxu0 %v2481
    %2507 = vmatprep.subr.mxu0 0.0
    %2508 = vmatpush1.msra.mxu0 %v2482
    %2509 = vmatprep.subr.mxu0 0.0
    %2510 = vmatpush1.msra.mxu0 %v2483
    %2511 = vmatprep.subr.mxu0 0.0
    %2512 = vmatpush1.msra.mxu0 0.0
    %2513 = vmatprep.subr.mxu0 0.0
    %2514 = vmatpush1.msra.mxu0 0.0
    %2515 = vmatprep.subr.mxu0 0.0
    %2516 = vmatpush1.msra.mxu0 0.0
    %2517 = vmatprep.subr.mxu0 0.0
    %2518 = vmatpush1.msra.mxu0 0.0
    %2519 = vmatprep.subr.mxu0 0.0
    %2520 = vmatpush1.msra.mxu0 0.0
    %2521 = vmatprep.subr.mxu0 0.0
    %2522 = vmatpush1.msra.mxu0 0.0
    %2523 = vmatprep.subr.mxu0 0.0
    %2524 = vmatpush1.msra.mxu0 0.0
    %2525 = vmatprep.subr.mxu0 0.0
    %2526 = vmatpush1.msra.mxu0 0.0
    %2527 = vmatprep.subr.mxu0 0.0
    %2528 = vmatpush1.msra.mxu0 0.0
    %2529 = vmatprep.subr.mxu0 0.0
    %2530 = vmatpush1.msra.mxu0 0.0
    %2531 = vmatprep.subr.mxu0 0.0
    %2532 = vmatpush1.msra.mxu0 0.0
    %2533 = vmatprep.subr.mxu0 0.0
    %2534 = vmatpush1.msra.mxu0 0.0
    %2535 = vmatprep.subr.mxu0 0.0
    %2536 = vmatpush1.msra.mxu0 0.0
    %2537 = vmatprep.subr.mxu0 0.0
    %2538 = vmatpush1.msra.mxu0 0.0
    %2539 = vmatprep.subr.mxu0 0.0
    %2540 = vmatpush1.msra.mxu0 0.0
    %2541 = vmatprep.subr.mxu0 0.0
    %2542 = vmatpush1.msra.mxu0 0.0
    %2543 = vmatprep.subr.mxu0 0.0
    %2544 = vmatpush1.msra.mxu0 0.0
    %2545 = vmatprep.subr.mxu0 0.0
    %2546 = vmatpush1.msra.mxu0 0.0
    %2547 = vmatprep.subr.mxu0 0.0
    %2548 = vmatpush1.msra.mxu0 0.0
    %2549 = vmatprep.subr.mxu0 0.0
    %2550 = vmatpush1.msra.mxu0 0.0
    %2551 = vmatprep.subr.mxu0 0.0
    %2552 = vmatpush1.msra.mxu0 0.0
    %2553 = vmatprep.subr.mxu0 0.0
    %2554 = vmatpush1.msra.mxu0 0.0
    %2555 = vmatprep.subr.mxu0 0.0
    %2556 = vmatpush1.msra.mxu0 0.0
    %2557 = vmatprep.subr.mxu0 0.0
    %2558 = vmatpush1.msra.mxu0 0.0
    %2559 = vmatprep.mubr.f32.mxu0 0.0
    %2560 = vmatmul.mubr.f32.gmra.mrb[0].mxu0 %v2490
    %v2561 = vpop.f32.mrb[0].mxu0
    %v2562 = vadd.f32 %v2487, %v2561
    %v2563 = vpop.f32.mrb[0].mxu0
    %2564 = vmatprep.mubr.f32.mxu0 0.0
    %2565 = vmatmul.mubr.f32.gmra.mrb[0].mxu0 %v2493
    %v2566 = vpop.f32.mrb[0].mxu0
    %v2567 = vadd.f32 %v2487, %v2566
    %v2568 = vpop.f32.mrb[0].mxu0
    %2569 = vdwg.mxu0
    %v2570 = vadd.f32 %v2381, %v2562
    %v2571 = vadd.f32 %v2382, %v2567
    %v2572 = vmul.f32 %v2570, %v2570
    %v2573 = vmul.f32 %v2571, %v2571
    %v2574 = vsel %vm324, %v2570, 0.0
    %2575 = vadd.xlane.f32.xlu0 %v2574
    %v2576 = vpop.xlane.xlu0 %2575
    %v2577 = vsel %vm324, %v2571, 0.0
    %2578 = vadd.xlane.f32.xlu0 %v2577
    %v2579 = vpop.xlane.xlu0 %2578
    %v2580 = vsel %vm324, %v2572, 0.0
    %2581 = vadd.xlane.f32.xlu0 %v2580
    %v2582 = vpop.xlane.xlu0 %2581
    %v2583 = vsel %vm324, %v2573, 0.0
    %2584 = vadd.xlane.f32.xlu0 %v2583
    %v2585 = vpop.xlane.xlu0 %2584
    %v2586 = vmul.f32 %v2576, 0.03125
    %v2587 = vmul.f32 %v2579, 0.03125
    %v2588 = vmul.f32 %v2582, 0.03125
    %v2589 = vmul.f32 %v2585, 0.03125
    %v2590 = vmul.f32 %v2586, %v2586
    %v2591 = vmul.f32 %v2587, %v2587
    %v2592 = vsub.f32 %v2588, %v2590
    %v2593 = vsub.f32 %v2589, %v2591
    %v2594 = vsub.f32 %v2570, %v2586
    %v2595 = vsub.f32 %v2571, %v2587
    %v2596 = vadd.f32 %v2592, 1e-05
    %v2597 = vadd.f32 %v2593, 1e-05
    %v2598 = vrsqrt.pop %v2596
    %v2599 = vrsqrt.pop %v2597
    %v2600 = vmul.f32 %v2594, %v2598
    %v2601 = vmul.f32 %v2595, %v2599
    %v2602 = vlaneseq
    %v2603 = vshrl.u32 %v2602, 7
    %v2604 = vsub.s32 7, %v2603
    %v2605 = vrot.slane %v426, %v2604
    %v2606 = vmul.f32 %v2600, %v2605
    %v2607 = vmul.f32 %v2601, %v2605
    %v2608 = vlaneseq
    %v2609 = vshrl.u32 %v2608, 7
    %v2610 = vsub.s32 0, %v2609
    %v2611 = vrot.slane %v427, %v2610
    %v2612 = vadd.f32 %v2606, %v2611
    %v2613 = vadd.f32 %v2607, %v2611
    %s2614 = scalar_lea.vmem %s11, 16
    %v2615 = vld [vmem:[%s2614] sm:$0xff]
    %v2616 = vld [vmem:[%s2614 + $0x8] sm:$0x1]
    %s2617 = scalar_lea.vmem %s10, 4
    %v2618 = vld [vmem:[%s2617] sm:$0x7]
    %s2619 = scalar_lea.vmem [#allocation13], 1
    %v2620 = vld [vmem:[%s2619] sm:$0x1]
    %v2621 = vadd.f32 %v2612, %v159
    %v2622 = vadd.f32 %v2613, %v160
    %s2623 = scalar_lea.vmem %s4, 64
    %v2624 = vld [vmem:[%s2623] sm:$0xff]
    %v2625 = vld [vmem:[%s2623 + $0x8] sm:$0xff]
    %v2626 = vld [vmem:[%s2623 + $0x10] sm:$0xff]
    %v2627 = vld [vmem:[%s2623 + $0x18] sm:$0xff]
    %v2628 = vlaneseq
    %v2629 = vshrl.u32 %v2628, 7
    %v2630 = vsub.s32 0, %v2629
    %v2631 = vrot.slane %v2618, %v2630
    %v2633 = vsel %vm324, %v2621, 0
    %v2636 = vsel %vm324, %v2622, 0
    %2638 = vmatprep.subr.mxu0 0.0
    %2639 = vmatpush1.msra.mxu0 %v2624
    %2640 = vmatprep.subr.mxu0 0.0
    %2641 = vmatpush1.msra.mxu0 %v2625
    %2642 = vmatprep.subr.mxu0 0.0
    %2643 = vmatpush1.msra.mxu0 %v2626
    %2644 = vmatprep.subr.mxu0 0.0
    %2645 = vmatpush1.msra.mxu0 %v2627
    %2646 = vmatprep.subr.mxu0 0.0
    %2647 = vmatpush1.msra.mxu0 0.0
    %2648 = vmatprep.subr.mxu0 0.0
    %2649 = vmatpush1.msra.mxu0 0.0
    %2650 = vmatprep.subr.mxu0 0.0
    %2651 = vmatpush1.msra.mxu0 0.0
    %2652 = vmatprep.subr.mxu0 0.0
    %2653 = vmatpush1.msra.mxu0 0.0
    %2654 = vmatprep.subr.mxu0 0.0
    %2655 = vmatpush1.msra.mxu0 0.0
    %2656 = vmatprep.subr.mxu0 0.0
    %2657 = vmatpush1.msra.mxu0 0.0
    %2658 = vmatprep.subr.mxu0 0.0
    %2659 = vmatpush1.msra.mxu0 0.0
    %2660 = vmatprep.subr.mxu0 0.0
    %2661 = vmatpush1.msra.mxu0 0.0
    %2662 = vmatprep.subr.mxu0 0.0
    %2663 = vmatpush1.msra.mxu0 0.0
    %2664 = vmatprep.subr.mxu0 0.0
    %2665 = vmatpush1.msra.mxu0 0.0
    %2666 = vmatprep.subr.mxu0 0.0
    %2667 = vmatpush1.msra.mxu0 0.0
    %2668 = vmatprep.subr.mxu0 0.0
    %2669 = vmatpush1.msra.mxu0 0.0
    %2670 = vmatprep.subr.mxu0 0.0
    %2671 = vmatpush1.msra.mxu0 0.0
    %2672 = vmatprep.subr.mxu0 0.0
    %2673 = vmatpush1.msra.mxu0 0.0
    %2674 = vmatprep.subr.mxu0 0.0
    %2675 = vmatpush1.msra.mxu0 0.0
    %2676 = vmatprep.subr.mxu0 0.0
    %2677 = vmatpush1.msra.mxu0 0.0
    %2678 = vmatprep.subr.mxu0 0.0
    %2679 = vmatpush1.msra.mxu0 0.0
    %2680 = vmatprep.subr.mxu0 0.0
    %2681 = vmatpush1.msra.mxu0 0.0
    %2682 = vmatprep.subr.mxu0 0.0
    %2683 = vmatpush1.msra.mxu0 0.0
    %2684 = vmatprep.subr.mxu0 0.0
    %2685 = vmatpush1.msra.mxu0 0.0
    %2686 = vmatprep.subr.mxu0 0.0
    %2687 = vmatpush1.msra.mxu0 0.0
    %2688 = vmatprep.subr.mxu0 0.0
    %2689 = vmatpush1.msra.mxu0 0.0
    %2690 = vmatprep.subr.mxu0 0.0
    %2691 = vmatpush1.msra.mxu0 0.0
    %2692 = vmatprep.subr.mxu0 0.0
    %2693 = vmatpush1.msra.mxu0 0.0
    %2694 = vmatprep.subr.mxu0 0.0
    %2695 = vmatpush1.msra.mxu0 0.0
    %2696 = vmatprep.subr.mxu0 0.0
    %2697 = vmatpush1.msra.mxu0 0.0
    %2698 = vmatprep.subr.mxu0 0.0
    %2699 = vmatpush1.msra.mxu0 0.0
    %2700 = vmatprep.subr.mxu0 0.0
    %2701 = vmatpush1.msra.mxu0 0.0
    %2702 = vmatprep.mubr.f32.mxu0 0.0
    %2703 = vmatmul.mubr.f32.gmra.mrb[0].mxu0 %v2633
    %v2704 = vpop.f32.mrb[0].mxu0
    %v2705 = vadd.f32 %v2631, %v2704
    %v2706 = vpop.f32.mrb[0].mxu0
    %2707 = vmatprep.mubr.f32.mxu0 0.0
    %2708 = vmatmul.mubr.f32.gmra.mrb[0].mxu0 %v2636
    %v2709 = vpop.f32.mrb[0].mxu0
    %v2710 = vadd.f32 %v2631, %v2709
    %v2711 = vpop.f32.mrb[0].mxu0
    %2712 = vdwg.mxu0
    %s2713 = scalar_lea.vmem %s4, 96
    %v2714 = vld [vmem:[%s2713] sm:$0xff]
    %v2715 = vld [vmem:[%s2713 + $0x8] sm:$0xff]
    %v2716 = vld [vmem:[%s2713 + $0x10] sm:$0xff]
    %v2717 = vld [vmem:[%s2713 + $0x18] sm:$0xff]
    %v2718 = vlaneseq
    %v2719 = vshrl.u32 %v2718, 7
    %v2720 = vsub.s32 1, %v2719
    %v2721 = vrot.slane %v2618, %v2720
    %v2723 = vsel %vm324, %v2612, 0
    %v2726 = vsel %vm324, %v2613, 0
    %2728 = vmatprep.subr.mxu0 0.0
    %2729 = vmatpush1.msra.mxu0 %v2714
    %2730 = vmatprep.subr.mxu0 0.0
    %2731 = vmatpush1.msra.mxu0 %v2715
    %2732 = vmatprep.subr.mxu0 0.0
    %2733 = vmatpush1.msra.mxu0 %v2716
    %2734 = vmatprep.subr.mxu0 0.0
    %2735 = vmatpush1.msra.mxu0 %v2717
    %2736 = vmatprep.subr.mxu0 0.0
    %2737 = vmatpush1.msra.mxu0 0.0
    %2738 = vmatprep.subr.mxu0 0.0
    %2739 = vmatpush1.msra.mxu0 0.0
    %2740 = vmatprep.subr.mxu0 0.0
    %2741 = vmatpush1.msra.mxu0 0.0
    %2742 = vmatprep.subr.mxu0 0.0
    %2743 = vmatpush1.msra.mxu0 0.0
    %2744 = vmatprep.subr.mxu0 0.0
    %2745 = vmatpush1.msra.mxu0 0.0
    %2746 = vmatprep.subr.mxu0 0.0
    %2747 = vmatpush1.msra.mxu0 0.0
    %2748 = vmatprep.subr.mxu0 0.0
    %2749 = vmatpush1.msra.mxu0 0.0
    %2750 = vmatprep.subr.mxu0 0.0
    %2751 = vmatpush1.msra.mxu0 0.0
    %2752 = vmatprep.subr.mxu0 0.0
    %2753 = vmatpush1.msra.mxu0 0.0
    %2754 = vmatprep.subr.mxu0 0.0
    %2755 = vmatpush1.msra.mxu0 0.0
    %2756 = vmatprep.subr.mxu0 0.0
    %2757 = vmatpush1.msra.mxu0 0.0
    %2758 = vmatprep.subr.mxu0 0.0
    %2759 = vmatpush1.msra.mxu0 0.0
    %2760 = vmatprep.subr.mxu0 0.0
    %2761 = vmatpush1.msra.mxu0 0.0
    %2762 = vmatprep.subr.mxu0 0.0
    %2763 = vmatpush1.msra.mxu0 0.0
    %2764 = vmatprep.subr.mxu0 0.0
    %2765 = vmatpush1.msra.mxu0 0.0
    %2766 = vmatprep.subr.mxu0 0.0
    %2767 = vmatpush1.msra.mxu0 0.0
    %2768 = vmatprep.subr.mxu0 0.0
    %2769 = vmatpush1.msra.mxu0 0.0
    %2770 = vmatprep.subr.mxu0 0.0
    %2771 = vmatpush1.msra.mxu0 0.0
    %2772 = vmatprep.subr.mxu0 0.0
    %2773 = vmatpush1.msra.mxu0 0.0
    %2774 = vmatprep.subr.mxu0 0.0
    %2775 = vmatpush1.msra.mxu0 0.0
    %2776 = vmatprep.subr.mxu0 0.0
    %2777 = vmatpush1.msra.mxu0 0.0
    %2778 = vmatprep.subr.mxu0 0.0
    %2779 = vmatpush1.msra.mxu0 0.0
    %2780 = vmatprep.subr.mxu0 0.0
    %2781 = vmatpush1.msra.mxu0 0.0
    %2782 = vmatprep.subr.mxu0 0.0
    %2783 = vmatpush1.msra.mxu0 0.0
    %2784 = vmatprep.subr.mxu0 0.0
    %2785 = vmatpush1.msra.mxu0 0.0
    %2786 = vmatprep.subr.mxu0 0.0
    %2787 = vmatpush1.msra.mxu0 0.0
    %2788 = vmatprep.subr.mxu0 0.0
    %2789 = vmatpush1.msra.mxu0 0.0
    %2790 = vmatprep.subr.mxu0 0.0
    %2791 = vmatpush1.msra.mxu0 0.0
    %2792 = vmatprep.mubr.f32.mxu0 0.0
    %2793 = vmatmul.mubr.f32.gmra.mrb[0].mxu0 %v2723
    %v2794 = vpop.f32.mrb[0].mxu0
    %v2795 = vadd.f32 %v2721, %v2794
    %v2796 = vpop.f32.mrb[0].mxu0
    %2797 = vmatprep.mubr.f32.mxu0 0.0
    %2798 = vmatmul.mubr.f32.gmra.mrb[0].mxu0 %v2726
    %v2799 = vpop.f32.mrb[0].mxu0
    %v2800 = vadd.f32 %v2721, %v2799
    %v2801 = vpop.f32.mrb[0].mxu0
    %2802 = vdwg.mxu0
    %v2804 = vsel %vm324, %v2705, 0
    %v2807 = vsel %vm324, %v2710, 0
    %2809 = vmatprep.subr.mxu0 0.0
    %2810 = vmatpush1.xpose.msra.mxu0 %v2633
    %2811 = vmatprep.subr.mxu0 0.0
    %2812 = vmatpush1.xpose.msra.mxu0 %v2636
    %2813 = vmatprep.subr.mxu0 0.0
    %2814 = vmatpush1.xpose.msra.mxu0 0.0
    %2815 = vmatprep.subr.mxu0 0.0
    %2816 = vmatpush1.xpose.msra.mxu0 0.0
    %2817 = vmatprep.subr.mxu0 0.0
    %2818 = vmatpush1.xpose.msra.mxu0 0.0
    %2819 = vmatprep.subr.mxu0 0.0
    %2820 = vmatpush1.xpose.msra.mxu0 0.0
    %2821 = vmatprep.subr.mxu0 0.0
    %2822 = vmatpush1.xpose.msra.mxu0 0.0
    %2823 = vmatprep.subr.mxu0 0.0
    %2824 = vmatpush1.xpose.msra.mxu0 0.0
    %2825 = vmatprep.subr.mxu0 0.0
    %2826 = vmatpush1.xpose.msra.mxu0 0.0
    %2827 = vmatprep.subr.mxu0 0.0
    %2828 = vmatpush1.xpose.msra.mxu0 0.0
    %2829 = vmatprep.subr.mxu0 0.0
    %2830 = vmatpush1.xpose.msra.mxu0 0.0
    %2831 = vmatprep.subr.mxu0 0.0
    %2832 = vmatpush1.xpose.msra.mxu0 0.0
    %2833 = vmatprep.subr.mxu0 0.0
    %2834 = vmatpush1.xpose.msra.mxu0 0.0
    %2835 = vmatprep.subr.mxu0 0.0
    %2836 = vmatpush1.xpose.msra.mxu0 0.0
    %2837 = vmatprep.subr.mxu0 0.0
    %2838 = vmatpush1.xpose.msra.mxu0 0.0
    %2839 = vmatprep.subr.mxu0 0.0
    %2840 = vmatpush1.xpose.msra.mxu0 0.0
    %2841 = vmatprep.subr.mxu0 0.0
    %2842 = vmatpush1.xpose.msra.mxu0 0.0
    %2843 = vmatprep.subr.mxu0 0.0
    %2844 = vmatpush1.xpose.msra.mxu0 0.0
    %2845 = vmatprep.subr.mxu0 0.0
    %2846 = vmatpush1.xpose.msra.mxu0 0.0
    %2847 = vmatprep.subr.mxu0 0.0
    %2848 = vmatpush1.xpose.msra.mxu0 0.0
    %2849 = vmatprep.subr.mxu0 0.0
    %2850 = vmatpush1.xpose.msra.mxu0 0.0
    %2851 = vmatprep.subr.mxu0 0.0
    %2852 = vmatpush1.xpose.msra.mxu0 0.0
    %2853 = vmatprep.subr.mxu0 0.0
    %2854 = vmatpush1.xpose.msra.mxu0 0.0
    %2855 = vmatprep.subr.mxu0 0.0
    %2856 = vmatpush1.xpose.msra.mxu0 0.0
    %2857 = vmatprep.subr.mxu0 0.0
    %2858 = vmatpush1.xpose.msra.mxu0 0.0
    %2859 = vmatprep.subr.mxu0 0.0
    %2860 = vmatpush1.xpose.msra.mxu0 0.0
    %2861 = vmatprep.subr.mxu0 0.0
    %2862 = vmatpush1.xpose.msra.mxu0 0.0
    %2863 = vmatprep.subr.mxu0 0.0
    %2864 = vmatpush1.xpose.msra.mxu0 0.0
    %2865 = vmatprep.subr.mxu0 0.0
    %2866 = vmatpush1.xpose.msra.mxu0 0.0
    %2867 = vmatprep.subr.mxu0 0.0
    %2868 = vmatpush1.xpose.msra.mxu0 0.0
    %2869 = vmatprep.subr.mxu0 0.0
    %2870 = vmatpush1.xpose.msra.mxu0 0.0
    %2871 = vmatprep.subr.mxu0 0.0
    %2872 = vmatpush1.xpose.msra.mxu0 0.0
    %2873 = vmatprep.mubr.f32.mxu0 0.0
    %2874 = vmatmul.mubr.f32.gmra.mrb[0].mxu0 %v2804
    %v2875 = vpop.f32.mrb[0].mxu0
    %v2876 = vadd.f32 0.0, %v2875
    %v2877 = vpop.f32.mrb[0].mxu0
    %2878 = vmatprep.mubr.f32.mxu0 0.0
    %2879 = vmatmul.mubr.f32.gmra.mrb[0].mxu0 %v2807
    %v2880 = vpop.f32.mrb[0].mxu0
    %v2881 = vadd.f32 0.0, %v2880
    %v2882 = vpop.f32.mrb[0].mxu0
    %2883 = vdwg.mxu0
    %2884 = vrot.lane.b32.xlu0 %v2705, 96
    %v2885 = vpop.permute.xlu0 %2884
    %2886 = vrot.lane.b32.xlu0 %v2710, 96
    %v2887 = vpop.permute.xlu0 %2886
    %v2888 = vsel %vm324, %v2885, 0
    %v2890 = vsel %vm324, %v2887, 0
    %2892 = vmatprep.subr.mxu0 0.0
    %2893 = vmatpush1.xpose.msra.mxu0 %v2633
    %2894 = vmatprep.subr.mxu0 0.0
    %2895 = vmatpush1.xpose.msra.mxu0 %v2636
    %2896 = vmatprep.subr.mxu0 0.0
    %2897 = vmatpush1.xpose.msra.mxu0 0.0
    %2898 = vmatprep.subr.mxu0 0.0
    %2899 = vmatpush1.xpose.msra.mxu0 0.0
    %2900 = vmatprep.subr.mxu0 0.0
    %2901 = vmatpush1.xpose.msra.mxu0 0.0
    %2902 = vmatprep.subr.mxu0 0.0
    %2903 = vmatpush1.xpose.msra.mxu0 0.0
    %2904 = vmatprep.subr.mxu0 0.0
    %2905 = vmatpush1.xpose.msra.mxu0 0.0
    %2906 = vmatprep.subr.mxu0 0.0
    %2907 = vmatpush1.xpose.msra.mxu0 0.0
    %2908 = vmatprep.subr.mxu0 0.0
    %2909 = vmatpush1.xpose.msra.mxu0 0.0
    %2910 = vmatprep.subr.mxu0 0.0
    %2911 = vmatpush1.xpose.msra.mxu0 0.0
    %2912 = vmatprep.subr.mxu0 0.0
    %2913 = vmatpush1.xpose.msra.mxu0 0.0
    %2914 = vmatprep.subr.mxu0 0.0
    %2915 = vmatpush1.xpose.msra.mxu0 0.0
    %2916 = vmatprep.subr.mxu0 0.0
    %2917 = vmatpush1.xpose.msra.mxu0 0.0
    %2918 = vmatprep.subr.mxu0 0.0
    %2919 = vmatpush1.xpose.msra.mxu0 0.0
    %2920 = vmatprep.subr.mxu0 0.0
    %2921 = vmatpush1.xpose.msra.mxu0 0.0
    %2922 = vmatprep.subr.mxu0 0.0
    %2923 = vmatpush1.xpose.msra.mxu0 0.0
    %2924 = vmatprep.subr.mxu0 0.0
    %2925 = vmatpush1.xpose.msra.mxu0 0.0
    %2926 = vmatprep.subr.mxu0 0.0
    %2927 = vmatpush1.xpose.msra.mxu0 0.0
    %2928 = vmatprep.subr.mxu0 0.0
    %2929 = vmatpush1.xpose.msra.mxu0 0.0
    %2930 = vmatprep.subr.mxu0 0.0
    %2931 = vmatpush1.xpose.msra.mxu0 0.0
    %2932 = vmatprep.subr.mxu0 0.0
    %2933 = vmatpush1.xpose.msra.mxu0 0.0
    %2934 = vmatprep.subr.mxu0 0.0
    %2935 = vmatpush1.xpose.msra.mxu0 0.0
    %2936 = vmatprep.subr.mxu0 0.0
    %2937 = vmatpush1.xpose.msra.mxu0 0.0
    %2938 = vmatprep.subr.mxu0 0.0
    %2939 = vmatpush1.xpose.msra.mxu0 0.0
    %2940 = vmatprep.subr.mxu0 0.0
    %2941 = vmatpush1.xpose.msra.mxu0 0.0
    %2942 = vmatprep.subr.mxu0 0.0
    %2943 = vmatpush1.xpose.msra.mxu0 0.0
    %2944 = vmatprep.subr.mxu0 0.0
    %2945 = vmatpush1.xpose.msra.mxu0 0.0
    %2946 = vmatprep.subr.mxu0 0.0
    %2947 = vmatpush1.xpose.msra.mxu0 0.0
    %2948 = vmatprep.subr.mxu0 0.0
    %2949 = vmatpush1.xpose.msra.mxu0 0.0
    %2950 = vmatprep.subr.mxu0 0.0
    %2951 = vmatpush1.xpose.msra.mxu0 0.0
    %2952 = vmatprep.subr.mxu0 0.0
    %2953 = vmatpush1.xpose.msra.mxu0 0.0
    %2954 = vmatprep.subr.mxu0 0.0
    %2955 = vmatpush1.xpose.msra.mxu0 0.0
    %2956 = vmatprep.mubr.f32.mxu0 0.0
    %2957 = vmatmul.mubr.f32.gmra.mrb[0].mxu0 %v2888
    %v2958 = vpop.f32.mrb[0].mxu0
    %v2959 = vadd.f32 0.0, %v2958
    %v2960 = vpop.f32.mrb[0].mxu0
    %2961 = vmatprep.mubr.f32.mxu0 0.0
    %2962 = vmatmul.mubr.f32.gmra.mrb[0].mxu0 %v2890
    %v2963 = vpop.f32.mrb[0].mxu0
    %v2964 = vadd.f32 0.0, %v2963
    %v2965 = vpop.f32.mrb[0].mxu0
    %2966 = vdwg.mxu0
    %2967 = vrot.lane.b32.xlu0 %v2705, 64
    %v2968 = vpop.permute.xlu0 %2967
    %2969 = vrot.lane.b32.xlu0 %v2710, 64
    %v2970 = vpop.permute.xlu0 %2969
    %v2971 = vsel %vm324, %v2968, 0
    %v2973 = vsel %vm324, %v2970, 0
    %2975 = vmatprep.subr.mxu0 0.0
    %2976 = vmatpush1.xpose.msra.mxu0 %v2633
    %2977 = vmatprep.subr.mxu0 0.0
    %2978 = vmatpush1.xpose.msra.mxu0 %v2636
    %2979 = vmatprep.subr.mxu0 0.0
    %2980 = vmatpush1.xpose.msra.mxu0 0.0
    %2981 = vmatprep.subr.mxu0 0.0
    %2982 = vmatpush1.xpose.msra.mxu0 0.0
    %2983 = vmatprep.subr.mxu0 0.0
    %2984 = vmatpush1.xpose.msra.mxu0 0.0
    %2985 = vmatprep.subr.mxu0 0.0
    %2986 = vmatpush1.xpose.msra.mxu0 0.0
    %2987 = vmatprep.subr.mxu0 0.0
    %2988 = vmatpush1.xpose.msra.mxu0 0.0
    %2989 = vmatprep.subr.mxu0 0.0
    %2990 = vmatpush1.xpose.msra.mxu0 0.0
    %2991 = vmatprep.subr.mxu0 0.0
    %2992 = vmatpush1.xpose.msra.mxu0 0.0
    %2993 = vmatprep.subr.mxu0 0.0
    %2994 = vmatpush1.xpose.msra.mxu0 0.0
    %2995 = vmatprep.subr.mxu0 0.0
    %2996 = vmatpush1.xpose.msra.mxu0 0.0
    %2997 = vmatprep.subr.mxu0 0.0
    %2998 = vmatpush1.xpose.msra.mxu0 0.0
    %2999 = vmatprep.subr.mxu0 0.0
    %3000 = vmatpush1.xpose.msra.mxu0 0.0
    %3001 = vmatprep.subr.mxu0 0.0
    %3002 = vmatpush1.xpose.msra.mxu0 0.0
    %3003 = vmatprep.subr.mxu0 0.0
    %3004 = vmatpush1.xpose.msra.mxu0 0.0
    %3005 = vmatprep.subr.mxu0 0.0
    %3006 = vmatpush1.xpose.msra.mxu0 0.0
    %3007 = vmatprep.subr.mxu0 0.0
    %3008 = vmatpush1.xpose.msra.mxu0 0.0
    %3009 = vmatprep.subr.mxu0 0.0
    %3010 = vmatpush1.xpose.msra.mxu0 0.0
    %3011 = vmatprep.subr.mxu0 0.0
    %3012 = vmatpush1.xpose.msra.mxu0 0.0
    %3013 = vmatprep.subr.mxu0 0.0
    %3014 = vmatpush1.xpose.msra.mxu0 0.0
    %3015 = vmatprep.subr.mxu0 0.0
    %3016 = vmatpush1.xpose.msra.mxu0 0.0
    %3017 = vmatprep.subr.mxu0 0.0
    %3018 = vmatpush1.xpose.msra.mxu0 0.0
    %3019 = vmatprep.subr.mxu0 0.0
    %3020 = vmatpush1.xpose.msra.mxu0 0.0
    %3021 = vmatprep.subr.mxu0 0.0
    %3022 = vmatpush1.xpose.msra.mxu0 0.0
    %3023 = vmatprep.subr.mxu0 0.0
    %3024 = vmatpush1.xpose.msra.mxu0 0.0
    %3025 = vmatprep.subr.mxu0 0.0
    %3026 = vmatpush1.xpose.msra.mxu0 0.0
    %3027 = vmatprep.subr.mxu0 0.0
    %3028 = vmatpush1.xpose.msra.mxu0 0.0
    %3029 = vmatprep.subr.mxu0 0.0
    %3030 = vmatpush1.xpose.msra.mxu0 0.0
    %3031 = vmatprep.subr.mxu0 0.0
    %3032 = vmatpush1.xpose.msra.mxu0 0.0
    %3033 = vmatprep.subr.mxu0 0.0
    %3034 = vmatpush1.xpose.msra.mxu0 0.0
    %3035 = vmatprep.subr.mxu0 0.0
    %3036 = vmatpush1.xpose.msra.mxu0 0.0
    %3037 = vmatprep.subr.mxu0 0.0
    %3038 = vmatpush1.xpose.msra.mxu0 0.0
    %3039 = vmatprep.mubr.f32.mxu0 0.0
    %3040 = vmatmul.mubr.f32.gmra.mrb[0].mxu0 %v2971
    %v3041 = vpop.f32.mrb[0].mxu0
    %v3042 = vadd.f32 0.0, %v3041
    %v3043 = vpop.f32.mrb[0].mxu0
    %3044 = vmatprep.mubr.f32.mxu0 0.0
    %3045 = vmatmul.mubr.f32.gmra.mrb[0].mxu0 %v2973
    %v3046 = vpop.f32.mrb[0].mxu0
    %v3047 = vadd.f32 0.0, %v3046
    %v3048 = vpop.f32.mrb[0].mxu0
    %3049 = vdwg.mxu0
    %3050 = vrot.lane.b32.xlu0 %v2705, 32
    %v3051 = vpop.permute.xlu0 %3050
    %3052 = vrot.lane.b32.xlu0 %v2710, 32
    %v3053 = vpop.permute.xlu0 %3052
    %v3054 = vsel %vm324, %v3051, 0
    %v3056 = vsel %vm324, %v3053, 0
    %3058 = vmatprep.subr.mxu0 0.0
    %3059 = vmatpush1.xpose.msra.mxu0 %v2633
    %3060 = vmatprep.subr.mxu0 0.0
    %3061 = vmatpush1.xpose.msra.mxu0 %v2636
    %3062 = vmatprep.subr.mxu0 0.0
    %3063 = vmatpush1.xpose.msra.mxu0 0.0
    %3064 = vmatprep.subr.mxu0 0.0
    %3065 = vmatpush1.xpose.msra.mxu0 0.0
    %3066 = vmatprep.subr.mxu0 0.0
    %3067 = vmatpush1.xpose.msra.mxu0 0.0
    %3068 = vmatprep.subr.mxu0 0.0
    %3069 = vmatpush1.xpose.msra.mxu0 0.0
    %3070 = vmatprep.subr.mxu0 0.0
    %3071 = vmatpush1.xpose.msra.mxu0 0.0
    %3072 = vmatprep.subr.mxu0 0.0
    %3073 = vmatpush1.xpose.msra.mxu0 0.0
    %3074 = vmatprep.subr.mxu0 0.0
    %3075 = vmatpush1.xpose.msra.mxu0 0.0
    %3076 = vmatprep.subr.mxu0 0.0
    %3077 = vmatpush1.xpose.msra.mxu0 0.0
    %3078 = vmatprep.subr.mxu0 0.0
    %3079 = vmatpush1.xpose.msra.mxu0 0.0
    %3080 = vmatprep.subr.mxu0 0.0
    %3081 = vmatpush1.xpose.msra.mxu0 0.0
    %3082 = vmatprep.subr.mxu0 0.0
    %3083 = vmatpush1.xpose.msra.mxu0 0.0
    %3084 = vmatprep.subr.mxu0 0.0
    %3085 = vmatpush1.xpose.msra.mxu0 0.0
    %3086 = vmatprep.subr.mxu0 0.0
    %3087 = vmatpush1.xpose.msra.mxu0 0.0
    %3088 = vmatprep.subr.mxu0 0.0
    %3089 = vmatpush1.xpose.msra.mxu0 0.0
    %3090 = vmatprep.subr.mxu0 0.0
    %3091 = vmatpush1.xpose.msra.mxu0 0.0
    %3092 = vmatprep.subr.mxu0 0.0
    %3093 = vmatpush1.xpose.msra.mxu0 0.0
    %3094 = vmatprep.subr.mxu0 0.0
    %3095 = vmatpush1.xpose.msra.mxu0 0.0
    %3096 = vmatprep.subr.mxu0 0.0
    %3097 = vmatpush1.xpose.msra.mxu0 0.0
    %3098 = vmatprep.subr.mxu0 0.0
    %3099 = vmatpush1.xpose.msra.mxu0 0.0
    %3100 = vmatprep.subr.mxu0 0.0
    %3101 = vmatpush1.xpose.msra.mxu0 0.0
    %3102 = vmatprep.subr.mxu0 0.0
    %3103 = vmatpush1.xpose.msra.mxu0 0.0
    %3104 = vmatprep.subr.mxu0 0.0
    %3105 = vmatpush1.xpose.msra.mxu0 0.0
    %3106 = vmatprep.subr.mxu0 0.0
    %3107 = vmatpush1.xpose.msra.mxu0 0.0
    %3108 = vmatprep.subr.mxu0 0.0
    %3109 = vmatpush1.xpose.msra.mxu0 0.0
    %3110 = vmatprep.subr.mxu0 0.0
    %3111 = vmatpush1.xpose.msra.mxu0 0.0
    %3112 = vmatprep.subr.mxu0 0.0
    %3113 = vmatpush1.xpose.msra.mxu0 0.0
    %3114 = vmatprep.subr.mxu0 0.0
    %3115 = vmatpush1.xpose.msra.mxu0 0.0
    %3116 = vmatprep.subr.mxu0 0.0
    %3117 = vmatpush1.xpose.msra.mxu0 0.0
    %3118 = vmatprep.subr.mxu0 0.0
    %3119 = vmatpush1.xpose.msra.mxu0 0.0
    %3120 = vmatprep.subr.mxu0 0.0
    %3121 = vmatpush1.xpose.msra.mxu0 0.0
    %3122 = vmatprep.mubr.f32.mxu0 0.0
    %3123 = vmatmul.mubr.f32.gmra.mrb[0].mxu0 %v3054
    %v3124 = vpop.f32.mrb[0].mxu0
    %v3125 = vadd.f32 0.0, %v3124
    %v3126 = vpop.f32.mrb[0].mxu0
    %3127 = vmatprep.mubr.f32.mxu0 0.0
    %3128 = vmatmul.mubr.f32.gmra.mrb[0].mxu0 %v3056
    %v3129 = vpop.f32.mrb[0].mxu0
    %v3130 = vadd.f32 0.0, %v3129
    %v3131 = vpop.f32.mrb[0].mxu0
    %3132 = vdwg.mxu0
    %v3133 = vadd.f32 %v2876, %v296
    %v3134 = vadd.f32 %v2881, %v297
    %v3135 = vadd.f32 %v2959, %v298
    %v3136 = vadd.f32 %v2964, %v299
    %v3137 = vadd.f32 %v3042, %v300
    %v3138 = vadd.f32 %v3047, %v301
    %v3139 = vadd.f32 %v3125, %v302
    %v3140 = vadd.f32 %v3130, %v303
    %v3141 = vsel %vm949, %v3133, -inf
    %3142 = vmax.xlane.f32.xlu0 %v3141
    %v3143 = vpop.xlane.xlu0 %3142
    %v3144 = vsel %vm949, %v3134, -inf
    %3145 = vmax.xlane.f32.xlu0 %v3144
    %v3146 = vpop.xlane.xlu0 %3145
    %v3147 = vsel %vm949, %v3135, -inf
    %3148 = vmax.xlane.f32.xlu0 %v3147
    %v3149 = vpop.xlane.xlu0 %3148
    %v3150 = vsel %vm949, %v3136, -inf
    %3151 = vmax.xlane.f32.xlu0 %v3150
    %v3152 = vpop.xlane.xlu0 %3151
    %v3153 = vsel %vm949, %v3137, -inf
    %3154 = vmax.xlane.f32.xlu0 %v3153
    %v3155 = vpop.xlane.xlu0 %3154
    %v3156 = vsel %vm949, %v3138, -inf
    %3157 = vmax.xlane.f32.xlu0 %v3156
    %v3158 = vpop.xlane.xlu0 %3157
    %v3159 = vsel %vm949, %v3139, -inf
    %3160 = vmax.xlane.f32.xlu0 %v3159
    %v3161 = vpop.xlane.xlu0 %3160
    %v3162 = vsel %vm949, %v3140, -inf
    %3163 = vmax.xlane.f32.xlu0 %v3162
    %v3164 = vpop.xlane.xlu0 %3163
    %v3165 = vsub.f32 %v3133, %v3143
    %v3166 = vsub.f32 %v3134, %v3146
    %v3167 = vsub.f32 %v3135, %v3149
    %v3168 = vsub.f32 %v3136, %v3152
    %v3169 = vsub.f32 %v3137, %v3155
    %v3170 = vsub.f32 %v3138, %v3158
    %v3171 = vsub.f32 %v3139, %v3161
    %v3172 = vsub.f32 %v3140, %v3164
    %v3173 = vmul.f32 %v3165, 1.442695
    %v3174 = vpow.pop %v3173
    %v3175 = vmul.f32 %v3166, 1.442695
    %v3176 = vpow.pop %v3175
    %v3177 = vmul.f32 %v3167, 1.442695
    %v3178 = vpow.pop %v3177
    %v3179 = vmul.f32 %v3168, 1.442695
    %v3180 = vpow.pop %v3179
    %v3181 = vmul.f32 %v3169, 1.442695
    %v3182 = vpow.pop %v3181
    %v3183 = vmul.f32 %v3170, 1.442695
    %v3184 = vpow.pop %v3183
    %v3185 = vmul.f32 %v3171, 1.442695
    %v3186 = vpow.pop %v3185
    %v3187 = vmul.f32 %v3172, 1.442695
    %v3188 = vpow.pop %v3187
    %v3189 = vsel %vm949, %v3174, 0.0
    %3190 = vadd.xlane.f32.xlu0 %v3189
    %v3191 = vpop.xlane.xlu0 %3190
    %v3192 = vsel %vm949, %v3176, 0.0
    %3193 = vadd.xlane.f32.xlu0 %v3192
    %v3194 = vpop.xlane.xlu0 %3193
    %v3195 = vsel %vm949, %v3178, 0.0
    %3196 = vadd.xlane.f32.xlu0 %v3195
    %v3197 = vpop.xlane.xlu0 %3196
    %v3198 = vsel %vm949, %v3180, 0.0
    %3199 = vadd.xlane.f32.xlu0 %v3198
    %v3200 = vpop.xlane.xlu0 %3199
    %v3201 = vsel %vm949, %v3182, 0.0
    %3202 = vadd.xlane.f32.xlu0 %v3201
    %v3203 = vpop.xlane.xlu0 %3202
    %v3204 = vsel %vm949, %v3184, 0.0
    %3205 = vadd.xlane.f32.xlu0 %v3204
    %v3206 = vpop.xlane.xlu0 %3205
    %v3207 = vsel %vm949, %v3186, 0.0
    %3208 = vadd.xlane.f32.xlu0 %v3207
    %v3209 = vpop.xlane.xlu0 %3208
    %v3210 = vsel %vm949, %v3188, 0.0
    %3211 = vadd.xlane.f32.xlu0 %v3210
    %v3212 = vpop.xlane.xlu0 %3211
    %v3213 = vrcp.pop %v3191
    %v3214 = vrcp.pop %v3194
    %v3215 = vrcp.pop %v3197
    %v3216 = vrcp.pop %v3200
    %v3217 = vrcp.pop %v3203
    %v3218 = vrcp.pop %v3206
    %v3219 = vrcp.pop %v3209
    %v3220 = vrcp.pop %v3212
    %v3221 = vmul.f32 %v3174, %v3213
    %v3222 = vmul.f32 %v3176, %v3214
    %v3223 = vmul.f32 %v3178, %v3215
    %v3224 = vmul.f32 %v3180, %v3216
    %v3225 = vmul.f32 %v3182, %v3217
    %v3226 = vmul.f32 %v3184, %v3218
    %v3227 = vmul.f32 %v3186, %v3219
    %v3228 = vmul.f32 %v3188, %v3220
    %3231 = vrot.lane.b32.xlu0 %v2795, 96
    %v3232 = vpop.permute.xlu0 %3231
    %3233 = vrot.lane.b32.xlu0 %v2800, 96
    %v3234 = vpop.permute.xlu0 %3233
    %v3238 = vsel %vm949, %v3223, 0
    %v3241 = vsel %vm949, %v3224, 0
    %3243 = vmatprep.subr.mxu0 0.0
    %3244 = vmatpush1.msra.mxu0 %v3232
    %3245 = vmatprep.subr.mxu0 0.0
    %3246 = vmatpush1.msra.mxu0 %v3234
    %3247 = vmatprep.subr.mxu0 0.0
    %3248 = vmatpush1.msra.mxu0 0.0
    %3249 = vmatprep.subr.mxu0 0.0
    %3250 = vmatpush1.msra.mxu0 0.0
    %3251 = vmatprep.subr.mxu0 0.0
    %3252 = vmatpush1.msra.mxu0 0.0
    %3253 = vmatprep.subr.mxu0 0.0
    %3254 = vmatpush1.msra.mxu0 0.0
    %3255 = vmatprep.subr.mxu0 0.0
    %3256 = vmatpush1.msra.mxu0 0.0
    %3257 = vmatprep.subr.mxu0 0.0
    %3258 = vmatpush1.msra.mxu0 0.0
    %3259 = vmatprep.subr.mxu0 0.0
    %3260 = vmatpush1.msra.mxu0 0.0
    %3261 = vmatprep.subr.mxu0 0.0
    %3262 = vmatpush1.msra.mxu0 0.0
    %3263 = vmatprep.subr.mxu0 0.0
    %3264 = vmatpush1.msra.mxu0 0.0
    %3265 = vmatprep.subr.mxu0 0.0
    %3266 = vmatpush1.msra.mxu0 0.0
    %3267 = vmatprep.subr.mxu0 0.0
    %3268 = vmatpush1.msra.mxu0 0.0
    %3269 = vmatprep.subr.mxu0 0.0
    %3270 = vmatpush1.msra.mxu0 0.0
    %3271 = vmatprep.subr.mxu0 0.0
    %3272 = vmatpush1.msra.mxu0 0.0
    %3273 = vmatprep.subr.mxu0 0.0
    %3274 = vmatpush1.msra.mxu0 0.0
    %3275 = vmatprep.subr.mxu0 0.0
    %3276 = vmatpush1.msra.mxu0 0.0
    %3277 = vmatprep.subr.mxu0 0.0
    %3278 = vmatpush1.msra.mxu0 0.0
    %3279 = vmatprep.subr.mxu0 0.0
    %3280 = vmatpush1.msra.mxu0 0.0
    %3281 = vmatprep.subr.mxu0 0.0
    %3282 = vmatpush1.msra.mxu0 0.0
    %3283 = vmatprep.subr.mxu0 0.0
    %3284 = vmatpush1.msra.mxu0 0.0
    %3285 = vmatprep.subr.mxu0 0.0
    %3286 = vmatpush1.msra.mxu0 0.0
    %3287 = vmatprep.subr.mxu0 0.0
    %3288 = vmatpush1.msra.mxu0 0.0
    %3289 = vmatprep.subr.mxu0 0.0
    %3290 = vmatpush1.msra.mxu0 0.0
    %3291 = vmatprep.subr.mxu0 0.0
    %3292 = vmatpush1.msra.mxu0 0.0
    %3293 = vmatprep.subr.mxu0 0.0
    %3294 = vmatpush1.msra.mxu0 0.0
    %3295 = vmatprep.subr.mxu0 0.0
    %3296 = vmatpush1.msra.mxu0 0.0
    %3297 = vmatprep.subr.mxu0 0.0
    %3298 = vmatpush1.msra.mxu0 0.0
    %3299 = vmatprep.subr.mxu0 0.0
    %3300 = vmatpush1.msra.mxu0 0.0
    %3301 = vmatprep.subr.mxu0 0.0
    %3302 = vmatpush1.msra.mxu0 0.0
    %3303 = vmatprep.subr.mxu0 0.0
    %3304 = vmatpush1.msra.mxu0 0.0
    %3305 = vmatprep.subr.mxu0 0.0
    %3306 = vmatpush1.msra.mxu0 0.0
    %3307 = vmatprep.mubr.f32.mxu0 0.0
    %3308 = vmatmul.mubr.f32.gmra.mrb[0].mxu0 %v3238
    %v3309 = vpop.f32.mrb[0].mxu0
    %v3310 = vadd.f32 0.0, %v3309
    %v3311 = vpop.f32.mrb[0].mxu0
    %3312 = vmatprep.mubr.f32.mxu0 0.0
    %3313 = vmatmul.mubr.f32.gmra.mrb[0].mxu0 %v3241
    %v3314 = vpop.f32.mrb[0].mxu0
    %v3315 = vadd.f32 0.0, %v3314
    %v3316 = vpop.f32.mrb[0].mxu0
    %3317 = vdwg.mxu0
    %v3319 = vsel %vm949, %v3221, 0
    %v3322 = vsel %vm949, %v3222, 0
    %3324 = vmatprep.subr.mxu0 0.0
    %3325 = vmatpush1.msra.mxu0 %v2795
    %3326 = vmatprep.subr.mxu0 0.0
    %3327 = vmatpush1.msra.mxu0 %v2800
    %3328 = vmatprep.subr.mxu0 0.0
    %3329 = vmatpush1.msra.mxu0 0.0
    %3330 = vmatprep.subr.mxu0 0.0
    %3331 = vmatpush1.msra.mxu0 0.0
    %3332 = vmatprep.subr.mxu0 0.0
    %3333 = vmatpush1.msra.mxu0 0.0
    %3334 = vmatprep.subr.mxu0 0.0
    %3335 = vmatpush1.msra.mxu0 0.0
    %3336 = vmatprep.subr.mxu0 0.0
    %3337 = vmatpush1.msra.mxu0 0.0
    %3338 = vmatprep.subr.mxu0 0.0
    %3339 = vmatpush1.msra.mxu0 0.0
    %3340 = vmatprep.subr.mxu0 0.0
    %3341 = vmatpush1.msra.mxu0 0.0
    %3342 = vmatprep.subr.mxu0 0.0
    %3343 = vmatpush1.msra.mxu0 0.0
    %3344 = vmatprep.subr.mxu0 0.0
    %3345 = vmatpush1.msra.mxu0 0.0
    %3346 = vmatprep.subr.mxu0 0.0
    %3347 = vmatpush1.msra.mxu0 0.0
    %3348 = vmatprep.subr.mxu0 0.0
    %3349 = vmatpush1.msra.mxu0 0.0
    %3350 = vmatprep.subr.mxu0 0.0
    %3351 = vmatpush1.msra.mxu0 0.0
    %3352 = vmatprep.subr.mxu0 0.0
    %3353 = vmatpush1.msra.mxu0 0.0
    %3354 = vmatprep.subr.mxu0 0.0
    %3355 = vmatpush1.msra.mxu0 0.0
    %3356 = vmatprep.subr.mxu0 0.0
    %3357 = vmatpush1.msra.mxu0 0.0
    %3358 = vmatprep.subr.mxu0 0.0
    %3359 = vmatpush1.msra.mxu0 0.0
    %3360 = vmatprep.subr.mxu0 0.0
    %3361 = vmatpush1.msra.mxu0 0.0
    %3362 = vmatprep.subr.mxu0 0.0
    %3363 = vmatpush1.msra.mxu0 0.0
    %3364 = vmatprep.subr.mxu0 0.0
    %3365 = vmatpush1.msra.mxu0 0.0
    %3366 = vmatprep.subr.mxu0 0.0
    %3367 = vmatpush1.msra.mxu0 0.0
    %3368 = vmatprep.subr.mxu0 0.0
    %3369 = vmatpush1.msra.mxu0 0.0
    %3370 = vmatprep.subr.mxu0 0.0
    %3371 = vmatpush1.msra.mxu0 0.0
    %3372 = vmatprep.subr.mxu0 0.0
    %3373 = vmatpush1.msra.mxu0 0.0
    %3374 = vmatprep.subr.mxu0 0.0
    %3375 = vmatpush1.msra.mxu0 0.0
    %3376 = vmatprep.subr.mxu0 0.0
    %3377 = vmatpush1.msra.mxu0 0.0
    %3378 = vmatprep.subr.mxu0 0.0
    %3379 = vmatpush1.msra.mxu0 0.0
    %3380 = vmatprep.subr.mxu0 0.0
    %3381 = vmatpush1.msra.mxu0 0.0
    %3382 = vmatprep.subr.mxu0 0.0
    %3383 = vmatpush1.msra.mxu0 0.0
    %3384 = vmatprep.subr.mxu0 0.0
    %3385 = vmatpush1.msra.mxu0 0.0
    %3386 = vmatprep.subr.mxu0 0.0
    %3387 = vmatpush1.msra.mxu0 0.0
    %3388 = vmatprep.mubr.f32.mxu0 0.0
    %3389 = vmatmul.mubr.f32.gmra.mrb[0].mxu0 %v3319
    %v3390 = vpop.f32.mrb[0].mxu0
    %v3391 = vadd.f32 %v3310, %v3390
    %v3392 = vpop.f32.mrb[0].mxu0
    %3393 = vmatprep.mubr.f32.mxu0 0.0
    %3394 = vmatmul.mubr.f32.gmra.mrb[0].mxu0 %v3322
    %v3395 = vpop.f32.mrb[0].mxu0
    %v3396 = vadd.f32 %v3315, %v3395
    %v3397 = vpop.f32.mrb[0].mxu0
    %3398 = vdwg.mxu0
    %3399 = vrot.lane.b32.xlu0 %v2795, 64
    %v3400 = vpop.permute.xlu0 %3399
    %3401 = vrot.lane.b32.xlu0 %v2800, 64
    %v3402 = vpop.permute.xlu0 %3401
    %v3406 = vsel %vm949, %v3225, 0
    %v3409 = vsel %vm949, %v3226, 0
    %3411 = vmatprep.subr.mxu0 0.0
    %3412 = vmatpush1.msra.mxu0 %v3400
    %3413 = vmatprep.subr.mxu0 0.0
    %3414 = vmatpush1.msra.mxu0 %v3402
    %3415 = vmatprep.subr.mxu0 0.0
    %3416 = vmatpush1.msra.mxu0 0.0
    %3417 = vmatprep.subr.mxu0 0.0
    %3418 = vmatpush1.msra.mxu0 0.0
    %3419 = vmatprep.subr.mxu0 0.0
    %3420 = vmatpush1.msra.mxu0 0.0
    %3421 = vmatprep.subr.mxu0 0.0
    %3422 = vmatpush1.msra.mxu0 0.0
    %3423 = vmatprep.subr.mxu0 0.0
    %3424 = vmatpush1.msra.mxu0 0.0
    %3425 = vmatprep.subr.mxu0 0.0
    %3426 = vmatpush1.msra.mxu0 0.0
    %3427 = vmatprep.subr.mxu0 0.0
    %3428 = vmatpush1.msra.mxu0 0.0
    %3429 = vmatprep.subr.mxu0 0.0
    %3430 = vmatpush1.msra.mxu0 0.0
    %3431 = vmatprep.subr.mxu0 0.0
    %3432 = vmatpush1.msra.mxu0 0.0
    %3433 = vmatprep.subr.mxu0 0.0
    %3434 = vmatpush1.msra.mxu0 0.0
    %3435 = vmatprep.subr.mxu0 0.0
    %3436 = vmatpush1.msra.mxu0 0.0
    %3437 = vmatprep.subr.mxu0 0.0
    %3438 = vmatpush1.msra.mxu0 0.0
    %3439 = vmatprep.subr.mxu0 0.0
    %3440 = vmatpush1.msra.mxu0 0.0
    %3441 = vmatprep.subr.mxu0 0.0
    %3442 = vmatpush1.msra.mxu0 0.0
    %3443 = vmatprep.subr.mxu0 0.0
    %3444 = vmatpush1.msra.mxu0 0.0
    %3445 = vmatprep.subr.mxu0 0.0
    %3446 = vmatpush1.msra.mxu0 0.0
    %3447 = vmatprep.subr.mxu0 0.0
    %3448 = vmatpush1.msra.mxu0 0.0
    %3449 = vmatprep.subr.mxu0 0.0
    %3450 = vmatpush1.msra.mxu0 0.0
    %3451 = vmatprep.subr.mxu0 0.0
    %3452 = vmatpush1.msra.mxu0 0.0
    %3453 = vmatprep.subr.mxu0 0.0
    %3454 = vmatpush1.msra.mxu0 0.0
    %3455 = vmatprep.subr.mxu0 0.0
    %3456 = vmatpush1.msra.mxu0 0.0
    %3457 = vmatprep.subr.mxu0 0.0
    %3458 = vmatpush1.msra.mxu0 0.0
    %3459 = vmatprep.subr.mxu0 0.0
    %3460 = vmatpush1.msra.mxu0 0.0
    %3461 = vmatprep.subr.mxu0 0.0
    %3462 = vmatpush1.msra.mxu0 0.0
    %3463 = vmatprep.subr.mxu0 0.0
    %3464 = vmatpush1.msra.mxu0 0.0
    %3465 = vmatprep.subr.mxu0 0.0
    %3466 = vmatpush1.msra.mxu0 0.0
    %3467 = vmatprep.subr.mxu0 0.0
    %3468 = vmatpush1.msra.mxu0 0.0
    %3469 = vmatprep.subr.mxu0 0.0
    %3470 = vmatpush1.msra.mxu0 0.0
    %3471 = vmatprep.subr.mxu0 0.0
    %3472 = vmatpush1.msra.mxu0 0.0
    %3473 = vmatprep.subr.mxu0 0.0
    %3474 = vmatpush1.msra.mxu0 0.0
    %3475 = vmatprep.mubr.f32.mxu0 0.0
    %3476 = vmatmul.mubr.f32.gmra.mrb[0].mxu0 %v3406
    %v3477 = vpop.f32.mrb[0].mxu0
    %v3478 = vadd.f32 0.0, %v3477
    %v3479 = vpop.f32.mrb[0].mxu0
    %3480 = vmatprep.mubr.f32.mxu0 0.0
    %3481 = vmatmul.mubr.f32.gmra.mrb[0].mxu0 %v3409
    %v3482 = vpop.f32.mrb[0].mxu0
    %v3483 = vadd.f32 0.0, %v3482
    %v3484 = vpop.f32.mrb[0].mxu0
    %3485 = vdwg.mxu0
    %v3486 = vadd.f32 %v3391, %v3478
    %v3487 = vadd.f32 %v3396, %v3483
    %3488 = vrot.lane.b32.xlu0 %v2795, 32
    %v3489 = vpop.permute.xlu0 %3488
    %3490 = vrot.lane.b32.xlu0 %v2800, 32
    %v3491 = vpop.permute.xlu0 %3490
    %v3495 = vsel %vm949, %v3227, 0
    %v3498 = vsel %vm949, %v3228, 0
    %3500 = vmatprep.subr.mxu0 0.0
    %3501 = vmatpush1.msra.mxu0 %v3489
    %3502 = vmatprep.subr.mxu0 0.0
    %3503 = vmatpush1.msra.mxu0 %v3491
    %3504 = vmatprep.subr.mxu0 0.0
    %3505 = vmatpush1.msra.mxu0 0.0
    %3506 = vmatprep.subr.mxu0 0.0
    %3507 = vmatpush1.msra.mxu0 0.0
    %3508 = vmatprep.subr.mxu0 0.0
    %3509 = vmatpush1.msra.mxu0 0.0
    %3510 = vmatprep.subr.mxu0 0.0
    %3511 = vmatpush1.msra.mxu0 0.0
    %3512 = vmatprep.subr.mxu0 0.0
    %3513 = vmatpush1.msra.mxu0 0.0
    %3514 = vmatprep.subr.mxu0 0.0
    %3515 = vmatpush1.msra.mxu0 0.0
    %3516 = vmatprep.subr.mxu0 0.0
    %3517 = vmatpush1.msra.mxu0 0.0
    %3518 = vmatprep.subr.mxu0 0.0
    %3519 = vmatpush1.msra.mxu0 0.0
    %3520 = vmatprep.subr.mxu0 0.0
    %3521 = vmatpush1.msra.mxu0 0.0
    %3522 = vmatprep.subr.mxu0 0.0
    %3523 = vmatpush1.msra.mxu0 0.0
    %3524 = vmatprep.subr.mxu0 0.0
    %3525 = vmatpush1.msra.mxu0 0.0
    %3526 = vmatprep.subr.mxu0 0.0
    %3527 = vmatpush1.msra.mxu0 0.0
    %3528 = vmatprep.subr.mxu0 0.0
    %3529 = vmatpush1.msra.mxu0 0.0
    %3530 = vmatprep.subr.mxu0 0.0
    %3531 = vmatpush1.msra.mxu0 0.0
    %3532 = vmatprep.subr.mxu0 0.0
    %3533 = vmatpush1.msra.mxu0 0.0
    %3534 = vmatprep.subr.mxu0 0.0
    %3535 = vmatpush1.msra.mxu0 0.0
    %3536 = vmatprep.subr.mxu0 0.0
    %3537 = vmatpush1.msra.mxu0 0.0
    %3538 = vmatprep.subr.mxu0 0.0
    %3539 = vmatpush1.msra.mxu0 0.0
    %3540 = vmatprep.subr.mxu0 0.0
    %3541 = vmatpush1.msra.mxu0 0.0
    %3542 = vmatprep.subr.mxu0 0.0
    %3543 = vmatpush1.msra.mxu0 0.0
    %3544 = vmatprep.subr.mxu0 0.0
    %3545 = vmatpush1.msra.mxu0 0.0
    %3546 = vmatprep.subr.mxu0 0.0
    %3547 = vmatpush1.msra.mxu0 0.0
    %3548 = vmatprep.subr.mxu0 0.0
    %3549 = vmatpush1.msra.mxu0 0.0
    %3550 = vmatprep.subr.mxu0 0.0
    %3551 = vmatpush1.msra.mxu0 0.0
    %3552 = vmatprep.subr.mxu0 0.0
    %3553 = vmatpush1.msra.mxu0 0.0
    %3554 = vmatprep.subr.mxu0 0.0
    %3555 = vmatpush1.msra.mxu0 0.0
    %3556 = vmatprep.subr.mxu0 0.0
    %3557 = vmatpush1.msra.mxu0 0.0
    %3558 = vmatprep.subr.mxu0 0.0
    %3559 = vmatpush1.msra.mxu0 0.0
    %3560 = vmatprep.subr.mxu0 0.0
    %3561 = vmatpush1.msra.mxu0 0.0
    %3562 = vmatprep.subr.mxu0 0.0
    %3563 = vmatpush1.msra.mxu0 0.0
    %3564 = vmatprep.mubr.f32.mxu0 0.0
    %3565 = vmatmul.mubr.f32.gmra.mrb[0].mxu0 %v3495
    %v3566 = vpop.f32.mrb[0].mxu0
    %v3567 = vadd.f32 0.0, %v3566
    %v3568 = vpop.f32.mrb[0].mxu0
    %3569 = vmatprep.mubr.f32.mxu0 0.0
    %3570 = vmatmul.mubr.f32.gmra.mrb[0].mxu0 %v3498
    %v3571 = vpop.f32.mrb[0].mxu0
    %v3572 = vadd.f32 0.0, %v3571
    %v3573 = vpop.f32.mrb[0].mxu0
    %3574 = vdwg.mxu0
    %v3575 = vadd.f32 %v3486, %v3567
    %v3576 = vadd.f32 %v3487, %v3572
    %v3577 = vlaneseq
    %v3578 = vshrl.u32 %v3577, 7
    %v3579 = vsub.s32 0, %v3578
    %v3580 = vrot.slane %v2615, %v3579
    %v3581 = vadd.f32 %v3575, %v3580
    %v3582 = vadd.f32 %v3576, %v3580
    %v3583 = vadd.f32 %v2612, %v3581
    %v3584 = vadd.f32 %v2613, %v3582
    %v3585 = vmul.f32 %v3583, %v3583
    %v3586 = vmul.f32 %v3584, %v3584
    %v3587 = vsel %vm324, %v3583, 0.0
    %3588 = vadd.xlane.f32.xlu0 %v3587
    %v3589 = vpop.xlane.xlu0 %3588
    %v3590 = vsel %vm324, %v3584, 0.0
    %3591 = vadd.xlane.f32.xlu0 %v3590
    %v3592 = vpop.xlane.xlu0 %3591
    %v3593 = vsel %vm324, %v3585, 0.0
    %3594 = vadd.xlane.f32.xlu0 %v3593
    %v3595 = vpop.xlane.xlu0 %3594
    %v3596 = vsel %vm324, %v3586, 0.0
    %3597 = vadd.xlane.f32.xlu0 %v3596
    %v3598 = vpop.xlane.xlu0 %3597
    %v3599 = vmul.f32 %v3589, 0.03125
    %v3600 = vmul.f32 %v3592, 0.03125
    %v3601 = vmul.f32 %v3595, 0.03125
    %v3602 = vmul.f32 %v3598, 0.03125
    %v3603 = vmul.f32 %v3599, %v3599
    %v3604 = vmul.f32 %v3600, %v3600
    %v3605 = vsub.f32 %v3601, %v3603
    %v3606 = vsub.f32 %v3602, %v3604
    %v3607 = vsub.f32 %v3583, %v3599
    %v3608 = vsub.f32 %v3584, %v3600
    %v3609 = vadd.f32 %v3605, 1e-05
    %v3610 = vadd.f32 %v3606, 1e-05
    %v3611 = vrsqrt.pop %v3609
    %v3612 = vrsqrt.pop %v3610
    %v3613 = vmul.f32 %v3607, %v3611
    %v3614 = vmul.f32 %v3608, %v3612
    %v3615 = vlaneseq
    %v3616 = vshrl.u32 %v3615, 7
    %v3617 = vsub.s32 3, %v3616
    %v3618 = vrot.slane %v2615, %v3617
    %v3619 = vmul.f32 %v3613, %v3618
    %v3620 = vmul.f32 %v3614, %v3618
    %v3621 = vlaneseq
    %v3622 = vshrl.u32 %v3621, 7
    %v3623 = vsub.s32 4, %v3622
    %v3624 = vrot.slane %v2615, %v3623
    %v3625 = vadd.f32 %v3619, %v3624
    %v3626 = vadd.f32 %v3620, %v3624
    %v3627 = vadd.f32 %v3625, %v159
    %v3628 = vadd.f32 %v3626, %v160
    %s3629 = scalar_lea.vmem %s5, 32
    %v3630 = vld [vmem:[%s3629] sm:$0xff]
    %v3631 = vld [vmem:[%s3629 + $0x8] sm:$0xff]
    %v3632 = vld [vmem:[%s3629 + $0x10] sm:$0xff]
    %v3633 = vld [vmem:[%s3629 + $0x18] sm:$0xff]
    %v3634 = vlaneseq
    %v3635 = vshrl.u32 %v3634, 7
    %v3636 = vsub.s32 2, %v3635
    %v3637 = vrot.slane %v2618, %v3636
    %v3639 = vsel %vm324, %v3627, 0
    %v3642 = vsel %vm324, %v3628, 0
    %3644 = vmatprep.subr.mxu0 0.0
    %3645 = vmatpush1.msra.mxu0 %v3630
    %3646 = vmatprep.subr.mxu0 0.0
    %3647 = vmatpush1.msra.mxu0 %v3631
    %3648 = vmatprep.subr.mxu0 0.0
    %3649 = vmatpush1.msra.mxu0 %v3632
    %3650 = vmatprep.subr.mxu0 0.0
    %3651 = vmatpush1.msra.mxu0 %v3633
    %3652 = vmatprep.subr.mxu0 0.0
    %3653 = vmatpush1.msra.mxu0 0.0
    %3654 = vmatprep.subr.mxu0 0.0
    %3655 = vmatpush1.msra.mxu0 0.0
    %3656 = vmatprep.subr.mxu0 0.0
    %3657 = vmatpush1.msra.mxu0 0.0
    %3658 = vmatprep.subr.mxu0 0.0
    %3659 = vmatpush1.msra.mxu0 0.0
    %3660 = vmatprep.subr.mxu0 0.0
    %3661 = vmatpush1.msra.mxu0 0.0
    %3662 = vmatprep.subr.mxu0 0.0
    %3663 = vmatpush1.msra.mxu0 0.0
    %3664 = vmatprep.subr.mxu0 0.0
    %3665 = vmatpush1.msra.mxu0 0.0
    %3666 = vmatprep.subr.mxu0 0.0
    %3667 = vmatpush1.msra.mxu0 0.0
    %3668 = vmatprep.subr.mxu0 0.0
    %3669 = vmatpush1.msra.mxu0 0.0
    %3670 = vmatprep.subr.mxu0 0.0
    %3671 = vmatpush1.msra.mxu0 0.0
    %3672 = vmatprep.subr.mxu0 0.0
    %3673 = vmatpush1.msra.mxu0 0.0
    %3674 = vmatprep.subr.mxu0 0.0
    %3675 = vmatpush1.msra.mxu0 0.0
    %3676 = vmatprep.subr.mxu0 0.0
    %3677 = vmatpush1.msra.mxu0 0.0
    %3678 = vmatprep.subr.mxu0 0.0
    %3679 = vmatpush1.msra.mxu0 0.0
    %3680 = vmatprep.subr.mxu0 0.0
    %3681 = vmatpush1.msra.mxu0 0.0
    %3682 = vmatprep.subr.mxu0 0.0
    %3683 = vmatpush1.msra.mxu0 0.0
    %3684 = vmatprep.subr.mxu0 0.0
    %3685 = vmatpush1.msra.mxu0 0.0
    %3686 = vmatprep.subr.mxu0 0.0
    %3687 = vmatpush1.msra.mxu0 0.0
    %3688 = vmatprep.subr.mxu0 0.0
    %3689 = vmatpush1.msra.mxu0 0.0
    %3690 = vmatprep.subr.mxu0 0.0
    %3691 = vmatpush1.msra.mxu0 0.0
    %3692 = vmatprep.subr.mxu0 0.0
    %3693 = vmatpush1.msra.mxu0 0.0
    %3694 = vmatprep.subr.mxu0 0.0
    %3695 = vmatpush1.msra.mxu0 0.0
    %3696 = vmatprep.subr.mxu0 0.0
    %3697 = vmatpush1.msra.mxu0 0.0
    %3698 = vmatprep.subr.mxu0 0.0
    %3699 = vmatpush1.msra.mxu0 0.0
    %3700 = vmatprep.subr.mxu0 0.0
    %3701 = vmatpush1.msra.mxu0 0.0
    %3702 = vmatprep.subr.mxu0 0.0
    %3703 = vmatpush1.msra.mxu0 0.0
    %3704 = vmatprep.subr.mxu0 0.0
    %3705 = vmatpush1.msra.mxu0 0.0
    %3706 = vmatprep.subr.mxu0 0.0
    %3707 = vmatpush1.msra.mxu0 0.0
    %3708 = vmatprep.mubr.f32.mxu0 0.0
    %3709 = vmatmul.mubr.f32.gmra.mrb[0].mxu0 %v3639
    %v3710 = vpop.f32.mrb[0].mxu0
    %v3711 = vadd.f32 %v3637, %v3710
    %v3712 = vpop.f32.mrb[0].mxu0
    %3713 = vmatprep.mubr.f32.mxu0 0.0
    %3714 = vmatmul.mubr.f32.gmra.mrb[0].mxu0 %v3642
    %v3715 = vpop.f32.mrb[0].mxu0
    %v3716 = vadd.f32 %v3637, %v3715
    %v3717 = vpop.f32.mrb[0].mxu0
    %3718 = vdwg.mxu0
    %v3720 = vsel %vm324, %v3711, 0
    %v3723 = vsel %vm324, %v3716, 0
    %3725 = vmatprep.subr.mxu0 0.0
    %3726 = vmatpush1.xpose.msra.mxu0 %v1534
    %3727 = vmatprep.subr.mxu0 0.0
    %3728 = vmatpush1.xpose.msra.mxu0 %v1537
    %3729 = vmatprep.subr.mxu0 0.0
    %3730 = vmatpush1.xpose.msra.mxu0 %v1540
    %3731 = vmatprep.subr.mxu0 0.0
    %3732 = vmatpush1.xpose.msra.mxu0 %v1543
    %3733 = vmatprep.subr.mxu0 0.0
    %3734 = vmatpush1.xpose.msra.mxu0 0.0
    %3735 = vmatprep.subr.mxu0 0.0
    %3736 = vmatpush1.xpose.msra.mxu0 0.0
    %3737 = vmatprep.subr.mxu0 0.0
    %3738 = vmatpush1.xpose.msra.mxu0 0.0
    %3739 = vmatprep.subr.mxu0 0.0
    %3740 = vmatpush1.xpose.msra.mxu0 0.0
    %3741 = vmatprep.subr.mxu0 0.0
    %3742 = vmatpush1.xpose.msra.mxu0 0.0
    %3743 = vmatprep.subr.mxu0 0.0
    %3744 = vmatpush1.xpose.msra.mxu0 0.0
    %3745 = vmatprep.subr.mxu0 0.0
    %3746 = vmatpush1.xpose.msra.mxu0 0.0
    %3747 = vmatprep.subr.mxu0 0.0
    %3748 = vmatpush1.xpose.msra.mxu0 0.0
    %3749 = vmatprep.subr.mxu0 0.0
    %3750 = vmatpush1.xpose.msra.mxu0 0.0
    %3751 = vmatprep.subr.mxu0 0.0
    %3752 = vmatpush1.xpose.msra.mxu0 0.0
    %3753 = vmatprep.subr.mxu0 0.0
    %3754 = vmatpush1.xpose.msra.mxu0 0.0
    %3755 = vmatprep.subr.mxu0 0.0
    %3756 = vmatpush1.xpose.msra.mxu0 0.0
    %3757 = vmatprep.subr.mxu0 0.0
    %3758 = vmatpush1.xpose.msra.mxu0 0.0
    %3759 = vmatprep.subr.mxu0 0.0
    %3760 = vmatpush1.xpose.msra.mxu0 0.0
    %3761 = vmatprep.subr.mxu0 0.0
    %3762 = vmatpush1.xpose.msra.mxu0 0.0
    %3763 = vmatprep.subr.mxu0 0.0
    %3764 = vmatpush1.xpose.msra.mxu0 0.0
    %3765 = vmatprep.subr.mxu0 0.0
    %3766 = vmatpush1.xpose.msra.mxu0 0.0
    %3767 = vmatprep.subr.mxu0 0.0
    %3768 = vmatpush1.xpose.msra.mxu0 0.0
    %3769 = vmatprep.subr.mxu0 0.0
    %3770 = vmatpush1.xpose.msra.mxu0 0.0
    %3771 = vmatprep.subr.mxu0 0.0
    %3772 = vmatpush1.xpose.msra.mxu0 0.0
    %3773 = vmatprep.subr.mxu0 0.0
    %3774 = vmatpush1.xpose.msra.mxu0 0.0
    %3775 = vmatprep.subr.mxu0 0.0
    %3776 = vmatpush1.xpose.msra.mxu0 0.0
    %3777 = vmatprep.subr.mxu0 0.0
    %3778 = vmatpush1.xpose.msra.mxu0 0.0
    %3779 = vmatprep.subr.mxu0 0.0
    %3780 = vmatpush1.xpose.msra.mxu0 0.0
    %3781 = vmatprep.subr.mxu0 0.0
    %3782 = vmatpush1.xpose.msra.mxu0 0.0
    %3783 = vmatprep.subr.mxu0 0.0
    %3784 = vmatpush1.xpose.msra.mxu0 0.0
    %3785 = vmatprep.subr.mxu0 0.0
    %3786 = vmatpush1.xpose.msra.mxu0 0.0
    %3787 = vmatprep.subr.mxu0 0.0
    %3788 = vmatpush1.xpose.msra.mxu0 0.0
    %3789 = vmatprep.mubr.f32.mxu0 0.0
    %3790 = vmatmul.mubr.f32.gmra.mrb[0].mxu0 %v3720
    %v3791 = vpop.f32.mrb[0].mxu0
    %v3792 = vadd.f32 0.0, %v3791
    %v3793 = vpop.f32.mrb[0].mxu0
    %3794 = vmatprep.mubr.f32.mxu0 0.0
    %3795 = vmatmul.mubr.f32.gmra.mrb[0].mxu0 %v3723
    %v3796 = vpop.f32.mrb[0].mxu0
    %v3797 = vadd.f32 0.0, %v3796
    %v3798 = vpop.f32.mrb[0].mxu0
    %3799 = vdwg.mxu0
    %3800 = vrot.lane.b32.xlu0 %v3711, 96
    %v3801 = vpop.permute.xlu0 %3800
    %3802 = vrot.lane.b32.xlu0 %v3716, 96
    %v3803 = vpop.permute.xlu0 %3802
    %v3804 = vsel %vm324, %v3801, 0
    %v3806 = vsel %vm324, %v3803, 0
    %3808 = vmatprep.subr.mxu0 0.0
    %3809 = vmatpush1.xpose.msra.mxu0 %v1534
    %3810 = vmatprep.subr.mxu0 0.0
    %3811 = vmatpush1.xpose.msra.mxu0 %v1537
    %3812 = vmatprep.subr.mxu0 0.0
    %3813 = vmatpush1.xpose.msra.mxu0 %v1540
    %3814 = vmatprep.subr.mxu0 0.0
    %3815 = vmatpush1.xpose.msra.mxu0 %v1543
    %3816 = vmatprep.subr.mxu0 0.0
    %3817 = vmatpush1.xpose.msra.mxu0 0.0
    %3818 = vmatprep.subr.mxu0 0.0
    %3819 = vmatpush1.xpose.msra.mxu0 0.0
    %3820 = vmatprep.subr.mxu0 0.0
    %3821 = vmatpush1.xpose.msra.mxu0 0.0
    %3822 = vmatprep.subr.mxu0 0.0
    %3823 = vmatpush1.xpose.msra.mxu0 0.0
    %3824 = vmatprep.subr.mxu0 0.0
    %3825 = vmatpush1.xpose.msra.mxu0 0.0
    %3826 = vmatprep.subr.mxu0 0.0
    %3827 = vmatpush1.xpose.msra.mxu0 0.0
    %3828 = vmatprep.subr.mxu0 0.0
    %3829 = vmatpush1.xpose.msra.mxu0 0.0
    %3830 = vmatprep.subr.mxu0 0.0
    %3831 = vmatpush1.xpose.msra.mxu0 0.0
    %3832 = vmatprep.subr.mxu0 0.0
    %3833 = vmatpush1.xpose.msra.mxu0 0.0
    %3834 = vmatprep.subr.mxu0 0.0
    %3835 = vmatpush1.xpose.msra.mxu0 0.0
    %3836 = vmatprep.subr.mxu0 0.0
    %3837 = vmatpush1.xpose.msra.mxu0 0.0
    %3838 = vmatprep.subr.mxu0 0.0
    %3839 = vmatpush1.xpose.msra.mxu0 0.0
    %3840 = vmatprep.subr.mxu0 0.0
    %3841 = vmatpush1.xpose.msra.mxu0 0.0
    %3842 = vmatprep.subr.mxu0 0.0
    %3843 = vmatpush1.xpose.msra.mxu0 0.0
    %3844 = vmatprep.subr.mxu0 0.0
    %3845 = vmatpush1.xpose.msra.mxu0 0.0
    %3846 = vmatprep.subr.mxu0 0.0
    %3847 = vmatpush1.xpose.msra.mxu0 0.0
    %3848 = vmatprep.subr.mxu0 0.0
    %3849 = vmatpush1.xpose.msra.mxu0 0.0
    %3850 = vmatprep.subr.mxu0 0.0
    %3851 = vmatpush1.xpose.msra.mxu0 0.0
    %3852 = vmatprep.subr.mxu0 0.0
    %3853 = vmatpush1.xpose.msra.mxu0 0.0
    %3854 = vmatprep.subr.mxu0 0.0
    %3855 = vmatpush1.xpose.msra.mxu0 0.0
    %3856 = vmatprep.subr.mxu0 0.0
    %3857 = vmatpush1.xpose.msra.mxu0 0.0
    %3858 = vmatprep.subr.mxu0 0.0
    %3859 = vmatpush1.xpose.msra.mxu0 0.0
    %3860 = vmatprep.subr.mxu0 0.0
    %3861 = vmatpush1.xpose.msra.mxu0 0.0
    %3862 = vmatprep.subr.mxu0 0.0
    %3863 = vmatpush1.xpose.msra.mxu0 0.0
    %3864 = vmatprep.subr.mxu0 0.0
    %3865 = vmatpush1.xpose.msra.mxu0 0.0
    %3866 = vmatprep.subr.mxu0 0.0
    %3867 = vmatpush1.xpose.msra.mxu0 0.0
    %3868 = vmatprep.subr.mxu0 0.0
    %3869 = vmatpush1.xpose.msra.mxu0 0.0
    %3870 = vmatprep.subr.mxu0 0.0
    %3871 = vmatpush1.xpose.msra.mxu0 0.0
    %3872 = vmatprep.mubr.f32.mxu0 0.0
    %3873 = vmatmul.mubr.f32.gmra.mrb[0].mxu0 %v3804
    %v3874 = vpop.f32.mrb[0].mxu0
    %v3875 = vadd.f32 0.0, %v3874
    %v3876 = vpop.f32.mrb[0].mxu0
    %3877 = vmatprep.mubr.f32.mxu0 0.0
    %3878 = vmatmul.mubr.f32.gmra.mrb[0].mxu0 %v3806
    %v3879 = vpop.f32.mrb[0].mxu0
    %v3880 = vadd.f32 0.0, %v3879
    %v3881 = vpop.f32.mrb[0].mxu0
    %3882 = vdwg.mxu0
    %3883 = vrot.lane.b32.xlu0 %v3711, 64
    %v3884 = vpop.permute.xlu0 %3883
    %3885 = vrot.lane.b32.xlu0 %v3716, 64
    %v3886 = vpop.permute.xlu0 %3885
    %v3887 = vsel %vm324, %v3884, 0
    %v3889 = vsel %vm324, %v3886, 0
    %3891 = vmatprep.subr.mxu0 0.0
    %3892 = vmatpush1.xpose.msra.mxu0 %v1534
    %3893 = vmatprep.subr.mxu0 0.0
    %3894 = vmatpush1.xpose.msra.mxu0 %v1537
    %3895 = vmatprep.subr.mxu0 0.0
    %3896 = vmatpush1.xpose.msra.mxu0 %v1540
    %3897 = vmatprep.subr.mxu0 0.0
    %3898 = vmatpush1.xpose.msra.mxu0 %v1543
    %3899 = vmatprep.subr.mxu0 0.0
    %3900 = vmatpush1.xpose.msra.mxu0 0.0
    %3901 = vmatprep.subr.mxu0 0.0
    %3902 = vmatpush1.xpose.msra.mxu0 0.0
    %3903 = vmatprep.subr.mxu0 0.0
    %3904 = vmatpush1.xpose.msra.mxu0 0.0
    %3905 = vmatprep.subr.mxu0 0.0
    %3906 = vmatpush1.xpose.msra.mxu0 0.0
    %3907 = vmatprep.subr.mxu0 0.0
    %3908 = vmatpush1.xpose.msra.mxu0 0.0
    %3909 = vmatprep.subr.mxu0 0.0
    %3910 = vmatpush1.xpose.msra.mxu0 0.0
    %3911 = vmatprep.subr.mxu0 0.0
    %3912 = vmatpush1.xpose.msra.mxu0 0.0
    %3913 = vmatprep.subr.mxu0 0.0
    %3914 = vmatpush1.xpose.msra.mxu0 0.0
    %3915 = vmatprep.subr.mxu0 0.0
    %3916 = vmatpush1.xpose.msra.mxu0 0.0
    %3917 = vmatprep.subr.mxu0 0.0
    %3918 = vmatpush1.xpose.msra.mxu0 0.0
    %3919 = vmatprep.subr.mxu0 0.0
    %3920 = vmatpush1.xpose.msra.mxu0 0.0
    %3921 = vmatprep.subr.mxu0 0.0
    %3922 = vmatpush1.xpose.msra.mxu0 0.0
    %3923 = vmatprep.subr.mxu0 0.0
    %3924 = vmatpush1.xpose.msra.mxu0 0.0
    %3925 = vmatprep.subr.mxu0 0.0
    %3926 = vmatpush1.xpose.msra.mxu0 0.0
    %3927 = vmatprep.subr.mxu0 0.0
    %3928 = vmatpush1.xpose.msra.mxu0 0.0
    %3929 = vmatprep.subr.mxu0 0.0
    %3930 = vmatpush1.xpose.msra.mxu0 0.0
    %3931 = vmatprep.subr.mxu0 0.0
    %3932 = vmatpush1.xpose.msra.mxu0 0.0
    %3933 = vmatprep.subr.mxu0 0.0
    %3934 = vmatpush1.xpose.msra.mxu0 0.0
    %3935 = vmatprep.subr.mxu0 0.0
    %3936 = vmatpush1.xpose.msra.mxu0 0.0
    %3937 = vmatprep.subr.mxu0 0.0
    %3938 = vmatpush1.xpose.msra.mxu0 0.0
    %3939 = vmatprep.subr.mxu0 0.0
    %3940 = vmatpush1.xpose.msra.mxu0 0.0
    %3941 = vmatprep.subr.mxu0 0.0
    %3942 = vmatpush1.xpose.msra.mxu0 0.0
    %3943 = vmatprep.subr.mxu0 0.0
    %3944 = vmatpush1.xpose.msra.mxu0 0.0
    %3945 = vmatprep.subr.mxu0 0.0
    %3946 = vmatpush1.xpose.msra.mxu0 0.0
    %3947 = vmatprep.subr.mxu0 0.0
    %3948 = vmatpush1.xpose.msra.mxu0 0.0
    %3949 = vmatprep.subr.mxu0 0.0
    %3950 = vmatpush1.xpose.msra.mxu0 0.0
    %3951 = vmatprep.subr.mxu0 0.0
    %3952 = vmatpush1.xpose.msra.mxu0 0.0
    %3953 = vmatprep.subr.mxu0 0.0
    %3954 = vmatpush1.xpose.msra.mxu0 0.0
    %3955 = vmatprep.mubr.f32.mxu0 0.0
    %3956 = vmatmul.mubr.f32.gmra.mrb[0].mxu0 %v3887
    %v3957 = vpop.f32.mrb[0].mxu0
    %v3958 = vadd.f32 0.0, %v3957
    %v3959 = vpop.f32.mrb[0].mxu0
    %3960 = vmatprep.mubr.f32.mxu0 0.0
    %3961 = vmatmul.mubr.f32.gmra.mrb[0].mxu0 %v3889
    %v3962 = vpop.f32.mrb[0].mxu0
    %v3963 = vadd.f32 0.0, %v3962
    %v3964 = vpop.f32.mrb[0].mxu0
    %3965 = vdwg.mxu0
    %3966 = vrot.lane.b32.xlu0 %v3711, 32
    %v3967 = vpop.permute.xlu0 %3966
    %3968 = vrot.lane.b32.xlu0 %v3716, 32
    %v3969 = vpop.permute.xlu0 %3968
    %v3970 = vsel %vm324, %v3967, 0
    %v3972 = vsel %vm324, %v3969, 0
    %3974 = vmatprep.subr.mxu0 0.0
    %3975 = vmatpush1.xpose.msra.mxu0 %v1534
    %3976 = vmatprep.subr.mxu0 0.0
    %3977 = vmatpush1.xpose.msra.mxu0 %v1537
    %3978 = vmatprep.subr.mxu0 0.0
    %3979 = vmatpush1.xpose.msra.mxu0 %v1540
    %3980 = vmatprep.subr.mxu0 0.0
    %3981 = vmatpush1.xpose.msra.mxu0 %v1543
    %3982 = vmatprep.subr.mxu0 0.0
    %3983 = vmatpush1.xpose.msra.mxu0 0.0
    %3984 = vmatprep.subr.mxu0 0.0
    %3985 = vmatpush1.xpose.msra.mxu0 0.0
    %3986 = vmatprep.subr.mxu0 0.0
    %3987 = vmatpush1.xpose.msra.mxu0 0.0
    %3988 = vmatprep.subr.mxu0 0.0
    %3989 = vmatpush1.xpose.msra.mxu0 0.0
    %3990 = vmatprep.subr.mxu0 0.0
    %3991 = vmatpush1.xpose.msra.mxu0 0.0
    %3992 = vmatprep.subr.mxu0 0.0
    %3993 = vmatpush1.xpose.msra.mxu0 0.0
    %3994 = vmatprep.subr.mxu0 0.0
    %3995 = vmatpush1.xpose.msra.mxu0 0.0
    %3996 = vmatprep.subr.mxu0 0.0
    %3997 = vmatpush1.xpose.msra.mxu0 0.0
    %3998 = vmatprep.subr.mxu0 0.0
    %3999 = vmatpush1.xpose.msra.mxu0 0.0
    %4000 = vmatprep.subr.mxu0 0.0
    %4001 = vmatpush1.xpose.msra.mxu0 0.0
    %4002 = vmatprep.subr.mxu0 0.0
    %4003 = vmatpush1.xpose.msra.mxu0 0.0
    %4004 = vmatprep.subr.mxu0 0.0
    %4005 = vmatpush1.xpose.msra.mxu0 0.0
    %4006 = vmatprep.subr.mxu0 0.0
    %4007 = vmatpush1.xpose.msra.mxu0 0.0
    %4008 = vmatprep.subr.mxu0 0.0
    %4009 = vmatpush1.xpose.msra.mxu0 0.0
    %4010 = vmatprep.subr.mxu0 0.0
    %4011 = vmatpush1.xpose.msra.mxu0 0.0
    %4012 = vmatprep.subr.mxu0 0.0
    %4013 = vmatpush1.xpose.msra.mxu0 0.0
    %4014 = vmatprep.subr.mxu0 0.0
    %4015 = vmatpush1.xpose.msra.mxu0 0.0
    %4016 = vmatprep.subr.mxu0 0.0
    %4017 = vmatpush1.xpose.msra.mxu0 0.0
    %4018 = vmatprep.subr.mxu0 0.0
    %4019 = vmatpush1.xpose.msra.mxu0 0.0
    %4020 = vmatprep.subr.mxu0 0.0
    %4021 = vmatpush1.xpose.msra.mxu0 0.0
    %4022 = vmatprep.subr.mxu0 0.0
    %4023 = vmatpush1.xpose.msra.mxu0 0.0
    %4024 = vmatprep.subr.mxu0 0.0
    %4025 = vmatpush1.xpose.msra.mxu0 0.0
    %4026 = vmatprep.subr.mxu0 0.0
    %4027 = vmatpush1.xpose.msra.mxu0 0.0
    %4028 = vmatprep.subr.mxu0 0.0
    %4029 = vmatpush1.xpose.msra.mxu0 0.0
    %4030 = vmatprep.subr.mxu0 0.0
    %4031 = vmatpush1.xpose.msra.mxu0 0.0
    %4032 = vmatprep.subr.mxu0 0.0
    %4033 = vmatpush1.xpose.msra.mxu0 0.0
    %4034 = vmatprep.subr.mxu0 0.0
    %4035 = vmatpush1.xpose.msra.mxu0 0.0
    %4036 = vmatprep.subr.mxu0 0.0
    %4037 = vmatpush1.xpose.msra.mxu0 0.0
    %4038 = vmatprep.mubr.f32.mxu0 0.0
    %4039 = vmatmul.mubr.f32.gmra.mrb[0].mxu0 %v3970
    %v4040 = vpop.f32.mrb[0].mxu0
    %v4041 = vadd.f32 0.0, %v4040
    %v4042 = vpop.f32.mrb[0].mxu0
    %4043 = vmatprep.mubr.f32.mxu0 0.0
    %4044 = vmatmul.mubr.f32.gmra.mrb[0].mxu0 %v3972
    %v4045 = vpop.f32.mrb[0].mxu0
    %v4046 = vadd.f32 0.0, %v4045
    %v4047 = vpop.f32.mrb[0].mxu0
    %4048 = vdwg.mxu0
    %v4049 = vadd.f32 %v3792, %v296
    %v4050 = vadd.f32 %v3797, %v297
    %v4051 = vadd.f32 %v3875, %v298
    %v4052 = vadd.f32 %v3880, %v299
    %v4053 = vadd.f32 %v3958, %v300
    %v4054 = vadd.f32 %v3963, %v301
    %v4055 = vadd.f32 %v4041, %v302
    %v4056 = vadd.f32 %v4046, %v303
    %v4057 = vsel %vm324, %v4049, -inf
    %4058 = vmax.xlane.f32.xlu0 %v4057
    %v4059 = vpop.xlane.xlu0 %4058
    %v4060 = vsel %vm324, %v4050, -inf
    %4061 = vmax.xlane.f32.xlu0 %v4060
    %v4062 = vpop.xlane.xlu0 %4061
    %v4063 = vsel %vm324, %v4051, -inf
    %4064 = vmax.xlane.f32.xlu0 %v4063
    %v4065 = vpop.xlane.xlu0 %4064
    %v4066 = vsel %vm324, %v4052, -inf
    %4067 = vmax.xlane.f32.xlu0 %v4066
    %v4068 = vpop.xlane.xlu0 %4067
    %v4069 = vsel %vm324, %v4053, -inf
    %4070 = vmax.xlane.f32.xlu0 %v4069
    %v4071 = vpop.xlane.xlu0 %4070
    %v4072 = vsel %vm324, %v4054, -inf
    %4073 = vmax.xlane.f32.xlu0 %v4072
    %v4074 = vpop.xlane.xlu0 %4073
    %v4075 = vsel %vm324, %v4055, -inf
    %4076 = vmax.xlane.f32.xlu0 %v4075
    %v4077 = vpop.xlane.xlu0 %4076
    %v4078 = vsel %vm324, %v4056, -inf
    %4079 = vmax.xlane.f32.xlu0 %v4078
    %v4080 = vpop.xlane.xlu0 %4079
    %v4081 = vsub.f32 %v4049, %v4059
    %v4082 = vsub.f32 %v4050, %v4062
    %v4083 = vsub.f32 %v4051, %v4065
    %v4084 = vsub.f32 %v4052, %v4068
    %v4085 = vsub.f32 %v4053, %v4071
    %v4086 = vsub.f32 %v4054, %v4074
    %v4087 = vsub.f32 %v4055, %v4077
    %v4088 = vsub.f32 %v4056, %v4080
    %v4089 = vmul.f32 %v4081, 1.442695
    %v4090 = vpow.pop %v4089
    %v4091 = vmul.f32 %v4082, 1.442695
    %v4092 = vpow.pop %v4091
    %v4093 = vmul.f32 %v4083, 1.442695
    %v4094 = vpow.pop %v4093
    %v4095 = vmul.f32 %v4084, 1.442695
    %v4096 = vpow.pop %v4095
    %v4097 = vmul.f32 %v4085, 1.442695
    %v4098 = vpow.pop %v4097
    %v4099 = vmul.f32 %v4086, 1.442695
    %v4100 = vpow.pop %v4099
    %v4101 = vmul.f32 %v4087, 1.442695
    %v4102 = vpow.pop %v4101
    %v4103 = vmul.f32 %v4088, 1.442695
    %v4104 = vpow.pop %v4103
    %v4105 = vsel %vm324, %v4090, 0.0
    %4106 = vadd.xlane.f32.xlu0 %v4105
    %v4107 = vpop.xlane.xlu0 %4106
    %v4108 = vsel %vm324, %v4092, 0.0
    %4109 = vadd.xlane.f32.xlu0 %v4108
    %v4110 = vpop.xlane.xlu0 %4109
    %v4111 = vsel %vm324, %v4094, 0.0
    %4112 = vadd.xlane.f32.xlu0 %v4111
    %v4113 = vpop.xlane.xlu0 %4112
    %v4114 = vsel %vm324, %v4096, 0.0
    %4115 = vadd.xlane.f32.xlu0 %v4114
    %v4116 = vpop.xlane.xlu0 %4115
    %v4117 = vsel %vm324, %v4098, 0.0
    %4118 = vadd.xlane.f32.xlu0 %v4117
    %v4119 = vpop.xlane.xlu0 %4118
    %v4120 = vsel %vm324, %v4100, 0.0
    %4121 = vadd.xlane.f32.xlu0 %v4120
    %v4122 = vpop.xlane.xlu0 %4121
    %v4123 = vsel %vm324, %v4102, 0.0
    %4124 = vadd.xlane.f32.xlu0 %v4123
    %v4125 = vpop.xlane.xlu0 %4124
    %v4126 = vsel %vm324, %v4104, 0.0
    %4127 = vadd.xlane.f32.xlu0 %v4126
    %v4128 = vpop.xlane.xlu0 %4127
    %v4129 = vrcp.pop %v4107
    %v4130 = vrcp.pop %v4110
    %v4131 = vrcp.pop %v4113
    %v4132 = vrcp.pop %v4116
    %v4133 = vrcp.pop %v4119
    %v4134 = vrcp.pop %v4122
    %v4135 = vrcp.pop %v4125
    %v4136 = vrcp.pop %v4128
    %v4137 = vmul.f32 %v4090, %v4129
    %v4138 = vmul.f32 %v4092, %v4130
    %v4139 = vmul.f32 %v4094, %v4131
    %v4140 = vmul.f32 %v4096, %v4132
    %v4141 = vmul.f32 %v4098, %v4133
    %v4142 = vmul.f32 %v4100, %v4134
    %v4143 = vmul.f32 %v4102, %v4135
    %v4144 = vmul.f32 %v4104, %v4136
    %4149 = vrot.lane.b32.xlu0 %v406, 96
    %v4150 = vpop.permute.xlu0 %4149
    %4151 = vrot.lane.b32.xlu0 %v412, 96
    %v4152 = vpop.permute.xlu0 %4151
    %4153 = vrot.lane.b32.xlu0 %v418, 96
    %v4154 = vpop.permute.xlu0 %4153
    %4155 = vrot.lane.b32.xlu0 %v424, 96
    %v4156 = vpop.permute.xlu0 %4155
    %v4162 = vsel %vm324, %v4139, 0
    %v4165 = vsel %vm324, %v4140, 0
    %4167 = vmatprep.subr.mxu0 0.0
    %4168 = vmatpush1.msra.mxu0 %v4150
    %4169 = vmatprep.subr.mxu0 0.0
    %4170 = vmatpush1.msra.mxu0 %v4152
    %4171 = vmatprep.subr.mxu0 0.0
    %4172 = vmatpush1.msra.mxu0 %v4154
    %4173 = vmatprep.subr.mxu0 0.0
    %4174 = vmatpush1.msra.mxu0 %v4156
    %4175 = vmatprep.subr.mxu0 0.0
    %4176 = vmatpush1.msra.mxu0 0.0
    %4177 = vmatprep.subr.mxu0 0.0
    %4178 = vmatpush1.msra.mxu0 0.0
    %4179 = vmatprep.subr.mxu0 0.0
    %4180 = vmatpush1.msra.mxu0 0.0
    %4181 = vmatprep.subr.mxu0 0.0
    %4182 = vmatpush1.msra.mxu0 0.0
    %4183 = vmatprep.subr.mxu0 0.0
    %4184 = vmatpush1.msra.mxu0 0.0
    %4185 = vmatprep.subr.mxu0 0.0
    %4186 = vmatpush1.msra.mxu0 0.0
    %4187 = vmatprep.subr.mxu0 0.0
    %4188 = vmatpush1.msra.mxu0 0.0
    %4189 = vmatprep.subr.mxu0 0.0
    %4190 = vmatpush1.msra.mxu0 0.0
    %4191 = vmatprep.subr.mxu0 0.0
    %4192 = vmatpush1.msra.mxu0 0.0
    %4193 = vmatprep.subr.mxu0 0.0
    %4194 = vmatpush1.msra.mxu0 0.0
    %4195 = vmatprep.subr.mxu0 0.0
    %4196 = vmatpush1.msra.mxu0 0.0
    %4197 = vmatprep.subr.mxu0 0.0
    %4198 = vmatpush1.msra.mxu0 0.0
    %4199 = vmatprep.subr.mxu0 0.0
    %4200 = vmatpush1.msra.mxu0 0.0
    %4201 = vmatprep.subr.mxu0 0.0
    %4202 = vmatpush1.msra.mxu0 0.0
    %4203 = vmatprep.subr.mxu0 0.0
    %4204 = vmatpush1.msra.mxu0 0.0
    %4205 = vmatprep.subr.mxu0 0.0
    %4206 = vmatpush1.msra.mxu0 0.0
    %4207 = vmatprep.subr.mxu0 0.0
    %4208 = vmatpush1.msra.mxu0 0.0
    %4209 = vmatprep.subr.mxu0 0.0
    %4210 = vmatpush1.msra.mxu0 0.0
    %4211 = vmatprep.subr.mxu0 0.0
    %4212 = vmatpush1.msra.mxu0 0.0
    %4213 = vmatprep.subr.mxu0 0.0
    %4214 = vmatpush1.msra.mxu0 0.0
    %4215 = vmatprep.subr.mxu0 0.0
    %4216 = vmatpush1.msra.mxu0 0.0
    %4217 = vmatprep.subr.mxu0 0.0
    %4218 = vmatpush1.msra.mxu0 0.0
    %4219 = vmatprep.subr.mxu0 0.0
    %4220 = vmatpush1.msra.mxu0 0.0
    %4221 = vmatprep.subr.mxu0 0.0
    %4222 = vmatpush1.msra.mxu0 0.0
    %4223 = vmatprep.subr.mxu0 0.0
    %4224 = vmatpush1.msra.mxu0 0.0
    %4225 = vmatprep.subr.mxu0 0.0
    %4226 = vmatpush1.msra.mxu0 0.0
    %4227 = vmatprep.subr.mxu0 0.0
    %4228 = vmatpush1.msra.mxu0 0.0
    %4229 = vmatprep.subr.mxu0 0.0
    %4230 = vmatpush1.msra.mxu0 0.0
    %4231 = vmatprep.mubr.f32.mxu0 0.0
    %4232 = vmatmul.mubr.f32.gmra.mrb[0].mxu0 %v4162
    %v4233 = vpop.f32.mrb[0].mxu0
    %v4234 = vadd.f32 0.0, %v4233
    %v4235 = vpop.f32.mrb[0].mxu0
    %4236 = vmatprep.mubr.f32.mxu0 0.0
    %4237 = vmatmul.mubr.f32.gmra.mrb[0].mxu0 %v4165
    %v4238 = vpop.f32.mrb[0].mxu0
    %v4239 = vadd.f32 0.0, %v4238
    %v4240 = vpop.f32.mrb[0].mxu0
    %4241 = vdwg.mxu0
    %v4243 = vsel %vm324, %v4137, 0
    %v4246 = vsel %vm324, %v4138, 0
    %4248 = vmatprep.subr.mxu0 0.0
    %4249 = vmatpush1.msra.mxu0 %v406
    %4250 = vmatprep.subr.mxu0 0.0
    %4251 = vmatpush1.msra.mxu0 %v412
    %4252 = vmatprep.subr.mxu0 0.0
    %4253 = vmatpush1.msra.mxu0 %v418
    %4254 = vmatprep.subr.mxu0 0.0
    %4255 = vmatpush1.msra.mxu0 %v424
    %4256 = vmatprep.subr.mxu0 0.0
    %4257 = vmatpush1.msra.mxu0 0.0
    %4258 = vmatprep.subr.mxu0 0.0
    %4259 = vmatpush1.msra.mxu0 0.0
    %4260 = vmatprep.subr.mxu0 0.0
    %4261 = vmatpush1.msra.mxu0 0.0
    %4262 = vmatprep.subr.mxu0 0.0
    %4263 = vmatpush1.msra.mxu0 0.0
    %4264 = vmatprep.subr.mxu0 0.0
    %4265 = vmatpush1.msra.mxu0 0.0
    %4266 = vmatprep.subr.mxu0 0.0
    %4267 = vmatpush1.msra.mxu0 0.0
    %4268 = vmatprep.subr.mxu0 0.0
    %4269 = vmatpush1.msra.mxu0 0.0
    %4270 = vmatprep.subr.mxu0 0.0
    %4271 = vmatpush1.msra.mxu0 0.0
    %4272 = vmatprep.subr.mxu0 0.0
    %4273 = vmatpush1.msra.mxu0 0.0
    %4274 = vmatprep.subr.mxu0 0.0
    %4275 = vmatpush1.msra.mxu0 0.0
    %4276 = vmatprep.subr.mxu0 0.0
    %4277 = vmatpush1.msra.mxu0 0.0
    %4278 = vmatprep.subr.mxu0 0.0
    %4279 = vmatpush1.msra.mxu0 0.0
    %4280 = vmatprep.subr.mxu0 0.0
    %4281 = vmatpush1.msra.mxu0 0.0
    %4282 = vmatprep.subr.mxu0 0.0
    %4283 = vmatpush1.msra.mxu0 0.0
    %4284 = vmatprep.subr.mxu0 0.0
    %4285 = vmatpush1.msra.mxu0 0.0
    %4286 = vmatprep.subr.mxu0 0.0
    %4287 = vmatpush1.msra.mxu0 0.0
    %4288 = vmatprep.subr.mxu0 0.0
    %4289 = vmatpush1.msra.mxu0 0.0
    %4290 = vmatprep.subr.mxu0 0.0
    %4291 = vmatpush1.msra.mxu0 0.0
    %4292 = vmatprep.subr.mxu0 0.0
    %4293 = vmatpush1.msra.mxu0 0.0
    %4294 = vmatprep.subr.mxu0 0.0
    %4295 = vmatpush1.msra.mxu0 0.0
    %4296 = vmatprep.subr.mxu0 0.0
    %4297 = vmatpush1.msra.mxu0 0.0
    %4298 = vmatprep.subr.mxu0 0.0
    %4299 = vmatpush1.msra.mxu0 0.0
    %4300 = vmatprep.subr.mxu0 0.0
    %4301 = vmatpush1.msra.mxu0 0.0
    %4302 = vmatprep.subr.mxu0 0.0
    %4303 = vmatpush1.msra.mxu0 0.0
    %4304 = vmatprep.subr.mxu0 0.0
    %4305 = vmatpush1.msra.mxu0 0.0
    %4306 = vmatprep.subr.mxu0 0.0
    %4307 = vmatpush1.msra.mxu0 0.0
    %4308 = vmatprep.subr.mxu0 0.0
    %4309 = vmatpush1.msra.mxu0 0.0
    %4310 = vmatprep.subr.mxu0 0.0
    %4311 = vmatpush1.msra.mxu0 0.0
    %4312 = vmatprep.mubr.f32.mxu0 0.0
    %4313 = vmatmul.mubr.f32.gmra.mrb[0].mxu0 %v4243
    %v4314 = vpop.f32.mrb[0].mxu0
    %v4315 = vadd.f32 %v4234, %v4314
    %v4316 = vpop.f32.mrb[0].mxu0
    %4317 = vmatprep.mubr.f32.mxu0 0.0
    %4318 = vmatmul.mubr.f32.gmra.mrb[0].mxu0 %v4246
    %v4319 = vpop.f32.mrb[0].mxu0
    %v4320 = vadd.f32 %v4239, %v4319
    %v4321 = vpop.f32.mrb[0].mxu0
    %4322 = vdwg.mxu0
    %4323 = vrot.lane.b32.xlu0 %v406, 64
    %v4324 = vpop.permute.xlu0 %4323
    %4325 = vrot.lane.b32.xlu0 %v412, 64
    %v4326 = vpop.permute.xlu0 %4325
    %4327 = vrot.lane.b32.xlu0 %v418, 64
    %v4328 = vpop.permute.xlu0 %4327
    %4329 = vrot.lane.b32.xlu0 %v424, 64
    %v4330 = vpop.permute.xlu0 %4329
    %v4336 = vsel %vm324, %v4141, 0
    %v4339 = vsel %vm324, %v4142, 0
    %4341 = vmatprep.subr.mxu0 0.0
    %4342 = vmatpush1.msra.mxu0 %v4324
    %4343 = vmatprep.subr.mxu0 0.0
    %4344 = vmatpush1.msra.mxu0 %v4326
    %4345 = vmatprep.subr.mxu0 0.0
    %4346 = vmatpush1.msra.mxu0 %v4328
    %4347 = vmatprep.subr.mxu0 0.0
    %4348 = vmatpush1.msra.mxu0 %v4330
    %4349 = vmatprep.subr.mxu0 0.0
    %4350 = vmatpush1.msra.mxu0 0.0
    %4351 = vmatprep.subr.mxu0 0.0
    %4352 = vmatpush1.msra.mxu0 0.0
    %4353 = vmatprep.subr.mxu0 0.0
    %4354 = vmatpush1.msra.mxu0 0.0
    %4355 = vmatprep.subr.mxu0 0.0
    %4356 = vmatpush1.msra.mxu0 0.0
    %4357 = vmatprep.subr.mxu0 0.0
    %4358 = vmatpush1.msra.mxu0 0.0
    %4359 = vmatprep.subr.mxu0 0.0
    %4360 = vmatpush1.msra.mxu0 0.0
    %4361 = vmatprep.subr.mxu0 0.0
    %4362 = vmatpush1.msra.mxu0 0.0
    %4363 = vmatprep.subr.mxu0 0.0
    %4364 = vmatpush1.msra.mxu0 0.0
    %4365 = vmatprep.subr.mxu0 0.0
    %4366 = vmatpush1.msra.mxu0 0.0
    %4367 = vmatprep.subr.mxu0 0.0
    %4368 = vmatpush1.msra.mxu0 0.0
    %4369 = vmatprep.subr.mxu0 0.0
    %4370 = vmatpush1.msra.mxu0 0.0
    %4371 = vmatprep.subr.mxu0 0.0
    %4372 = vmatpush1.msra.mxu0 0.0
    %4373 = vmatprep.subr.mxu0 0.0
    %4374 = vmatpush1.msra.mxu0 0.0
    %4375 = vmatprep.subr.mxu0 0.0
    %4376 = vmatpush1.msra.mxu0 0.0
    %4377 = vmatprep.subr.mxu0 0.0
    %4378 = vmatpush1.msra.mxu0 0.0
    %4379 = vmatprep.subr.mxu0 0.0
    %4380 = vmatpush1.msra.mxu0 0.0
    %4381 = vmatprep.subr.mxu0 0.0
    %4382 = vmatpush1.msra.mxu0 0.0
    %4383 = vmatprep.subr.mxu0 0.0
    %4384 = vmatpush1.msra.mxu0 0.0
    %4385 = vmatprep.subr.mxu0 0.0
    %4386 = vmatpush1.msra.mxu0 0.0
    %4387 = vmatprep.subr.mxu0 0.0
    %4388 = vmatpush1.msra.mxu0 0.0
    %4389 = vmatprep.subr.mxu0 0.0
    %4390 = vmatpush1.msra.mxu0 0.0
    %4391 = vmatprep.subr.mxu0 0.0
    %4392 = vmatpush1.msra.mxu0 0.0
    %4393 = vmatprep.subr.mxu0 0.0
    %4394 = vmatpush1.msra.mxu0 0.0
    %4395 = vmatprep.subr.mxu0 0.0
    %4396 = vmatpush1.msra.mxu0 0.0
    %4397 = vmatprep.subr.mxu0 0.0
    %4398 = vmatpush1.msra.mxu0 0.0
    %4399 = vmatprep.subr.mxu0 0.0
    %4400 = vmatpush1.msra.mxu0 0.0
    %4401 = vmatprep.subr.mxu0 0.0
    %4402 = vmatpush1.msra.mxu0 0.0
    %4403 = vmatprep.subr.mxu0 0.0
    %4404 = vmatpush1.msra.mxu0 0.0
    %4405 = vmatprep.mubr.f32.mxu0 0.0
    %4406 = vmatmul.mubr.f32.gmra.mrb[0].mxu0 %v4336
    %v4407 = vpop.f32.mrb[0].mxu0
    %v4408 = vadd.f32 0.0, %v4407
    %v4409 = vpop.f32.mrb[0].mxu0
    %4410 = vmatprep.mubr.f32.mxu0 0.0
    %4411 = vmatmul.mubr.f32.gmra.mrb[0].mxu0 %v4339
    %v4412 = vpop.f32.mrb[0].mxu0
    %v4413 = vadd.f32 0.0, %v4412
    %v4414 = vpop.f32.mrb[0].mxu0
    %4415 = vdwg.mxu0
    %v4416 = vadd.f32 %v4315, %v4408
    %v4417 = vadd.f32 %v4320, %v4413
    %4418 = vrot.lane.b32.xlu0 %v406, 32
    %v4419 = vpop.permute.xlu0 %4418
    %4420 = vrot.lane.b32.xlu0 %v412, 32
    %v4421 = vpop.permute.xlu0 %4420
    %4422 = vrot.lane.b32.xlu0 %v418, 32
    %v4423 = vpop.permute.xlu0 %4422
    %4424 = vrot.lane.b32.xlu0 %v424, 32
    %v4425 = vpop.permute.xlu0 %4424
    %v4431 = vsel %vm324, %v4143, 0
    %v4434 = vsel %vm324, %v4144, 0
    %4436 = vmatprep.subr.mxu0 0.0
    %4437 = vmatpush1.msra.mxu0 %v4419
    %4438 = vmatprep.subr.mxu0 0.0
    %4439 = vmatpush1.msra.mxu0 %v4421
    %4440 = vmatprep.subr.mxu0 0.0
    %4441 = vmatpush1.msra.mxu0 %v4423
    %4442 = vmatprep.subr.mxu0 0.0
    %4443 = vmatpush1.msra.mxu0 %v4425
    %4444 = vmatprep.subr.mxu0 0.0
    %4445 = vmatpush1.msra.mxu0 0.0
    %4446 = vmatprep.subr.mxu0 0.0
    %4447 = vmatpush1.msra.mxu0 0.0
    %4448 = vmatprep.subr.mxu0 0.0
    %4449 = vmatpush1.msra.mxu0 0.0
    %4450 = vmatprep.subr.mxu0 0.0
    %4451 = vmatpush1.msra.mxu0 0.0
    %4452 = vmatprep.subr.mxu0 0.0
    %4453 = vmatpush1.msra.mxu0 0.0
    %4454 = vmatprep.subr.mxu0 0.0
    %4455 = vmatpush1.msra.mxu0 0.0
    %4456 = vmatprep.subr.mxu0 0.0
    %4457 = vmatpush1.msra.mxu0 0.0
    %4458 = vmatprep.subr.mxu0 0.0
    %4459 = vmatpush1.msra.mxu0 0.0
    %4460 = vmatprep.subr.mxu0 0.0
    %4461 = vmatpush1.msra.mxu0 0.0
    %4462 = vmatprep.subr.mxu0 0.0
    %4463 = vmatpush1.msra.mxu0 0.0
    %4464 = vmatprep.subr.mxu0 0.0
    %4465 = vmatpush1.msra.mxu0 0.0
    %4466 = vmatprep.subr.mxu0 0.0
    %4467 = vmatpush1.msra.mxu0 0.0
    %4468 = vmatprep.subr.mxu0 0.0
    %4469 = vmatpush1.msra.mxu0 0.0
    %4470 = vmatprep.subr.mxu0 0.0
    %4471 = vmatpush1.msra.mxu0 0.0
    %4472 = vmatprep.subr.mxu0 0.0
    %4473 = vmatpush1.msra.mxu0 0.0
    %4474 = vmatprep.subr.mxu0 0.0
    %4475 = vmatpush1.msra.mxu0 0.0
    %4476 = vmatprep.subr.mxu0 0.0
    %4477 = vmatpush1.msra.mxu0 0.0
    %4478 = vmatprep.subr.mxu0 0.0
    %4479 = vmatpush1.msra.mxu0 0.0
    %4480 = vmatprep.subr.mxu0 0.0
    %4481 = vmatpush1.msra.mxu0 0.0
    %4482 = vmatprep.subr.mxu0 0.0
    %4483 = vmatpush1.msra.mxu0 0.0
    %4484 = vmatprep.subr.mxu0 0.0
    %4485 = vmatpush1.msra.mxu0 0.0
    %4486 = vmatprep.subr.mxu0 0.0
    %4487 = vmatpush1.msra.mxu0 0.0
    %4488 = vmatprep.subr.mxu0 0.0
    %4489 = vmatpush1.msra.mxu0 0.0
    %4490 = vmatprep.subr.mxu0 0.0
    %4491 = vmatpush1.msra.mxu0 0.0
    %4492 = vmatprep.subr.mxu0 0.0
    %4493 = vmatpush1.msra.mxu0 0.0
    %4494 = vmatprep.subr.mxu0 0.0
    %4495 = vmatpush1.msra.mxu0 0.0
    %4496 = vmatprep.subr.mxu0 0.0
    %4497 = vmatpush1.msra.mxu0 0.0
    %4498 = vmatprep.subr.mxu0 0.0
    %4499 = vmatpush1.msra.mxu0 0.0
    %4500 = vmatprep.mubr.f32.mxu0 0.0
    %4501 = vmatmul.mubr.f32.gmra.mrb[0].mxu0 %v4431
    %v4502 = vpop.f32.mrb[0].mxu0
    %v4503 = vadd.f32 0.0, %v4502
    %v4504 = vpop.f32.mrb[0].mxu0
    %4505 = vmatprep.mubr.f32.mxu0 0.0
    %4506 = vmatmul.mubr.f32.gmra.mrb[0].mxu0 %v4434
    %v4507 = vpop.f32.mrb[0].mxu0
    %v4508 = vadd.f32 0.0, %v4507
    %v4509 = vpop.f32.mrb[0].mxu0
    %4510 = vdwg.mxu0
    %v4511 = vadd.f32 %v4416, %v4503
    %v4512 = vadd.f32 %v4417, %v4508
    %v4513 = vlaneseq
    %v4514 = vshrl.u32 %v4513, 7
    %v4515 = vsub.s32 1, %v4514
    %v4516 = vrot.slane %v2615, %v4515
    %v4517 = vadd.f32 %v4511, %v4516
    %v4518 = vadd.f32 %v4512, %v4516
    %v4519 = vadd.f32 %v3625, %v4517
    %v4520 = vadd.f32 %v3626, %v4518
    %v4521 = vmul.f32 %v4519, %v4519
    %v4522 = vmul.f32 %v4520, %v4520
    %v4523 = vsel %vm324, %v4519, 0.0
    %4524 = vadd.xlane.f32.xlu0 %v4523
    %v4525 = vpop.xlane.xlu0 %4524
    %v4526 = vsel %vm324, %v4520, 0.0
    %4527 = vadd.xlane.f32.xlu0 %v4526
    %v4528 = vpop.xlane.xlu0 %4527
    %v4529 = vsel %vm324, %v4521, 0.0
    %4530 = vadd.xlane.f32.xlu0 %v4529
    %v4531 = vpop.xlane.xlu0 %4530
    %v4532 = vsel %vm324, %v4522, 0.0
    %4533 = vadd.xlane.f32.xlu0 %v4532
    %v4534 = vpop.xlane.xlu0 %4533
    %v4535 = vmul.f32 %v4525, 0.03125
    %v4536 = vmul.f32 %v4528, 0.03125
    %v4537 = vmul.f32 %v4531, 0.03125
    %v4538 = vmul.f32 %v4534, 0.03125
    %v4539 = vmul.f32 %v4535, %v4535
    %v4540 = vmul.f32 %v4536, %v4536
    %v4541 = vsub.f32 %v4537, %v4539
    %v4542 = vsub.f32 %v4538, %v4540
    %v4543 = vsub.f32 %v4519, %v4535
    %v4544 = vsub.f32 %v4520, %v4536
    %v4545 = vadd.f32 %v4541, 1e-05
    %v4546 = vadd.f32 %v4542, 1e-05
    %v4547 = vrsqrt.pop %v4545
    %v4548 = vrsqrt.pop %v4546
    %v4549 = vmul.f32 %v4543, %v4547
    %v4550 = vmul.f32 %v4544, %v4548
    %v4551 = vlaneseq
    %v4552 = vshrl.u32 %v4551, 7
    %v4553 = vsub.s32 5, %v4552
    %v4554 = vrot.slane %v2615, %v4553
    %v4555 = vmul.f32 %v4549, %v4554
    %v4556 = vmul.f32 %v4550, %v4554
    %v4557 = vlaneseq
    %v4558 = vshrl.u32 %v4557, 7
    %v4559 = vsub.s32 6, %v4558
    %v4560 = vrot.slane %v2615, %v4559
    %v4561 = vadd.f32 %v4555, %v4560
    %v4562 = vadd.f32 %v4556, %v4560
    %s4563 = scalar_lea.vmem [#allocation11], 32
    %v4564 = vld [vmem:[%s4563] sm:$0xff]
    %v4565 = vld [vmem:[%s4563 + $0x8] sm:$0xff]
    %v4566 = vld [vmem:[%s4563 + $0x10] sm:$0xff]
    %v4567 = vld [vmem:[%s4563 + $0x18] sm:$0xff]
    %v4569 = vlaneseq
    %v4570 = vshrl.u32 %v4569, 7
    %v4571 = vsub.s32 0, %v4570
    %v4572 = vrot.slane %v2620, %v4571
    %v4575 = vsel %vm324, %v4561, 0
    %v4578 = vsel %vm324, %v4562, 0
    %4580 = vmatprep.subr.mxu0 0.0
    %4581 = vmatpush1.msra.mxu0 %v4564
    %4582 = vmatprep.subr.mxu0 0.0
    %4583 = vmatpush1.msra.mxu0 %v4565
    %4584 = vmatprep.subr.mxu0 0.0
    %4585 = vmatpush1.msra.mxu0 %v4566
    %4586 = vmatprep.subr.mxu0 0.0
    %4587 = vmatpush1.msra.mxu0 %v4567
    %4588 = vmatprep.subr.mxu0 0.0
    %4589 = vmatpush1.msra.mxu0 0.0
    %4590 = vmatprep.subr.mxu0 0.0
    %4591 = vmatpush1.msra.mxu0 0.0
    %4592 = vmatprep.subr.mxu0 0.0
    %4593 = vmatpush1.msra.mxu0 0.0
    %4594 = vmatprep.subr.mxu0 0.0
    %4595 = vmatpush1.msra.mxu0 0.0
    %4596 = vmatprep.subr.mxu0 0.0
    %4597 = vmatpush1.msra.mxu0 0.0
    %4598 = vmatprep.subr.mxu0 0.0
    %4599 = vmatpush1.msra.mxu0 0.0
    %4600 = vmatprep.subr.mxu0 0.0
    %4601 = vmatpush1.msra.mxu0 0.0
    %4602 = vmatprep.subr.mxu0 0.0
    %4603 = vmatpush1.msra.mxu0 0.0
    %4604 = vmatprep.subr.mxu0 0.0
    %4605 = vmatpush1.msra.mxu0 0.0
    %4606 = vmatprep.subr.mxu0 0.0
    %4607 = vmatpush1.msra.mxu0 0.0
    %4608 = vmatprep.subr.mxu0 0.0
    %4609 = vmatpush1.msra.mxu0 0.0
    %4610 = vmatprep.subr.mxu0 0.0
    %4611 = vmatpush1.msra.mxu0 0.0
    %4612 = vmatprep.subr.mxu0 0.0
    %4613 = vmatpush1.msra.mxu0 0.0
    %4614 = vmatprep.subr.mxu0 0.0
    %4615 = vmatpush1.msra.mxu0 0.0
    %4616 = vmatprep.subr.mxu0 0.0
    %4617 = vmatpush1.msra.mxu0 0.0
    %4618 = vmatprep.subr.mxu0 0.0
    %4619 = vmatpush1.msra.mxu0 0.0
    %4620 = vmatprep.subr.mxu0 0.0
    %4621 = vmatpush1.msra.mxu0 0.0
    %4622 = vmatprep.subr.mxu0 0.0
    %4623 = vmatpush1.msra.mxu0 0.0
    %4624 = vmatprep.subr.mxu0 0.0
    %4625 = vmatpush1.msra.mxu0 0.0
    %4626 = vmatprep.subr.mxu0 0.0
    %4627 = vmatpush1.msra.mxu0 0.0
    %4628 = vmatprep.subr.mxu0 0.0
    %4629 = vmatpush1.msra.mxu0 0.0
    %4630 = vmatprep.subr.mxu0 0.0
    %4631 = vmatpush1.msra.mxu0 0.0
    %4632 = vmatprep.subr.mxu0 0.0
    %4633 = vmatpush1.msra.mxu0 0.0
    %4634 = vmatprep.subr.mxu0 0.0
    %4635 = vmatpush1.msra.mxu0 0.0
    %4636 = vmatprep.subr.mxu0 0.0
    %4637 = vmatpush1.msra.mxu0 0.0
    %4638 = vmatprep.subr.mxu0 0.0
    %4639 = vmatpush1.msra.mxu0 0.0
    %4640 = vmatprep.subr.mxu0 0.0
    %4641 = vmatpush1.msra.mxu0 0.0
    %4642 = vmatprep.subr.mxu0 0.0
    %4643 = vmatpush1.msra.mxu0 0.0
    %4644 = vmatprep.mubr.f32.mxu0 0.0
    %4645 = vmatmul.mubr.f32.gmra.mrb[0].mxu0 %v4575
    %v4646 = vpop.f32.mrb[0].mxu0
    %v4647 = vadd.f32 %v4572, %v4646
    %v4648 = vpop.f32.mrb[0].mxu0
    %4649 = vmatprep.mubr.f32.mxu0 0.0
    %4650 = vmatmul.mubr.f32.gmra.mrb[0].mxu0 %v4578
    %v4651 = vpop.f32.mrb[0].mxu0
    %v4652 = vadd.f32 %v4572, %v4651
    %v4653 = vpop.f32.mrb[0].mxu0
    %4654 = vdwg.mxu0
    %v4655 = vmax.f32 %v4647, 0.0
    %v4656 = vmax.f32 %v4652, 0.0
    %s4657 = scalar_lea.vmem %s9, 64
    %v4658 = vld [vmem:[%s4657] sm:$0xff]
    %v4659 = vld [vmem:[%s4657 + $0x8] sm:$0xff]
    %v4660 = vld [vmem:[%s4657 + $0x10] sm:$0xff]
    %v4661 = vld [vmem:[%s4657 + $0x18] sm:$0xff]
    %v4662 = vld [vmem:[%s4657 + $0x20] sm:$0xff]
    %v4663 = vld [vmem:[%s4657 + $0x28] sm:$0xff]
    %v4664 = vld [vmem:[%s4657 + $0x30] sm:$0xff]
    %v4665 = vld [vmem:[%s4657 + $0x38] sm:$0xff]
    %v4666 = vlaneseq
    %v4667 = vshrl.u32 %v4666, 7
    %v4668 = vsub.s32 2, %v4667
    %v4669 = vrot.slane %v2615, %v4668
    %v4671 = vsel %vm2488, %v4655, 0
    %v4674 = vsel %vm2488, %v4656, 0
    %4676 = vmatprep.subr.mxu0 0.0
    %4677 = vmatpush1.msra.mxu0 %v4658
    %4678 = vmatprep.subr.mxu0 0.0
    %4679 = vmatpush1.msra.mxu0 %v4659
    %4680 = vmatprep.subr.mxu0 0.0
    %4681 = vmatpush1.msra.mxu0 %v4660
    %4682 = vmatprep.subr.mxu0 0.0
    %4683 = vmatpush1.msra.mxu0 %v4661
    %4684 = vmatprep.subr.mxu0 0.0
    %4685 = vmatpush1.msra.mxu0 %v4662
    %4686 = vmatprep.subr.mxu0 0.0
    %4687 = vmatpush1.msra.mxu0 %v4663
    %4688 = vmatprep.subr.mxu0 0.0
    %4689 = vmatpush1.msra.mxu0 %v4664
    %4690 = vmatprep.subr.mxu0 0.0
    %4691 = vmatpush1.msra.mxu0 %v4665
    %4692 = vmatprep.subr.mxu0 0.0
    %4693 = vmatpush1.msra.mxu0 0.0
    %4694 = vmatprep.subr.mxu0 0.0
    %4695 = vmatpush1.msra.mxu0 0.0
    %4696 = vmatprep.subr.mxu0 0.0
    %4697 = vmatpush1.msra.mxu0 0.0
    %4698 = vmatprep.subr.mxu0 0.0
    %4699 = vmatpush1.msra.mxu0 0.0
    %4700 = vmatprep.subr.mxu0 0.0
    %4701 = vmatpush1.msra.mxu0 0.0
    %4702 = vmatprep.subr.mxu0 0.0
    %4703 = vmatpush1.msra.mxu0 0.0
    %4704 = vmatprep.subr.mxu0 0.0
    %4705 = vmatpush1.msra.mxu0 0.0
    %4706 = vmatprep.subr.mxu0 0.0
    %4707 = vmatpush1.msra.mxu0 0.0
    %4708 = vmatprep.subr.mxu0 0.0
    %4709 = vmatpush1.msra.mxu0 0.0
    %4710 = vmatprep.subr.mxu0 0.0
    %4711 = vmatpush1.msra.mxu0 0.0
    %4712 = vmatprep.subr.mxu0 0.0
    %4713 = vmatpush1.msra.mxu0 0.0
    %4714 = vmatprep.subr.mxu0 0.0
    %4715 = vmatpush1.msra.mxu0 0.0
    %4716 = vmatprep.subr.mxu0 0.0
    %4717 = vmatpush1.msra.mxu0 0.0
    %4718 = vmatprep.subr.mxu0 0.0
    %4719 = vmatpush1.msra.mxu0 0.0
    %4720 = vmatprep.subr.mxu0 0.0
    %4721 = vmatpush1.msra.mxu0 0.0
    %4722 = vmatprep.subr.mxu0 0.0
    %4723 = vmatpush1.msra.mxu0 0.0
    %4724 = vmatprep.subr.mxu0 0.0
    %4725 = vmatpush1.msra.mxu0 0.0
    %4726 = vmatprep.subr.mxu0 0.0
    %4727 = vmatpush1.msra.mxu0 0.0
    %4728 = vmatprep.subr.mxu0 0.0
    %4729 = vmatpush1.msra.mxu0 0.0
    %4730 = vmatprep.subr.mxu0 0.0
    %4731 = vmatpush1.msra.mxu0 0.0
    %4732 = vmatprep.subr.mxu0 0.0
    %4733 = vmatpush1.msra.mxu0 0.0
    %4734 = vmatprep.subr.mxu0 0.0
    %4735 = vmatpush1.msra.mxu0 0.0
    %4736 = vmatprep.subr.mxu0 0.0
    %4737 = vmatpush1.msra.mxu0 0.0
    %4738 = vmatprep.subr.mxu0 0.0
    %4739 = vmatpush1.msra.mxu0 0.0
    %4740 = vmatprep.mubr.f32.mxu0 0.0
    %4741 = vmatmul.mubr.f32.gmra.mrb[0].mxu0 %v4671
    %v4742 = vpop.f32.mrb[0].mxu0
    %v4743 = vadd.f32 %v4669, %v4742
    %v4744 = vpop.f32.mrb[0].mxu0
    %4745 = vmatprep.mubr.f32.mxu0 0.0
    %4746 = vmatmul.mubr.f32.gmra.mrb[0].mxu0 %v4674
    %v4747 = vpop.f32.mrb[0].mxu0
    %v4748 = vadd.f32 %v4669, %v4747
    %v4749 = vpop.f32.mrb[0].mxu0
    %4750 = vdwg.mxu0
    %v4751 = vadd.f32 %v4561, %v4743
    %v4752 = vadd.f32 %v4562, %v4748
    %v4753 = vmul.f32 %v4751, %v4751
    %v4754 = vmul.f32 %v4752, %v4752
    %v4755 = vsel %vm324, %v4751, 0.0
    %4756 = vadd.xlane.f32.xlu0 %v4755
    %v4757 = vpop.xlane.xlu0 %4756
    %v4758 = vsel %vm324, %v4752, 0.0
    %4759 = vadd.xlane.f32.xlu0 %v4758
    %v4760 = vpop.xlane.xlu0 %4759
    %v4761 = vsel %vm324, %v4753, 0.0
    %4762 = vadd.xlane.f32.xlu0 %v4761
    %v4763 = vpop.xlane.xlu0 %4762
    %v4764 = vsel %vm324, %v4754, 0.0
    %4765 = vadd.xlane.f32.xlu0 %v4764
    %v4766 = vpop.xlane.xlu0 %4765
    %v4767 = vmul.f32 %v4757, 0.03125
    %v4768 = vmul.f32 %v4760, 0.03125
    %v4769 = vmul.f32 %v4763, 0.03125
    %v4770 = vmul.f32 %v4766, 0.03125
    %v4771 = vmul.f32 %v4767, %v4767
    %v4772 = vmul.f32 %v4768, %v4768
    %v4773 = vsub.f32 %v4769, %v4771
    %v4774 = vsub.f32 %v4770, %v4772
    %v4775 = vsub.f32 %v4751, %v4767
    %v4776 = vsub.f32 %v4752, %v4768
    %v4777 = vadd.f32 %v4773, 1e-05
    %v4778 = vadd.f32 %v4774, 1e-05
    %v4779 = vrsqrt.pop %v4777
    %v4780 = vrsqrt.pop %v4778
    %v4781 = vmul.f32 %v4775, %v4779
    %v4782 = vmul.f32 %v4776, %v4780
    %v4783 = vlaneseq
    %v4784 = vshrl.u32 %v4783, 7
    %v4785 = vsub.s32 7, %v4784
    %v4786 = vrot.slane %v2615, %v4785
    %v4787 = vmul.f32 %v4781, %v4786
    %v4788 = vmul.f32 %v4782, %v4786
    %v4789 = vlaneseq
    %v4790 = vshrl.u32 %v4789, 7
    %v4791 = vsub.s32 0, %v4790
    %v4792 = vrot.slane %v2616, %v4791
    %v4793 = vadd.f32 %v4787, %v4792
    %v4794 = vadd.f32 %v4788, %v4792
    %v4795 = vld [vmem:[#allocation14] sm:$0x1]
    %v4796 = vld [vmem:[#allocation14 + $0x1] sm:$0x1]
    %v4797 = vmul.f32 %v4793, %v4793
    %v4798 = vmul.f32 %v4794, %v4794
    %v4799 = vsel %vm324, %v4793, 0.0
    %4800 = vadd.xlane.f32.xlu0 %v4799
    %v4801 = vpop.xlane.xlu0 %4800
    %v4802 = vsel %vm324, %v4794, 0.0
    %4803 = vadd.xlane.f32.xlu0 %v4802
    %v4804 = vpop.xlane.xlu0 %4803
    %v4805 = vsel %vm324, %v4797, 0.0
    %4806 = vadd.xlane.f32.xlu0 %v4805
    %v4807 = vpop.xlane.xlu0 %4806
    %v4808 = vsel %vm324, %v4798, 0.0
    %4809 = vadd.xlane.f32.xlu0 %v4808
    %v4810 = vpop.xlane.xlu0 %4809
    %v4811 = vmul.f32 %v4801, 0.03125
    %v4812 = vmul.f32 %v4804, 0.03125
    %v4813 = vmul.f32 %v4807, 0.03125
    %v4814 = vmul.f32 %v4810, 0.03125
    %v4815 = vmul.f32 %v4811, %v4811
    %v4816 = vmul.f32 %v4812, %v4812
    %v4817 = vsub.f32 %v4813, %v4815
    %v4818 = vsub.f32 %v4814, %v4816
    %v4819 = vsub.f32 %v4793, %v4811
    %v4820 = vsub.f32 %v4794, %v4812
    %v4821 = vadd.f32 %v4817, 1e-05
    %v4822 = vadd.f32 %v4818, 1e-05
    %v4823 = vrsqrt.pop %v4821
    %v4824 = vrsqrt.pop %v4822
    %v4825 = vmul.f32 %v4819, %v4823
    %v4826 = vmul.f32 %v4820, %v4824
    %v4827 = vlaneseq
    %v4828 = vshrl.u32 %v4827, 7
    %v4829 = vsub.s32 0, %v4828
    %v4830 = vrot.slane %v4795, %v4829
    %v4831 = vmul.f32 %v4825, %v4830
    %v4832 = vmul.f32 %v4826, %v4830
    %v4833 = vlaneseq
    %v4834 = vshrl.u32 %v4833, 7
    %v4835 = vsub.s32 0, %v4834
    %v4836 = vrot.slane %v4796, %v4835
    %v4837 = vadd.f32 %v4831, %v4836
    %v4838 = vadd.f32 %v4832, %v4836
    %4839 = vst.msk [vmem:[#allocation16] sm:$0xff] %vm324, %v4837
    %4840 = vst.msk [vmem:[#allocation16 + $0x8] sm:$0xff] %vm324, %v4838
    // Predicated region
    $region90: #{transformer_decoder_forward.1} parent=1 // pred_check
      _
    $region91: #{transformer_decoder_forward.1} parent=1 // pred_check_branch
      %4842 = sbr.rel (0) target = $region93
    $region92: #{transformer_decoder_forward.1} parent=1 // pred_region
      %s4844 = ssub.s32 256, 256
      %4845 = vsyncadd [#allocation4], %s4844
      %s4846 = sshll.u32 [#allocation16], 4
      %s4847 = int_to_ptr.vmem [resolvable:$true] %s4846
      %4852 = dma.vmem_to_hbm [thread:$0]  %s4847, 256, %s14, [#allocation4], 128, 128, 8
    $region93: #{transformer_decoder_forward.1} parent=1 // pred_fallthru
      _
    // Predicated region
    $region94: #{transformer_decoder_forward.1} parent=1 // pred_check
      _
    $region95: #{transformer_decoder_forward.1} parent=1 // pred_check_branch
      %4854 = sbr.rel (0) target = $region97
    $region96: #{transformer_decoder_forward.1} parent=1 // pred_region
      %4855 = dma.done [#allocation4], 256
    $region97: #{transformer_decoder_forward.1} parent=1 // pred_fallthru
      _
    %4856 = vsyncpa [#allocation3], 1
    %4857 = vsyncpa [#allocation6], 1
    %4858 = vsyncpa [#allocation9], 1
    %4859 = vsyncpa [#allocation12], 1
    %4860 = vsyncpa [#allocation15], 1
    %4861 = vsyncpa [#allocation4], 1

</llo_original>
